<compile_context>
chip_gen: v7x
topology: tpu7x:2x2x1
jax: 0.10.0
libtpu: 0.0.40
codegen_flags: <defaults>
</compile_context>

<pallas_src>
import functools

import jax
import jax.numpy as jnp
from jax.experimental import pallas as pl
from jax.experimental.pallas import tpu as pltpu


# ----------------------------------------------------------------------------
# Scoped-VMEM limit: ~3/4 of physical VMEM (96 MiB on v5e/v6e, 48 MiB on v7x).
# ----------------------------------------------------------------------------
def _default_vmem_limit():
    try:
        cap = pltpu.get_tpu_info().vmem_capacity_bytes
        return int(max(32 << 20, min(100 << 20, (cap * 3) // 4)))
    except Exception:  # pragma: no cover - conservative fallback
        return 64 << 20


_VMEM_LIMIT = _default_vmem_limit()


# ----------------------------------------------------------------------------
# Kernel A: norm1 -> fused-QKV MHA (+residual) -> mlp(x1)+norm2(x1) -> folded
#           1x1 convs -> (bf16 output tile, partial BN stats)
# ----------------------------------------------------------------------------
def _transformer_kernel(x_ref, n1w_ref, n1b_ref, wqkv_ref, bqkv_ref, wo_ref, bo_ref,
                        w1_ref, b1_ref, w2_ref, b2_ref, n2w_ref, n2b_ref,
                        wcomb_ref, z_ref, stats_ref, *, num_heads, hw_valid):
    eps = 1e-5
    B = x_ref.shape[0]          # attention sequence length (PyTorch image batch)
    C = x_ref.shape[1]          # embed dim (channels, on sublanes)
    T = x_ref.shape[2]          # spatial tokens in this tile (on lanes)
    dh = C // num_heads
    qscale = 1.0 / float(dh) ** 0.5
    bf16 = jnp.bfloat16

    # Hoisted single reads of every parameter.
    n1w, n1b = n1w_ref[...], n1b_ref[...]            # (C, 1) f32
    n2w, n2b = n2w_ref[...], n2b_ref[...]
    wqkv, bqkv = wqkv_ref[...], bqkv_ref[...]        # (3C, C) bf16, (3C, 1) f32
    wo, bo = wo_ref[...], bo_ref[...]                # (C, C) bf16, (C, 1) f32
    w1, b1 = w1_ref[...], b1_ref[...]                # (4C, C) bf16, (4C, 1) f32
    w2, b2 = w2_ref[...], b2_ref[...]                # (C, 4C) bf16, (C, 1) f32
    wcomb = wcomb_ref[...]                           # (64, C) bf16 folded conv weight

    def layernorm_cols(vals, w, b):
        # vals: (C, N) f32 -- LayerNorm over the channel (sublane) axis, per token.
        mu = jnp.mean(vals, axis=0, keepdims=True)
        var = jnp.mean((vals - mu) ** 2, axis=0, keepdims=True)
        return (vals - mu) * jax.lax.rsqrt(var + eps) * w + b

    # ---- norm1 + fused QKV projection, per batch element (no lane concat) ----
    xn, q, k, v = [], [], [], []
    for i in range(B):
        xi = x_ref[i].astype(jnp.float32)                                # (C, T)
        xni = layernorm_cols(xi, n1w, n1b)
        xn.append(xni)
        qkv_i = jnp.dot(wqkv, xni.astype(bf16),
                        preferred_element_type=jnp.float32) + bqkv       # (3C, T)
        q.append(qkv_i[:C] * qscale)
        k.append(qkv_i[C:2 * C])
        v.append(qkv_i[2 * C:])

    # ---- multi-head attention over the B ("sequence") axis, per token column.
    # Scores: sublane (XLU) reduce over the dh channels of each head.
    # Probabilities: (1,T) rows broadcast back over the dh channels (VPU only).
    ctx = []
    for i in range(B):
        # raw scores s[j][h] : (1, T)
        s = [[jnp.sum(q[i][h * dh:(h + 1) * dh] * k[j][h * dh:(h + 1) * dh],
                      axis=0, keepdims=True)
              for h in range(num_heads)] for j in range(B)]
        parts = []
        for h in range(num_heads):
            m = s[0][h]
            for j in range(1, B):
                m = jnp.maximum(m, s[j][h])
            p = [jnp.exp(s[j][h] - m) for j in range(B)]
            den = p[0]
            for j in range(1, B):
                den = den + p[j]
            inv = 1.0 / den                       # exact division (parity w/ PyTorch)
            acc = (p[0] * inv) * v[0][h * dh:(h + 1) * dh]
            for j in range(1, B):
                acc = acc + (p[j] * inv) * v[j][h * dh:(h + 1) * dh]
            parts.append(acc)                     # (dh, T)
        ctx.append(jnp.concatenate(parts, axis=0))  # (C, T)

    # ---- lane mask for partial (padded) last tile, stats only ----
    if hw_valid % T != 0:
        col = jax.lax.broadcasted_iota(jnp.int32, (1, T), 1) + pl.program_id(0) * T
        lane_mask = (col < hw_valid).astype(jnp.float32)                 # (1, T)
    else:
        lane_mask = None

    # ---- out-proj (+residual to normalized input), mlp(x1)+norm2(x1), folded
    #      convs, bf16 store, partial BN stats -------------------------------
    # TODO(synk): if C grows large, block the 4C hidden dim of the MLP and
    # single-buffer the constant weight blocks (pl.Buffered(1)).
    zsum = jnp.zeros((64, T), jnp.float32)
    zsq = jnp.zeros((64, T), jnp.float32)
    for i in range(B):
        attn_i = jnp.dot(wo, ctx[i].astype(bf16),
                         preferred_element_type=jnp.float32) + bo
        x1 = attn_i + xn[i]                       # residual to norm1(x), as in PyTorch
        h1 = jnp.maximum(jnp.dot(w1, x1.astype(bf16),
                                 preferred_element_type=jnp.float32) + b1, 0.0)
        mlp = jnp.dot(w2, h1.astype(bf16),
                      preferred_element_type=jnp.float32) + b2
        y = mlp + layernorm_cols(x1, n2w, n2b)
        z = jnp.dot(wcomb, y.astype(bf16),
                    preferred_element_type=jnp.float32)                  # (64, T)
        z_ref[i] = z.astype(z_ref.dtype)          # lane-dense bf16 store
        zm = z if lane_mask is None else z * lane_mask
        zsum = zsum + zm
        zsq = zsq + zm * zm

    # Per-tile partial BatchNorm statistics (finalized in the wrapper); computed
    # in f32 before the bf16 cast of z.
    stats_ref[0] = jnp.concatenate(
        [jnp.sum(zsum, axis=1, keepdims=True),
         jnp.sum(zsq, axis=1, keepdims=True)], axis=1)                   # (64, 2)


# ----------------------------------------------------------------------------
# Kernel B: apply BatchNorm (precomputed per-channel scale/shift) + ReLU
# ----------------------------------------------------------------------------
def _bn_relu_kernel(z_ref, scale_ref, shift_ref, o_ref):
    z = z_ref[...].astype(jnp.float32)
    o_ref[...] = jnp.maximum(z * scale_ref[...] + shift_ref[...], 0.0)


# ----------------------------------------------------------------------------
# pallas_call wrappers
# ----------------------------------------------------------------------------
def _pick_token_tile(hw, target):
    """Lane tile: a multiple of 128, <= target, keeping >= 2 grid steps whenever
    the (128-rounded) spatial extent allows it.  Arbitrary HW is handled by
    padding in the wrapper, so there is no single full-extent fallback tile."""
    hw128 = ((hw + 127) // 128) * 128
    t = min(max(128, (target // 128) * 128), hw128)
    while t > 128 and pl.cdiv(hw128, t) < 2:
        t -= 128
    return t


def _transformer_call(x3, params, num_heads, t_blk, hw_valid):
    B, C, hw_pad = x3.shape
    n_tiles = hw_pad // t_blk
    weights = [params["n1w"], params["n1b"], params["wqkv"], params["bqkv"],
               params["wo"], params["bo"], params["w1"], params["b1"],
               params["w2"], params["b2"], params["n2w"], params["n2b"],
               params["w_comb"]]
    w_specs = [pl.BlockSpec(w.shape, lambda t: (0, 0)) for w in weights]

    return pl.pallas_call(
        functools.partial(_transformer_kernel, num_heads=num_heads, hw_valid=hw_valid),
        grid=(n_tiles,),
        in_specs=[pl.BlockSpec((B, C, t_blk), lambda t: (0, 0, t))] + w_specs,
        out_specs=(pl.BlockSpec((B, 64, t_blk), lambda t: (0, 0, t)),
                   pl.BlockSpec((1, 64, 2), lambda t: (t, 0, 0))),
        out_shape=(jax.ShapeDtypeStruct((B, 64, hw_pad), jnp.bfloat16),
                   jax.ShapeDtypeStruct((n_tiles, 64, 2), jnp.float32)),
        compiler_params=pltpu.CompilerParams(
            dimension_semantics=("parallel",),
            vmem_limit_bytes=_VMEM_LIMIT),
    )(x3, *weights)


def _bn_relu_call(z, scale, shift, t_blk):
    B, CH, hw_pad = z.shape
    n_tiles = hw_pad // t_blk
    return pl.pallas_call(
        _bn_relu_kernel,
        grid=(B, n_tiles),
        in_specs=[pl.BlockSpec((1, CH, t_blk), lambda b, t: (b, 0, t)),
                  pl.BlockSpec((1, CH, 1), lambda b, t: (0, 0, 0)),
                  pl.BlockSpec((1, CH, 1), lambda b, t: (0, 0, 0))],
        out_specs=pl.BlockSpec((1, CH, t_blk), lambda b, t: (b, 0, t)),
        out_shape=jax.ShapeDtypeStruct((B, CH, hw_pad), jnp.float32),
        compiler_params=pltpu.CompilerParams(
            dimension_semantics=("parallel", "parallel"),
            vmem_limit_bytes=_VMEM_LIMIT),
    )(z, scale, shift)


@functools.partial(jax.jit, static_argnames=("num_heads", "stride"))
def spectral_self_attention(x_nchw, params, *, num_heads=4, stride=1):
    if stride != 1:
        # TODO(synk): stride > 1 spatial subsampling of FrFDConv not implemented.
        raise NotImplementedError("stride > 1 is not supported")
    B, C, H, W = x_nchw.shape
    assert C % num_heads == 0, "embed_dim must be divisible by num_heads"
    HW = H * W
    # Free reshape only: channels stay on sublanes, spatial tokens on lanes.
    x3 = x_nchw.reshape(B, C, HW)

    # One lane-tile for both kernels; pad HW to a multiple of it (stats masked).
    t_blk = _pick_token_tile(HW, target=max(256, 2048 // max(B, 1)))
    hw_pad = pl.cdiv(HW, t_blk) * t_blk
    if hw_pad != HW:
        x3 = jnp.pad(x3, ((0, 0), (0, 0), (0, hw_pad - HW)))

    z, stats = _transformer_call(x3, params, num_heads, t_blk, HW)

    # Finalize global BatchNorm batch statistics (training mode, biased variance).
    n = float(B * HW)
    tot = jnp.sum(stats, axis=0)                                        # (64, 2)
    mean = tot[:, 0] / n
    var = jnp.maximum(tot[:, 1] / n - mean * mean, 0.0)
    inv_std = jax.lax.rsqrt(var + 1e-5)
    scale = (params["bn_g"] * inv_std).reshape(1, 64, 1)
    shift = (params["bn_b"] - mean * params["bn_g"] * inv_std).reshape(1, 64, 1)

    out = _bn_relu_call(z, scale, shift, t_blk)
    out = out[:, :, :HW]
    return out.reshape(B, 64, H, W)                                     # NCHW f32


# ----------------------------------------------------------------------------
# Deterministic parameter construction (PyTorch shapes; MXU weights in bf16,
# biases / LN / BN params in f32).
# ----------------------------------------------------------------------------
def init_params(key, C, OC):
    ks = jax.random.split(key, 16)

    def nrm(k, shape, s=0.05):
        return (s * jax.random.normal(k, shape)).astype(jnp.float32)

    in_w = nrm(ks[0], (3 * C, C))          # nn.MultiheadAttention.in_proj_weight
    in_b = nrm(ks[1], (3 * C,))
    out_w = nrm(ks[2], (C, C))             # out_proj.weight
    out_b = nrm(ks[3], (C,))
    w1 = nrm(ks[4], (4 * C, C)); b1 = nrm(ks[5], (4 * C,))      # mlp[0]
    w2 = nrm(ks[6], (C, 4 * C)); b2 = nrm(ks[7], (C,))          # mlp[2]
    n1w = 1.0 + nrm(ks[8], (C,));  n1b = nrm(ks[9], (C,))
    n2w = 1.0 + nrm(ks[10], (C,)); n2b = nrm(ks[11], (C,))
    conv_reduce_w = nrm(ks[12], (OC, C, 1, 1))   # FrFDConv modeled as bias-free 1x1 conv
    channel_fix_w = nrm(ks[13], (64, OC, 1, 1))
    bn_g = 1.0 + nrm(ks[14], (64,)); bn_b = nrm(ks[15], (64,))

    # Fold the two linear 1x1 convs into a single (64, C) matrix (exact math).
    w_comb = channel_fix_w[:, :, 0, 0] @ conv_reduce_w[:, :, 0, 0]

    bf = jnp.bfloat16
    return {
        "n1w": n1w.reshape(C, 1), "n1b": n1b.reshape(C, 1),
        "wqkv": in_w.astype(bf), "bqkv": in_b.reshape(3 * C, 1),
        "wo": out_w.astype(bf), "bo": out_b.reshape(C, 1),
        "w1": w1.astype(bf), "b1": b1.reshape(4 * C, 1),
        "w2": w2.astype(bf), "b2": b2.reshape(C, 1),
        "n2w": n2w.reshape(C, 1), "n2b": n2b.reshape(C, 1),
        "w_comb": w_comb.astype(bf),
        "bn_g": bn_g, "bn_b": bn_b,
    }


if __name__ == "__main__":
    key = jax.random.PRNGKey(0)
    kx, kp = jax.random.split(key)
    # in_channels=16 (divisible by num_heads=4); out_channels must be 64 for the
    # module's BatchNorm2d(out_channels) to match channel_fix's 64 output channels.
    B, C, H, W = 2, 16, 16, 16
    OC = 64
    x = jax.random.normal(kx, (B, C, H, W), dtype=jnp.float32)
    params = init_params(kp, C, OC)

    out = spectral_self_attention(x, params, num_heads=4, stride=1)
    out = jax.block_until_ready(out)
    assert out.shape == (B, 64, H, W)
    assert bool(jnp.all(jnp.isfinite(out)))
    print("KERNEL_OK")
</pallas_src>

<mosaic_0001>
module attributes {stable_mosaic.version = 11 : i64} {
  func.func @_transformer_kernel(%arg0: i32, %arg1: memref<2x16x128xf32, #tpu.memory_space<vmem>>, %arg2: memref<16x1xf32, #tpu.memory_space<vmem>>, %arg3: memref<16x1xf32, #tpu.memory_space<vmem>>, %arg4: memref<48x16xbf16, #tpu.memory_space<vmem>>, %arg5: memref<48x1xf32, #tpu.memory_space<vmem>>, %arg6: memref<16x16xbf16, #tpu.memory_space<vmem>>, %arg7: memref<16x1xf32, #tpu.memory_space<vmem>>, %arg8: memref<64x16xbf16, #tpu.memory_space<vmem>>, %arg9: memref<64x1xf32, #tpu.memory_space<vmem>>, %arg10: memref<16x64xbf16, #tpu.memory_space<vmem>>, %arg11: memref<16x1xf32, #tpu.memory_space<vmem>>, %arg12: memref<16x1xf32, #tpu.memory_space<vmem>>, %arg13: memref<16x1xf32, #tpu.memory_space<vmem>>, %arg14: memref<64x16xbf16, #tpu.memory_space<vmem>>, %arg15: memref<2x64x128xbf16, #tpu.memory_space<vmem>>, %arg16: memref<1x64x2xf32, #tpu.memory_space<vmem>>) attributes {dimension_semantics = [#tpu.dimension_semantics<parallel>], iteration_bounds = array<i64: 2>, scalar_prefetch = 0 : i64, scratch_operands = 0 : i64, tpu.core_type = #tpu.core_type<tc>, window_params = [{transform_indices = @transform_0, window_bounds = array<i64: 2, 16, 128>}, {pipeline_mode = #tpu.pipeline_mode<synchronous>, transform_indices = @transform_1, window_bounds = array<i64: 16, 1>}, {pipeline_mode = #tpu.pipeline_mode<synchronous>, transform_indices = @transform_2, window_bounds = array<i64: 16, 1>}, {pipeline_mode = #tpu.pipeline_mode<synchronous>, transform_indices = @transform_3, window_bounds = array<i64: 48, 16>}, {pipeline_mode = #tpu.pipeline_mode<synchronous>, transform_indices = @transform_4, window_bounds = array<i64: 48, 1>}, {pipeline_mode = #tpu.pipeline_mode<synchronous>, transform_indices = @transform_5, window_bounds = array<i64: 16, 16>}, {pipeline_mode = #tpu.pipeline_mode<synchronous>, transform_indices = @transform_6, window_bounds = array<i64: 16, 1>}, {pipeline_mode = #tpu.pipeline_mode<synchronous>, transform_indices = @transform_7, window_bounds = array<i64: 64, 16>}, {pipeline_mode = #tpu.pipeline_mode<synchronous>, transform_indices = @transform_8, window_bounds = array<i64: 64, 1>}, {pipeline_mode = #tpu.pipeline_mode<synchronous>, transform_indices = @transform_9, window_bounds = array<i64: 16, 64>}, {pipeline_mode = #tpu.pipeline_mode<synchronous>, transform_indices = @transform_10, window_bounds = array<i64: 16, 1>}, {pipeline_mode = #tpu.pipeline_mode<synchronous>, transform_indices = @transform_11, window_bounds = array<i64: 16, 1>}, {pipeline_mode = #tpu.pipeline_mode<synchronous>, transform_indices = @transform_12, window_bounds = array<i64: 16, 1>}, {pipeline_mode = #tpu.pipeline_mode<synchronous>, transform_indices = @transform_13, window_bounds = array<i64: 64, 16>}, {transform_indices = @transform_14, window_bounds = array<i64: 2, 64, 128>}, {transform_indices = @transform_15, window_bounds = array<i64: 1, 64, 2>}]} {
    %c0 = arith.constant 0 : index
    %c0_0 = arith.constant 0 : index
    %0 = vector.load %arg2[%c0, %c0_0] : memref<16x1xf32, #tpu.memory_space<vmem>>, vector<16x1xf32>
    %c0_1 = arith.constant 0 : index
    %c0_2 = arith.constant 0 : index
    %1 = vector.load %arg3[%c0_1, %c0_2] : memref<16x1xf32, #tpu.memory_space<vmem>>, vector<16x1xf32>
    %c0_3 = arith.constant 0 : index
    %c0_4 = arith.constant 0 : index
    %2 = vector.load %arg12[%c0_3, %c0_4] : memref<16x1xf32, #tpu.memory_space<vmem>>, vector<16x1xf32>
    %c0_5 = arith.constant 0 : index
    %c0_6 = arith.constant 0 : index
    %3 = vector.load %arg13[%c0_5, %c0_6] : memref<16x1xf32, #tpu.memory_space<vmem>>, vector<16x1xf32>
    %c0_7 = arith.constant 0 : index
    %c0_8 = arith.constant 0 : index
    %4 = vector.load %arg4[%c0_7, %c0_8] : memref<48x16xbf16, #tpu.memory_space<vmem>>, vector<48x16xbf16>
    %c0_9 = arith.constant 0 : index
    %c0_10 = arith.constant 0 : index
    %5 = vector.load %arg5[%c0_9, %c0_10] : memref<48x1xf32, #tpu.memory_space<vmem>>, vector<48x1xf32>
    %c0_11 = arith.constant 0 : index
    %c0_12 = arith.constant 0 : index
    %6 = vector.load %arg6[%c0_11, %c0_12] : memref<16x16xbf16, #tpu.memory_space<vmem>>, vector<16x16xbf16>
    %c0_13 = arith.constant 0 : index
    %c0_14 = arith.constant 0 : index
    %7 = vector.load %arg7[%c0_13, %c0_14] : memref<16x1xf32, #tpu.memory_space<vmem>>, vector<16x1xf32>
    %c0_15 = arith.constant 0 : index
    %c0_16 = arith.constant 0 : index
    %8 = vector.load %arg8[%c0_15, %c0_16] : memref<64x16xbf16, #tpu.memory_space<vmem>>, vector<64x16xbf16>
    %c0_17 = arith.constant 0 : index
    %c0_18 = arith.constant 0 : index
    %9 = vector.load %arg9[%c0_17, %c0_18] : memref<64x1xf32, #tpu.memory_space<vmem>>, vector<64x1xf32>
    %c0_19 = arith.constant 0 : index
    %c0_20 = arith.constant 0 : index
    %10 = vector.load %arg10[%c0_19, %c0_20] : memref<16x64xbf16, #tpu.memory_space<vmem>>, vector<16x64xbf16>
    %c0_21 = arith.constant 0 : index
    %c0_22 = arith.constant 0 : index
    %11 = vector.load %arg11[%c0_21, %c0_22] : memref<16x1xf32, #tpu.memory_space<vmem>>, vector<16x1xf32>
    %c0_23 = arith.constant 0 : index
    %c0_24 = arith.constant 0 : index
    %12 = vector.load %arg14[%c0_23, %c0_24] : memref<64x16xbf16, #tpu.memory_space<vmem>>, vector<64x16xbf16>
    %c0_25 = arith.constant 0 : index
    %c0_26 = arith.constant 0 : index
    %c0_27 = arith.constant 0 : index
    %13 = vector.load %arg1[%c0_25, %c0_26, %c0_27] : memref<2x16x128xf32, #tpu.memory_space<vmem>>, vector<1x16x128xf32>
    %14 = vector.shape_cast %13 : vector<1x16x128xf32> to vector<16x128xf32>
    %cst = arith.constant dense<0.000000e+00> : vector<128xf32>
    %15 = vector.multi_reduction <add>, %14, %cst [0] : vector<16x128xf32> to vector<128xf32>
    %16 = vector.shape_cast %15 : vector<128xf32> to vector<1x128xf32>
    %cst_28 = arith.constant 1.600000e+01 : f32
    %17 = vector.broadcast %cst_28 : f32 to vector<1x128xf32>
    %18 = arith.divf %16, %17 : vector<1x128xf32>
    %19 = vector.broadcast %18 : vector<1x128xf32> to vector<16x128xf32>
    %20 = arith.subf %14, %19 : vector<16x128xf32>
    %21 = arith.mulf %20, %20 : vector<16x128xf32>
    %cst_29 = arith.constant dense<0.000000e+00> : vector<128xf32>
    %22 = vector.multi_reduction <add>, %21, %cst_29 [0] : vector<16x128xf32> to vector<128xf32>
    %23 = vector.shape_cast %22 : vector<128xf32> to vector<1x128xf32>
    %cst_30 = arith.constant 1.600000e+01 : f32
    %24 = vector.broadcast %cst_30 : f32 to vector<1x128xf32>
    %25 = arith.divf %23, %24 : vector<1x128xf32>
    %26 = vector.broadcast %18 : vector<1x128xf32> to vector<16x128xf32>
    %27 = arith.subf %14, %26 : vector<16x128xf32>
    %cst_31 = arith.constant 9.99999974E-6 : f32
    %28 = vector.broadcast %cst_31 : f32 to vector<1x128xf32>
    %29 = arith.addf %25, %28 : vector<1x128xf32>
    %30 = math.rsqrt %29 : vector<1x128xf32>
    %31 = vector.broadcast %30 : vector<1x128xf32> to vector<16x128xf32>
    %32 = arith.mulf %27, %31 : vector<16x128xf32>
    %33 = vector.broadcast %0 : vector<16x1xf32> to vector<16x128xf32>
    %34 = arith.mulf %32, %33 : vector<16x128xf32>
    %35 = vector.broadcast %1 : vector<16x1xf32> to vector<16x128xf32>
    %36 = arith.addf %34, %35 : vector<16x128xf32>
    %37 = arith.truncf %36 : vector<16x128xf32> to vector<16x128xbf16>
    %cst_32 = arith.constant dense<0.000000e+00> : vector<48x128xf32>
    %38 = tpu.matmul %4, %37, %cst_32 {dimension_numbers = #tpu.dot_dimension_numbers<[1], [0], [0], [1], [0, 0, 1, 1], [], []>} : vector<48x16xbf16>, vector<16x128xbf16>, vector<48x128xf32> -> vector<48x128xf32>
    %39 = vector.broadcast %5 : vector<48x1xf32> to vector<48x128xf32>
    %40 = arith.addf %38, %39 : vector<48x128xf32>
    %41 = vector.extract_strided_slice %40 {offsets = [0, 0], sizes = [16, 128], strides = [1, 1]} : vector<48x128xf32> to vector<16x128xf32>
    %cst_33 = arith.constant 5.000000e-01 : f32
    %42 = vector.broadcast %cst_33 : f32 to vector<16x128xf32>
    %43 = arith.mulf %41, %42 : vector<16x128xf32>
    %44 = vector.extract_strided_slice %40 {offsets = [16, 0], sizes = [16, 128], strides = [1, 1]} : vector<48x128xf32> to vector<16x128xf32>
    %45 = vector.extract_strided_slice %40 {offsets = [32, 0], sizes = [16, 128], strides = [1, 1]} : vector<48x128xf32> to vector<16x128xf32>
    %c1 = arith.constant 1 : index
    %c0_34 = arith.constant 0 : index
    %c0_35 = arith.constant 0 : index
    %46 = vector.load %arg1[%c1, %c0_34, %c0_35] : memref<2x16x128xf32, #tpu.memory_space<vmem>>, vector<1x16x128xf32>
    %47 = vector.shape_cast %46 : vector<1x16x128xf32> to vector<16x128xf32>
    %cst_36 = arith.constant dense<0.000000e+00> : vector<128xf32>
    %48 = vector.multi_reduction <add>, %47, %cst_36 [0] : vector<16x128xf32> to vector<128xf32>
    %49 = vector.shape_cast %48 : vector<128xf32> to vector<1x128xf32>
    %cst_37 = arith.constant 1.600000e+01 : f32
    %50 = vector.broadcast %cst_37 : f32 to vector<1x128xf32>
    %51 = arith.divf %49, %50 : vector<1x128xf32>
    %52 = vector.broadcast %51 : vector<1x128xf32> to vector<16x128xf32>
    %53 = arith.subf %47, %52 : vector<16x128xf32>
    %54 = arith.mulf %53, %53 : vector<16x128xf32>
    %cst_38 = arith.constant dense<0.000000e+00> : vector<128xf32>
    %55 = vector.multi_reduction <add>, %54, %cst_38 [0] : vector<16x128xf32> to vector<128xf32>
    %56 = vector.shape_cast %55 : vector<128xf32> to vector<1x128xf32>
    %cst_39 = arith.constant 1.600000e+01 : f32
    %57 = vector.broadcast %cst_39 : f32 to vector<1x128xf32>
    %58 = arith.divf %56, %57 : vector<1x128xf32>
    %59 = vector.broadcast %51 : vector<1x128xf32> to vector<16x128xf32>
    %60 = arith.subf %47, %59 : vector<16x128xf32>
    %cst_40 = arith.constant 9.99999974E-6 : f32
    %61 = vector.broadcast %cst_40 : f32 to vector<1x128xf32>
    %62 = arith.addf %58, %61 : vector<1x128xf32>
    %63 = math.rsqrt %62 : vector<1x128xf32>
    %64 = vector.broadcast %63 : vector<1x128xf32> to vector<16x128xf32>
    %65 = arith.mulf %60, %64 : vector<16x128xf32>
    %66 = vector.broadcast %0 : vector<16x1xf32> to vector<16x128xf32>
    %67 = arith.mulf %65, %66 : vector<16x128xf32>
    %68 = vector.broadcast %1 : vector<16x1xf32> to vector<16x128xf32>
    %69 = arith.addf %67, %68 : vector<16x128xf32>
    %70 = arith.truncf %69 : vector<16x128xf32> to vector<16x128xbf16>
    %cst_41 = arith.constant dense<0.000000e+00> : vector<48x128xf32>
    %71 = tpu.matmul %4, %70, %cst_41 {dimension_numbers = #tpu.dot_dimension_numbers<[1], [0], [0], [1], [0, 0, 1, 1], [], []>} : vector<48x16xbf16>, vector<16x128xbf16>, vector<48x128xf32> -> vector<48x128xf32>
    %72 = vector.broadcast %5 : vector<48x1xf32> to vector<48x128xf32>
    %73 = arith.addf %71, %72 : vector<48x128xf32>
    %74 = vector.extract_strided_slice %73 {offsets = [0, 0], sizes = [16, 128], strides = [1, 1]} : vector<48x128xf32> to vector<16x128xf32>
    %cst_42 = arith.constant 5.000000e-01 : f32
    %75 = vector.broadcast %cst_42 : f32 to vector<16x128xf32>
    %76 = arith.mulf %74, %75 : vector<16x128xf32>
    %77 = vector.extract_strided_slice %73 {offsets = [16, 0], sizes = [16, 128], strides = [1, 1]} : vector<48x128xf32> to vector<16x128xf32>
    %78 = vector.extract_strided_slice %73 {offsets = [32, 0], sizes = [16, 128], strides = [1, 1]} : vector<48x128xf32> to vector<16x128xf32>
    %79 = vector.extract_strided_slice %43 {offsets = [0, 0], sizes = [4, 128], strides = [1, 1]} : vector<16x128xf32> to vector<4x128xf32>
    %80 = vector.extract_strided_slice %44 {offsets = [0, 0], sizes = [4, 128], strides = [1, 1]} : vector<16x128xf32> to vector<4x128xf32>
    %81 = arith.mulf %79, %80 : vector<4x128xf32>
    %cst_43 = arith.constant dense<0.000000e+00> : vector<128xf32>
    %82 = vector.multi_reduction <add>, %81, %cst_43 [0] : vector<4x128xf32> to vector<128xf32>
    %83 = vector.shape_cast %82 : vector<128xf32> to vector<1x128xf32>
    %84 = vector.extract_strided_slice %43 {offsets = [4, 0], sizes = [4, 128], strides = [1, 1]} : vector<16x128xf32> to vector<4x128xf32>
    %85 = vector.extract_strided_slice %44 {offsets = [4, 0], sizes = [4, 128], strides = [1, 1]} : vector<16x128xf32> to vector<4x128xf32>
    %86 = arith.mulf %84, %85 : vector<4x128xf32>
    %cst_44 = arith.constant dense<0.000000e+00> : vector<128xf32>
    %87 = vector.multi_reduction <add>, %86, %cst_44 [0] : vector<4x128xf32> to vector<128xf32>
    %88 = vector.shape_cast %87 : vector<128xf32> to vector<1x128xf32>
    %89 = vector.extract_strided_slice %43 {offsets = [8, 0], sizes = [4, 128], strides = [1, 1]} : vector<16x128xf32> to vector<4x128xf32>
    %90 = vector.extract_strided_slice %44 {offsets = [8, 0], sizes = [4, 128], strides = [1, 1]} : vector<16x128xf32> to vector<4x128xf32>
    %91 = arith.mulf %89, %90 : vector<4x128xf32>
    %cst_45 = arith.constant dense<0.000000e+00> : vector<128xf32>
    %92 = vector.multi_reduction <add>, %91, %cst_45 [0] : vector<4x128xf32> to vector<128xf32>
    %93 = vector.shape_cast %92 : vector<128xf32> to vector<1x128xf32>
    %94 = vector.extract_strided_slice %43 {offsets = [12, 0], sizes = [4, 128], strides = [1, 1]} : vector<16x128xf32> to vector<4x128xf32>
    %95 = vector.extract_strided_slice %44 {offsets = [12, 0], sizes = [4, 128], strides = [1, 1]} : vector<16x128xf32> to vector<4x128xf32>
    %96 = arith.mulf %94, %95 : vector<4x128xf32>
    %cst_46 = arith.constant dense<0.000000e+00> : vector<128xf32>
    %97 = vector.multi_reduction <add>, %96, %cst_46 [0] : vector<4x128xf32> to vector<128xf32>
    %98 = vector.shape_cast %97 : vector<128xf32> to vector<1x128xf32>
    %99 = vector.extract_strided_slice %43 {offsets = [0, 0], sizes = [4, 128], strides = [1, 1]} : vector<16x128xf32> to vector<4x128xf32>
    %100 = vector.extract_strided_slice %77 {offsets = [0, 0], sizes = [4, 128], strides = [1, 1]} : vector<16x128xf32> to vector<4x128xf32>
    %101 = arith.mulf %99, %100 : vector<4x128xf32>
    %cst_47 = arith.constant dense<0.000000e+00> : vector<128xf32>
    %102 = vector.multi_reduction <add>, %101, %cst_47 [0] : vector<4x128xf32> to vector<128xf32>
    %103 = vector.shape_cast %102 : vector<128xf32> to vector<1x128xf32>
    %104 = vector.extract_strided_slice %43 {offsets = [4, 0], sizes = [4, 128], strides = [1, 1]} : vector<16x128xf32> to vector<4x128xf32>
    %105 = vector.extract_strided_slice %77 {offsets = [4, 0], sizes = [4, 128], strides = [1, 1]} : vector<16x128xf32> to vector<4x128xf32>
    %106 = arith.mulf %104, %105 : vector<4x128xf32>
    %cst_48 = arith.constant dense<0.000000e+00> : vector<128xf32>
    %107 = vector.multi_reduction <add>, %106, %cst_48 [0] : vector<4x128xf32> to vector<128xf32>
    %108 = vector.shape_cast %107 : vector<128xf32> to vector<1x128xf32>
    %109 = vector.extract_strided_slice %43 {offsets = [8, 0], sizes = [4, 128], strides = [1, 1]} : vector<16x128xf32> to vector<4x128xf32>
    %110 = vector.extract_strided_slice %77 {offsets = [8, 0], sizes = [4, 128], strides = [1, 1]} : vector<16x128xf32> to vector<4x128xf32>
    %111 = arith.mulf %109, %110 : vector<4x128xf32>
    %cst_49 = arith.constant dense<0.000000e+00> : vector<128xf32>
    %112 = vector.multi_reduction <add>, %111, %cst_49 [0] : vector<4x128xf32> to vector<128xf32>
    %113 = vector.shape_cast %112 : vector<128xf32> to vector<1x128xf32>
    %114 = vector.extract_strided_slice %43 {offsets = [12, 0], sizes = [4, 128], strides = [1, 1]} : vector<16x128xf32> to vector<4x128xf32>
    %115 = vector.extract_strided_slice %77 {offsets = [12, 0], sizes = [4, 128], strides = [1, 1]} : vector<16x128xf32> to vector<4x128xf32>
    %116 = arith.mulf %114, %115 : vector<4x128xf32>
    %cst_50 = arith.constant dense<0.000000e+00> : vector<128xf32>
    %117 = vector.multi_reduction <add>, %116, %cst_50 [0] : vector<4x128xf32> to vector<128xf32>
    %118 = vector.shape_cast %117 : vector<128xf32> to vector<1x128xf32>
    %119 = arith.maximumf %83, %103 : vector<1x128xf32>
    %120 = arith.subf %83, %119 : vector<1x128xf32>
    %121 = math.exp %120 : vector<1x128xf32>
    %122 = arith.subf %103, %119 : vector<1x128xf32>
    %123 = math.exp %122 : vector<1x128xf32>
    %124 = arith.addf %121, %123 : vector<1x128xf32>
    %cst_51 = arith.constant 1.000000e+00 : f32
    %125 = vector.broadcast %cst_51 : f32 to vector<1x128xf32>
    %126 = arith.divf %125, %124 : vector<1x128xf32>
    %127 = arith.mulf %121, %126 : vector<1x128xf32>
    %128 = vector.extract_strided_slice %45 {offsets = [0, 0], sizes = [4, 128], strides = [1, 1]} : vector<16x128xf32> to vector<4x128xf32>
    %129 = vector.broadcast %127 : vector<1x128xf32> to vector<4x128xf32>
    %130 = arith.mulf %129, %128 : vector<4x128xf32>
    %131 = arith.mulf %123, %126 : vector<1x128xf32>
    %132 = vector.extract_strided_slice %78 {offsets = [0, 0], sizes = [4, 128], strides = [1, 1]} : vector<16x128xf32> to vector<4x128xf32>
    %133 = vector.broadcast %131 : vector<1x128xf32> to vector<4x128xf32>
    %134 = arith.mulf %133, %132 : vector<4x128xf32>
    %135 = arith.addf %130, %134 : vector<4x128xf32>
    %136 = arith.maximumf %88, %108 : vector<1x128xf32>
    %137 = arith.subf %88, %136 : vector<1x128xf32>
    %138 = math.exp %137 : vector<1x128xf32>
    %139 = arith.subf %108, %136 : vector<1x128xf32>
    %140 = math.exp %139 : vector<1x128xf32>
    %141 = arith.addf %138, %140 : vector<1x128xf32>
    %cst_52 = arith.constant 1.000000e+00 : f32
    %142 = vector.broadcast %cst_52 : f32 to vector<1x128xf32>
    %143 = arith.divf %142, %141 : vector<1x128xf32>
    %144 = arith.mulf %138, %143 : vector<1x128xf32>
    %145 = vector.extract_strided_slice %45 {offsets = [4, 0], sizes = [4, 128], strides = [1, 1]} : vector<16x128xf32> to vector<4x128xf32>
    %146 = vector.broadcast %144 : vector<1x128xf32> to vector<4x128xf32>
    %147 = arith.mulf %146, %145 : vector<4x128xf32>
    %148 = arith.mulf %140, %143 : vector<1x128xf32>
    %149 = vector.extract_strided_slice %78 {offsets = [4, 0], sizes = [4, 128], strides = [1, 1]} : vector<16x128xf32> to vector<4x128xf32>
    %150 = vector.broadcast %148 : vector<1x128xf32> to vector<4x128xf32>
    %151 = arith.mulf %150, %149 : vector<4x128xf32>
    %152 = arith.addf %147, %151 : vector<4x128xf32>
    %153 = arith.maximumf %93, %113 : vector<1x128xf32>
    %154 = arith.subf %93, %153 : vector<1x128xf32>
    %155 = math.exp %154 : vector<1x128xf32>
    %156 = arith.subf %113, %153 : vector<1x128xf32>
    %157 = math.exp %156 : vector<1x128xf32>
    %158 = arith.addf %155, %157 : vector<1x128xf32>
    %cst_53 = arith.constant 1.000000e+00 : f32
    %159 = vector.broadcast %cst_53 : f32 to vector<1x128xf32>
    %160 = arith.divf %159, %158 : vector<1x128xf32>
    %161 = arith.mulf %155, %160 : vector<1x128xf32>
    %162 = vector.extract_strided_slice %45 {offsets = [8, 0], sizes = [4, 128], strides = [1, 1]} : vector<16x128xf32> to vector<4x128xf32>
    %163 = vector.broadcast %161 : vector<1x128xf32> to vector<4x128xf32>
    %164 = arith.mulf %163, %162 : vector<4x128xf32>
    %165 = arith.mulf %157, %160 : vector<1x128xf32>
    %166 = vector.extract_strided_slice %78 {offsets = [8, 0], sizes = [4, 128], strides = [1, 1]} : vector<16x128xf32> to vector<4x128xf32>
    %167 = vector.broadcast %165 : vector<1x128xf32> to vector<4x128xf32>
    %168 = arith.mulf %167, %166 : vector<4x128xf32>
    %169 = arith.addf %164, %168 : vector<4x128xf32>
    %170 = arith.maximumf %98, %118 : vector<1x128xf32>
    %171 = arith.subf %98, %170 : vector<1x128xf32>
    %172 = math.exp %171 : vector<1x128xf32>
    %173 = arith.subf %118, %170 : vector<1x128xf32>
    %174 = math.exp %173 : vector<1x128xf32>
    %175 = arith.addf %172, %174 : vector<1x128xf32>
    %cst_54 = arith.constant 1.000000e+00 : f32
    %176 = vector.broadcast %cst_54 : f32 to vector<1x128xf32>
    %177 = arith.divf %176, %175 : vector<1x128xf32>
    %178 = arith.mulf %172, %177 : vector<1x128xf32>
    %179 = vector.extract_strided_slice %45 {offsets = [12, 0], sizes = [4, 128], strides = [1, 1]} : vector<16x128xf32> to vector<4x128xf32>
    %180 = vector.broadcast %178 : vector<1x128xf32> to vector<4x128xf32>
    %181 = arith.mulf %180, %179 : vector<4x128xf32>
    %182 = arith.mulf %174, %177 : vector<1x128xf32>
    %183 = vector.extract_strided_slice %78 {offsets = [12, 0], sizes = [4, 128], strides = [1, 1]} : vector<16x128xf32> to vector<4x128xf32>
    %184 = vector.broadcast %182 : vector<1x128xf32> to vector<4x128xf32>
    %185 = arith.mulf %184, %183 : vector<4x128xf32>
    %186 = arith.addf %181, %185 : vector<4x128xf32>
    %187 = tpu.concatenate %135, %152, %169, %186 in 0 : vector<4x128xf32>, vector<4x128xf32>, vector<4x128xf32>, vector<4x128xf32> -> vector<16x128xf32>
    %188 = vector.extract_strided_slice %76 {offsets = [0, 0], sizes = [4, 128], strides = [1, 1]} : vector<16x128xf32> to vector<4x128xf32>
    %189 = vector.extract_strided_slice %44 {offsets = [0, 0], sizes = [4, 128], strides = [1, 1]} : vector<16x128xf32> to vector<4x128xf32>
    %190 = arith.mulf %188, %189 : vector<4x128xf32>
    %cst_55 = arith.constant dense<0.000000e+00> : vector<128xf32>
    %191 = vector.multi_reduction <add>, %190, %cst_55 [0] : vector<4x128xf32> to vector<128xf32>
    %192 = vector.shape_cast %191 : vector<128xf32> to vector<1x128xf32>
    %193 = vector.extract_strided_slice %76 {offsets = [4, 0], sizes = [4, 128], strides = [1, 1]} : vector<16x128xf32> to vector<4x128xf32>
    %194 = vector.extract_strided_slice %44 {offsets = [4, 0], sizes = [4, 128], strides = [1, 1]} : vector<16x128xf32> to vector<4x128xf32>
    %195 = arith.mulf %193, %194 : vector<4x128xf32>
    %cst_56 = arith.constant dense<0.000000e+00> : vector<128xf32>
    %196 = vector.multi_reduction <add>, %195, %cst_56 [0] : vector<4x128xf32> to vector<128xf32>
    %197 = vector.shape_cast %196 : vector<128xf32> to vector<1x128xf32>
    %198 = vector.extract_strided_slice %76 {offsets = [8, 0], sizes = [4, 128], strides = [1, 1]} : vector<16x128xf32> to vector<4x128xf32>
    %199 = vector.extract_strided_slice %44 {offsets = [8, 0], sizes = [4, 128], strides = [1, 1]} : vector<16x128xf32> to vector<4x128xf32>
    %200 = arith.mulf %198, %199 : vector<4x128xf32>
    %cst_57 = arith.constant dense<0.000000e+00> : vector<128xf32>
    %201 = vector.multi_reduction <add>, %200, %cst_57 [0] : vector<4x128xf32> to vector<128xf32>
    %202 = vector.shape_cast %201 : vector<128xf32> to vector<1x128xf32>
    %203 = vector.extract_strided_slice %76 {offsets = [12, 0], sizes = [4, 128], strides = [1, 1]} : vector<16x128xf32> to vector<4x128xf32>
    %204 = vector.extract_strided_slice %44 {offsets = [12, 0], sizes = [4, 128], strides = [1, 1]} : vector<16x128xf32> to vector<4x128xf32>
    %205 = arith.mulf %203, %204 : vector<4x128xf32>
    %cst_58 = arith.constant dense<0.000000e+00> : vector<128xf32>
    %206 = vector.multi_reduction <add>, %205, %cst_58 [0] : vector<4x128xf32> to vector<128xf32>
    %207 = vector.shape_cast %206 : vector<128xf32> to vector<1x128xf32>
    %208 = vector.extract_strided_slice %76 {offsets = [0, 0], sizes = [4, 128], strides = [1, 1]} : vector<16x128xf32> to vector<4x128xf32>
    %209 = vector.extract_strided_slice %77 {offsets = [0, 0], sizes = [4, 128], strides = [1, 1]} : vector<16x128xf32> to vector<4x128xf32>
    %210 = arith.mulf %208, %209 : vector<4x128xf32>
    %cst_59 = arith.constant dense<0.000000e+00> : vector<128xf32>
    %211 = vector.multi_reduction <add>, %210, %cst_59 [0] : vector<4x128xf32> to vector<128xf32>
    %212 = vector.shape_cast %211 : vector<128xf32> to vector<1x128xf32>
    %213 = vector.extract_strided_slice %76 {offsets = [4, 0], sizes = [4, 128], strides = [1, 1]} : vector<16x128xf32> to vector<4x128xf32>
    %214 = vector.extract_strided_slice %77 {offsets = [4, 0], sizes = [4, 128], strides = [1, 1]} : vector<16x128xf32> to vector<4x128xf32>
    %215 = arith.mulf %213, %214 : vector<4x128xf32>
    %cst_60 = arith.constant dense<0.000000e+00> : vector<128xf32>
    %216 = vector.multi_reduction <add>, %215, %cst_60 [0] : vector<4x128xf32> to vector<128xf32>
    %217 = vector.shape_cast %216 : vector<128xf32> to vector<1x128xf32>
    %218 = vector.extract_strided_slice %76 {offsets = [8, 0], sizes = [4, 128], strides = [1, 1]} : vector<16x128xf32> to vector<4x128xf32>
    %219 = vector.extract_strided_slice %77 {offsets = [8, 0], sizes = [4, 128], strides = [1, 1]} : vector<16x128xf32> to vector<4x128xf32>
    %220 = arith.mulf %218, %219 : vector<4x128xf32>
    %cst_61 = arith.constant dense<0.000000e+00> : vector<128xf32>
    %221 = vector.multi_reduction <add>, %220, %cst_61 [0] : vector<4x128xf32> to vector<128xf32>
    %222 = vector.shape_cast %221 : vector<128xf32> to vector<1x128xf32>
    %223 = vector.extract_strided_slice %76 {offsets = [12, 0], sizes = [4, 128], strides = [1, 1]} : vector<16x128xf32> to vector<4x128xf32>
    %224 = vector.extract_strided_slice %77 {offsets = [12, 0], sizes = [4, 128], strides = [1, 1]} : vector<16x128xf32> to vector<4x128xf32>
    %225 = arith.mulf %223, %224 : vector<4x128xf32>
    %cst_62 = arith.constant dense<0.000000e+00> : vector<128xf32>
    %226 = vector.multi_reduction <add>, %225, %cst_62 [0] : vector<4x128xf32> to vector<128xf32>
    %227 = vector.shape_cast %226 : vector<128xf32> to vector<1x128xf32>
    %228 = arith.maximumf %192, %212 : vector<1x128xf32>
    %229 = arith.subf %192, %228 : vector<1x128xf32>
    %230 = math.exp %229 : vector<1x128xf32>
    %231 = arith.subf %212, %228 : vector<1x128xf32>
    %232 = math.exp %231 : vector<1x128xf32>
    %233 = arith.addf %230, %232 : vector<1x128xf32>
    %cst_63 = arith.constant 1.000000e+00 : f32
    %234 = vector.broadcast %cst_63 : f32 to vector<1x128xf32>
    %235 = arith.divf %234, %233 : vector<1x128xf32>
    %236 = arith.mulf %230, %235 : vector<1x128xf32>
    %237 = vector.extract_strided_slice %45 {offsets = [0, 0], sizes = [4, 128], strides = [1, 1]} : vector<16x128xf32> to vector<4x128xf32>
    %238 = vector.broadcast %236 : vector<1x128xf32> to vector<4x128xf32>
    %239 = arith.mulf %238, %237 : vector<4x128xf32>
    %240 = arith.mulf %232, %235 : vector<1x128xf32>
    %241 = vector.extract_strided_slice %78 {offsets = [0, 0], sizes = [4, 128], strides = [1, 1]} : vector<16x128xf32> to vector<4x128xf32>
    %242 = vector.broadcast %240 : vector<1x128xf32> to vector<4x128xf32>
    %243 = arith.mulf %242, %241 : vector<4x128xf32>
    %244 = arith.addf %239, %243 : vector<4x128xf32>
    %245 = arith.maximumf %197, %217 : vector<1x128xf32>
    %246 = arith.subf %197, %245 : vector<1x128xf32>
    %247 = math.exp %246 : vector<1x128xf32>
    %248 = arith.subf %217, %245 : vector<1x128xf32>
    %249 = math.exp %248 : vector<1x128xf32>
    %250 = arith.addf %247, %249 : vector<1x128xf32>
    %cst_64 = arith.constant 1.000000e+00 : f32
    %251 = vector.broadcast %cst_64 : f32 to vector<1x128xf32>
    %252 = arith.divf %251, %250 : vector<1x128xf32>
    %253 = arith.mulf %247, %252 : vector<1x128xf32>
    %254 = vector.extract_strided_slice %45 {offsets = [4, 0], sizes = [4, 128], strides = [1, 1]} : vector<16x128xf32> to vector<4x128xf32>
    %255 = vector.broadcast %253 : vector<1x128xf32> to vector<4x128xf32>
    %256 = arith.mulf %255, %254 : vector<4x128xf32>
    %257 = arith.mulf %249, %252 : vector<1x128xf32>
    %258 = vector.extract_strided_slice %78 {offsets = [4, 0], sizes = [4, 128], strides = [1, 1]} : vector<16x128xf32> to vector<4x128xf32>
    %259 = vector.broadcast %257 : vector<1x128xf32> to vector<4x128xf32>
    %260 = arith.mulf %259, %258 : vector<4x128xf32>
    %261 = arith.addf %256, %260 : vector<4x128xf32>
    %262 = arith.maximumf %202, %222 : vector<1x128xf32>
    %263 = arith.subf %202, %262 : vector<1x128xf32>
    %264 = math.exp %263 : vector<1x128xf32>
    %265 = arith.subf %222, %262 : vector<1x128xf32>
    %266 = math.exp %265 : vector<1x128xf32>
    %267 = arith.addf %264, %266 : vector<1x128xf32>
    %cst_65 = arith.constant 1.000000e+00 : f32
    %268 = vector.broadcast %cst_65 : f32 to vector<1x128xf32>
    %269 = arith.divf %268, %267 : vector<1x128xf32>
    %270 = arith.mulf %264, %269 : vector<1x128xf32>
    %271 = vector.extract_strided_slice %45 {offsets = [8, 0], sizes = [4, 128], strides = [1, 1]} : vector<16x128xf32> to vector<4x128xf32>
    %272 = vector.broadcast %270 : vector<1x128xf32> to vector<4x128xf32>
    %273 = arith.mulf %272, %271 : vector<4x128xf32>
    %274 = arith.mulf %266, %269 : vector<1x128xf32>
    %275 = vector.extract_strided_slice %78 {offsets = [8, 0], sizes = [4, 128], strides = [1, 1]} : vector<16x128xf32> to vector<4x128xf32>
    %276 = vector.broadcast %274 : vector<1x128xf32> to vector<4x128xf32>
    %277 = arith.mulf %276, %275 : vector<4x128xf32>
    %278 = arith.addf %273, %277 : vector<4x128xf32>
    %279 = arith.maximumf %207, %227 : vector<1x128xf32>
    %280 = arith.subf %207, %279 : vector<1x128xf32>
    %281 = math.exp %280 : vector<1x128xf32>
    %282 = arith.subf %227, %279 : vector<1x128xf32>
    %283 = math.exp %282 : vector<1x128xf32>
    %284 = arith.addf %281, %283 : vector<1x128xf32>
    %cst_66 = arith.constant 1.000000e+00 : f32
    %285 = vector.broadcast %cst_66 : f32 to vector<1x128xf32>
    %286 = arith.divf %285, %284 : vector<1x128xf32>
    %287 = arith.mulf %281, %286 : vector<1x128xf32>
    %288 = vector.extract_strided_slice %45 {offsets = [12, 0], sizes = [4, 128], strides = [1, 1]} : vector<16x128xf32> to vector<4x128xf32>
    %289 = vector.broadcast %287 : vector<1x128xf32> to vector<4x128xf32>
    %290 = arith.mulf %289, %288 : vector<4x128xf32>
    %291 = arith.mulf %283, %286 : vector<1x128xf32>
    %292 = vector.extract_strided_slice %78 {offsets = [12, 0], sizes = [4, 128], strides = [1, 1]} : vector<16x128xf32> to vector<4x128xf32>
    %293 = vector.broadcast %291 : vector<1x128xf32> to vector<4x128xf32>
    %294 = arith.mulf %293, %292 : vector<4x128xf32>
    %295 = arith.addf %290, %294 : vector<4x128xf32>
    %296 = tpu.concatenate %244, %261, %278, %295 in 0 : vector<4x128xf32>, vector<4x128xf32>, vector<4x128xf32>, vector<4x128xf32> -> vector<16x128xf32>
    %cst_67 = arith.constant 0.000000e+00 : f32
    %297 = vector.broadcast %cst_67 : f32 to vector<64x128xf32>
    %cst_68 = arith.constant 0.000000e+00 : f32
    %298 = vector.broadcast %cst_68 : f32 to vector<64x128xf32>
    %299 = arith.truncf %187 : vector<16x128xf32> to vector<16x128xbf16>
    %cst_69 = arith.constant dense<0.000000e+00> : vector<16x128xf32>
    %300 = tpu.matmul %6, %299, %cst_69 {dimension_numbers = #tpu.dot_dimension_numbers<[1], [0], [0], [1], [0, 0, 1, 1], [], []>} : vector<16x16xbf16>, vector<16x128xbf16>, vector<16x128xf32> -> vector<16x128xf32>
    %301 = vector.broadcast %7 : vector<16x1xf32> to vector<16x128xf32>
    %302 = arith.addf %300, %301 : vector<16x128xf32>
    %303 = arith.addf %302, %36 : vector<16x128xf32>
    %304 = arith.truncf %303 : vector<16x128xf32> to vector<16x128xbf16>
    %cst_70 = arith.constant dense<0.000000e+00> : vector<64x128xf32>
    %305 = tpu.matmul %8, %304, %cst_70 {dimension_numbers = #tpu.dot_dimension_numbers<[1], [0], [0], [1], [0, 0, 1, 1], [], []>} : vector<64x16xbf16>, vector<16x128xbf16>, vector<64x128xf32> -> vector<64x128xf32>
    %306 = vector.broadcast %9 : vector<64x1xf32> to vector<64x128xf32>
    %307 = arith.addf %305, %306 : vector<64x128xf32>
    %cst_71 = arith.constant 0.000000e+00 : f32
    %308 = vector.broadcast %cst_71 : f32 to vector<64x128xf32>
    %309 = arith.maximumf %307, %308 : vector<64x128xf32>
    %310 = arith.truncf %309 : vector<64x128xf32> to vector<64x128xbf16>
    %cst_72 = arith.constant dense<0.000000e+00> : vector<16x128xf32>
    %311 = tpu.matmul %10, %310, %cst_72 {dimension_numbers = #tpu.dot_dimension_numbers<[1], [0], [0], [1], [0, 0, 1, 1], [], []>} : vector<16x64xbf16>, vector<64x128xbf16>, vector<16x128xf32> -> vector<16x128xf32>
    %312 = vector.broadcast %11 : vector<16x1xf32> to vector<16x128xf32>
    %313 = arith.addf %311, %312 : vector<16x128xf32>
    %cst_73 = arith.constant dense<0.000000e+00> : vector<128xf32>
    %314 = vector.multi_reduction <add>, %303, %cst_73 [0] : vector<16x128xf32> to vector<128xf32>
    %315 = vector.shape_cast %314 : vector<128xf32> to vector<1x128xf32>
    %cst_74 = arith.constant 1.600000e+01 : f32
    %316 = vector.broadcast %cst_74 : f32 to vector<1x128xf32>
    %317 = arith.divf %315, %316 : vector<1x128xf32>
    %318 = vector.broadcast %317 : vector<1x128xf32> to vector<16x128xf32>
    %319 = arith.subf %303, %318 : vector<16x128xf32>
    %320 = arith.mulf %319, %319 : vector<16x128xf32>
    %cst_75 = arith.constant dense<0.000000e+00> : vector<128xf32>
    %321 = vector.multi_reduction <add>, %320, %cst_75 [0] : vector<16x128xf32> to vector<128xf32>
    %322 = vector.shape_cast %321 : vector<128xf32> to vector<1x128xf32>
    %cst_76 = arith.constant 1.600000e+01 : f32
    %323 = vector.broadcast %cst_76 : f32 to vector<1x128xf32>
    %324 = arith.divf %322, %323 : vector<1x128xf32>
    %325 = vector.broadcast %317 : vector<1x128xf32> to vector<16x128xf32>
    %326 = arith.subf %303, %325 : vector<16x128xf32>
    %cst_77 = arith.constant 9.99999974E-6 : f32
    %327 = vector.broadcast %cst_77 : f32 to vector<1x128xf32>
    %328 = arith.addf %324, %327 : vector<1x128xf32>
    %329 = math.rsqrt %328 : vector<1x128xf32>
    %330 = vector.broadcast %329 : vector<1x128xf32> to vector<16x128xf32>
    %331 = arith.mulf %326, %330 : vector<16x128xf32>
    %332 = vector.broadcast %2 : vector<16x1xf32> to vector<16x128xf32>
    %333 = arith.mulf %331, %332 : vector<16x128xf32>
    %334 = vector.broadcast %3 : vector<16x1xf32> to vector<16x128xf32>
    %335 = arith.addf %333, %334 : vector<16x128xf32>
    %336 = arith.addf %313, %335 : vector<16x128xf32>
    %337 = arith.truncf %336 : vector<16x128xf32> to vector<16x128xbf16>
    %cst_78 = arith.constant dense<0.000000e+00> : vector<64x128xf32>
    %338 = tpu.matmul %12, %337, %cst_78 {dimension_numbers = #tpu.dot_dimension_numbers<[1], [0], [0], [1], [0, 0, 1, 1], [], []>} : vector<64x16xbf16>, vector<16x128xbf16>, vector<64x128xf32> -> vector<64x128xf32>
    %339 = arith.truncf %338 : vector<64x128xf32> to vector<64x128xbf16>
    %c0_79 = arith.constant 0 : index
    %c0_80 = arith.constant 0 : index
    %c0_81 = arith.constant 0 : index
    %340 = vector.load %arg15[%c0_79, %c0_80, %c0_81] : memref<2x64x128xbf16, #tpu.memory_space<vmem>>, vector<1x64x128xbf16>
    %341 = vector.shape_cast %340 : vector<1x64x128xbf16> to vector<64x128xbf16>
    %342 = vector.shape_cast %339 : vector<64x128xbf16> to vector<1x64x128xbf16>
    tpu.vector_store %arg15[%c0_79, %c0_80, %c0_81], %342 {strides = array<i32>} : memref<2x64x128xbf16, #tpu.memory_space<vmem>>, vector<1x64x128xbf16>,
    %343 = arith.addf %297, %338 : vector<64x128xf32>
    %344 = arith.mulf %338, %338 : vector<64x128xf32>
    %345 = arith.addf %298, %344 : vector<64x128xf32>
    %346 = arith.truncf %296 : vector<16x128xf32> to vector<16x128xbf16>
    %cst_82 = arith.constant dense<0.000000e+00> : vector<16x128xf32>
    %347 = tpu.matmul %6, %346, %cst_82 {dimension_numbers = #tpu.dot_dimension_numbers<[1], [0], [0], [1], [0, 0, 1, 1], [], []>} : vector<16x16xbf16>, vector<16x128xbf16>, vector<16x128xf32> -> vector<16x128xf32>
    %348 = vector.broadcast %7 : vector<16x1xf32> to vector<16x128xf32>
    %349 = arith.addf %347, %348 : vector<16x128xf32>
    %350 = arith.addf %349, %69 : vector<16x128xf32>
    %351 = arith.truncf %350 : vector<16x128xf32> to vector<16x128xbf16>
    %cst_83 = arith.constant dense<0.000000e+00> : vector<64x128xf32>
    %352 = tpu.matmul %8, %351, %cst_83 {dimension_numbers = #tpu.dot_dimension_numbers<[1], [0], [0], [1], [0, 0, 1, 1], [], []>} : vector<64x16xbf16>, vector<16x128xbf16>, vector<64x128xf32> -> vector<64x128xf32>
    %353 = vector.broadcast %9 : vector<64x1xf32> to vector<64x128xf32>
    %354 = arith.addf %352, %353 : vector<64x128xf32>
    %cst_84 = arith.constant 0.000000e+00 : f32
    %355 = vector.broadcast %cst_84 : f32 to vector<64x128xf32>
    %356 = arith.maximumf %354, %355 : vector<64x128xf32>
    %357 = arith.truncf %356 : vector<64x128xf32> to vector<64x128xbf16>
    %cst_85 = arith.constant dense<0.000000e+00> : vector<16x128xf32>
    %358 = tpu.matmul %10, %357, %cst_85 {dimension_numbers = #tpu.dot_dimension_numbers<[1], [0], [0], [1], [0, 0, 1, 1], [], []>} : vector<16x64xbf16>, vector<64x128xbf16>, vector<16x128xf32> -> vector<16x128xf32>
    %359 = vector.broadcast %11 : vector<16x1xf32> to vector<16x128xf32>
    %360 = arith.addf %358, %359 : vector<16x128xf32>
    %cst_86 = arith.constant dense<0.000000e+00> : vector<128xf32>
    %361 = vector.multi_reduction <add>, %350, %cst_86 [0] : vector<16x128xf32> to vector<128xf32>
    %362 = vector.shape_cast %361 : vector<128xf32> to vector<1x128xf32>
    %cst_87 = arith.constant 1.600000e+01 : f32
    %363 = vector.broadcast %cst_87 : f32 to vector<1x128xf32>
    %364 = arith.divf %362, %363 : vector<1x128xf32>
    %365 = vector.broadcast %364 : vector<1x128xf32> to vector<16x128xf32>
    %366 = arith.subf %350, %365 : vector<16x128xf32>
    %367 = arith.mulf %366, %366 : vector<16x128xf32>
    %cst_88 = arith.constant dense<0.000000e+00> : vector<128xf32>
    %368 = vector.multi_reduction <add>, %367, %cst_88 [0] : vector<16x128xf32> to vector<128xf32>
    %369 = vector.shape_cast %368 : vector<128xf32> to vector<1x128xf32>
    %cst_89 = arith.constant 1.600000e+01 : f32
    %370 = vector.broadcast %cst_89 : f32 to vector<1x128xf32>
    %371 = arith.divf %369, %370 : vector<1x128xf32>
    %372 = vector.broadcast %364 : vector<1x128xf32> to vector<16x128xf32>
    %373 = arith.subf %350, %372 : vector<16x128xf32>
    %cst_90 = arith.constant 9.99999974E-6 : f32
    %374 = vector.broadcast %cst_90 : f32 to vector<1x128xf32>
    %375 = arith.addf %371, %374 : vector<1x128xf32>
    %376 = math.rsqrt %375 : vector<1x128xf32>
    %377 = vector.broadcast %376 : vector<1x128xf32> to vector<16x128xf32>
    %378 = arith.mulf %373, %377 : vector<16x128xf32>
    %379 = vector.broadcast %2 : vector<16x1xf32> to vector<16x128xf32>
    %380 = arith.mulf %378, %379 : vector<16x128xf32>
    %381 = vector.broadcast %3 : vector<16x1xf32> to vector<16x128xf32>
    %382 = arith.addf %380, %381 : vector<16x128xf32>
    %383 = arith.addf %360, %382 : vector<16x128xf32>
    %384 = arith.truncf %383 : vector<16x128xf32> to vector<16x128xbf16>
    %cst_91 = arith.constant dense<0.000000e+00> : vector<64x128xf32>
    %385 = tpu.matmul %12, %384, %cst_91 {dimension_numbers = #tpu.dot_dimension_numbers<[1], [0], [0], [1], [0, 0, 1, 1], [], []>} : vector<64x16xbf16>, vector<16x128xbf16>, vector<64x128xf32> -> vector<64x128xf32>
    %386 = arith.truncf %385 : vector<64x128xf32> to vector<64x128xbf16>
    %c1_92 = arith.constant 1 : index
    %c0_93 = arith.constant 0 : index
    %c0_94 = arith.constant 0 : index
    %387 = vector.load %arg15[%c1_92, %c0_93, %c0_94] : memref<2x64x128xbf16, #tpu.memory_space<vmem>>, vector<1x64x128xbf16>
    %388 = vector.shape_cast %387 : vector<1x64x128xbf16> to vector<64x128xbf16>
    %389 = vector.shape_cast %386 : vector<64x128xbf16> to vector<1x64x128xbf16>
    tpu.vector_store %arg15[%c1_92, %c0_93, %c0_94], %389 {strides = array<i32>} : memref<2x64x128xbf16, #tpu.memory_space<vmem>>, vector<1x64x128xbf16>,
    %390 = arith.addf %343, %385 : vector<64x128xf32>
    %391 = arith.mulf %385, %385 : vector<64x128xf32>
    %392 = arith.addf %345, %391 : vector<64x128xf32>
    %cst_95 = arith.constant dense<0.000000e+00> : vector<64xf32>
    %393 = vector.multi_reduction <add>, %390, %cst_95 [1] : vector<64x128xf32> to vector<64xf32>
    %394 = vector.shape_cast %393 : vector<64xf32> to vector<64x1xf32>
    %cst_96 = arith.constant dense<0.000000e+00> : vector<64xf32>
    %395 = vector.multi_reduction <add>, %392, %cst_96 [1] : vector<64x128xf32> to vector<64xf32>
    %396 = vector.shape_cast %395 : vector<64xf32> to vector<64x1xf32>
    %397 = tpu.concatenate %394, %396 in 1 : vector<64x1xf32>, vector<64x1xf32> -> vector<64x2xf32>
    %c0_97 = arith.constant 0 : index
    %c0_98 = arith.constant 0 : index
    %c0_99 = arith.constant 0 : index
    %398 = vector.load %arg16[%c0_97, %c0_98, %c0_99] : memref<1x64x2xf32, #tpu.memory_space<vmem>>, vector<1x64x2xf32>
    %399 = vector.shape_cast %398 : vector<1x64x2xf32> to vector<64x2xf32>
    %400 = vector.shape_cast %397 : vector<64x2xf32> to vector<1x64x2xf32>
    tpu.vector_store %arg16[%c0_97, %c0_98, %c0_99], %400 {strides = array<i32>} : memref<1x64x2xf32, #tpu.memory_space<vmem>>, vector<1x64x2xf32>,
    return
  }
  func.func @transform_0(%arg0: i32) -> (i32, i32, i32) {
    %c0_i32 = arith.constant 0 : i32
    %c0_i32_0 = arith.constant 0 : i32
    %c0_i32_1 = arith.constant 0 : i32
    return %c0_i32, %c0_i32_0, %arg0 : i32, i32, i32
  }
  func.func @transform_1(%arg0: i32) -> (i32, i32) {
    %c0_i32 = arith.constant 0 : i32
    %c0_i32_0 = arith.constant 0 : i32
    %c0_i32_1 = arith.constant 0 : i32
    return %c0_i32, %c0_i32_0 : i32, i32
  }
  func.func @transform_2(%arg0: i32) -> (i32, i32) {
    %c0_i32 = arith.constant 0 : i32
    %c0_i32_0 = arith.constant 0 : i32
    %c0_i32_1 = arith.constant 0 : i32
    return %c0_i32, %c0_i32_0 : i32, i32
  }
  func.func @transform_3(%arg0: i32) -> (i32, i32) {
    %c0_i32 = arith.constant 0 : i32
    %c0_i32_0 = arith.constant 0 : i32
    %c0_i32_1 = arith.constant 0 : i32
    return %c0_i32, %c0_i32_0 : i32, i32
  }
  func.func @transform_4(%arg0: i32) -> (i32, i32) {
    %c0_i32 = arith.constant 0 : i32
    %c0_i32_0 = arith.constant 0 : i32
    %c0_i32_1 = arith.constant 0 : i32
    return %c0_i32, %c0_i32_0 : i32, i32
  }
  func.func @transform_5(%arg0: i32) -> (i32, i32) {
    %c0_i32 = arith.constant 0 : i32
    %c0_i32_0 = arith.constant 0 : i32
    %c0_i32_1 = arith.constant 0 : i32
    return %c0_i32, %c0_i32_0 : i32, i32
  }
  func.func @transform_6(%arg0: i32) -> (i32, i32) {
    %c0_i32 = arith.constant 0 : i32
    %c0_i32_0 = arith.constant 0 : i32
    %c0_i32_1 = arith.constant 0 : i32
    return %c0_i32, %c0_i32_0 : i32, i32
  }
  func.func @transform_7(%arg0: i32) -> (i32, i32) {
    %c0_i32 = arith.constant 0 : i32
    %c0_i32_0 = arith.constant 0 : i32
    %c0_i32_1 = arith.constant 0 : i32
    return %c0_i32, %c0_i32_0 : i32, i32
  }
  func.func @transform_8(%arg0: i32) -> (i32, i32) {
    %c0_i32 = arith.constant 0 : i32
    %c0_i32_0 = arith.constant 0 : i32
    %c0_i32_1 = arith.constant 0 : i32
    return %c0_i32, %c0_i32_0 : i32, i32
  }
  func.func @transform_9(%arg0: i32) -> (i32, i32) {
    %c0_i32 = arith.constant 0 : i32
    %c0_i32_0 = arith.constant 0 : i32
    %c0_i32_1 = arith.constant 0 : i32
    return %c0_i32, %c0_i32_0 : i32, i32
  }
  func.func @transform_10(%arg0: i32) -> (i32, i32) {
    %c0_i32 = arith.constant 0 : i32
    %c0_i32_0 = arith.constant 0 : i32
    %c0_i32_1 = arith.constant 0 : i32
    return %c0_i32, %c0_i32_0 : i32, i32
  }
  func.func @transform_11(%arg0: i32) -> (i32, i32) {
    %c0_i32 = arith.constant 0 : i32
    %c0_i32_0 = arith.constant 0 : i32
    %c0_i32_1 = arith.constant 0 : i32
    return %c0_i32, %c0_i32_0 : i32, i32
  }
  func.func @transform_12(%arg0: i32) -> (i32, i32) {
    %c0_i32 = arith.constant 0 : i32
    %c0_i32_0 = arith.constant 0 : i32
    %c0_i32_1 = arith.constant 0 : i32
    return %c0_i32, %c0_i32_0 : i32, i32
  }
  func.func @transform_13(%arg0: i32) -> (i32, i32) {
    %c0_i32 = arith.constant 0 : i32
    %c0_i32_0 = arith.constant 0 : i32
    %c0_i32_1 = arith.constant 0 : i32
    return %c0_i32, %c0_i32_0 : i32, i32
  }
  func.func @transform_14(%arg0: i32) -> (i32, i32, i32) {
    %c0_i32 = arith.constant 0 : i32
    %c0_i32_0 = arith.constant 0 : i32
    %c0_i32_1 = arith.constant 0 : i32
    return %c0_i32, %c0_i32_0, %arg0 : i32, i32, i32
  }
  func.func @transform_15(%arg0: i32) -> (i32, i32, i32) {
    %c0_i32 = arith.constant 0 : i32
    %c0_i32_0 = arith.constant 0 : i32
    %c0_i32_1 = arith.constant 0 : i32
    return %arg0, %c0_i32, %c0_i32_0 : i32, i32, i32
  }
}

module attributes {stable_mosaic.version = 11 : i64} {
  func.func @_bn_relu_kernel(%arg0: i32, %arg1: i32, %arg2: memref<1x64x128xbf16, #tpu.memory_space<vmem>>, %arg3: memref<1x64x1xf32, #tpu.memory_space<vmem>>, %arg4: memref<1x64x1xf32, #tpu.memory_space<vmem>>, %arg5: memref<1x64x128xf32, #tpu.memory_space<vmem>>) attributes {dimension_semantics = [#tpu.dimension_semantics<parallel>, #tpu.dimension_semantics<parallel>], iteration_bounds = array<i64: 2, 2>, scalar_prefetch = 0 : i64, scratch_operands = 0 : i64, tpu.core_type = #tpu.core_type<tc>, window_params = [{transform_indices = @transform_0, window_bounds = array<i64: 1, 64, 128>}, {pipeline_mode = #tpu.pipeline_mode<synchronous>, transform_indices = @transform_1, window_bounds = array<i64: 1, 64, 1>}, {pipeline_mode = #tpu.pipeline_mode<synchronous>, transform_indices = @transform_2, window_bounds = array<i64: 1, 64, 1>}, {transform_indices = @transform_3, window_bounds = array<i64: 1, 64, 128>}]} {
    %c0 = arith.constant 0 : index
    %c0_0 = arith.constant 0 : index
    %c0_1 = arith.constant 0 : index
    %0 = vector.load %arg2[%c0, %c0_0, %c0_1] : memref<1x64x128xbf16, #tpu.memory_space<vmem>>, vector<1x64x128xbf16>
    %1 = arith.extf %0 : vector<1x64x128xbf16> to vector<1x64x128xf32>
    %c0_2 = arith.constant 0 : index
    %c0_3 = arith.constant 0 : index
    %c0_4 = arith.constant 0 : index
    %2 = vector.load %arg3[%c0_2, %c0_3, %c0_4] : memref<1x64x1xf32, #tpu.memory_space<vmem>>, vector<1x64x1xf32>
    %3 = vector.broadcast %2 : vector<1x64x1xf32> to vector<1x64x128xf32>
    %4 = arith.mulf %1, %3 : vector<1x64x128xf32>
    %c0_5 = arith.constant 0 : index
    %c0_6 = arith.constant 0 : index
    %c0_7 = arith.constant 0 : index
    %5 = vector.load %arg4[%c0_5, %c0_6, %c0_7] : memref<1x64x1xf32, #tpu.memory_space<vmem>>, vector<1x64x1xf32>
    %6 = vector.broadcast %5 : vector<1x64x1xf32> to vector<1x64x128xf32>
    %7 = arith.addf %4, %6 : vector<1x64x128xf32>
    %cst = arith.constant 0.000000e+00 : f32
    %8 = vector.broadcast %cst : f32 to vector<1x64x128xf32>
    %9 = arith.maximumf %7, %8 : vector<1x64x128xf32>
    %c0_8 = arith.constant 0 : index
    %c0_9 = arith.constant 0 : index
    %c0_10 = arith.constant 0 : index
    %10 = vector.load %arg5[%c0_8, %c0_9, %c0_10] : memref<1x64x128xf32, #tpu.memory_space<vmem>>, vector<1x64x128xf32>
    tpu.vector_store %arg5[%c0_8, %c0_9, %c0_10], %9 {strides = array<i32>} : memref<1x64x128xf32, #tpu.memory_space<vmem>>, vector<1x64x128xf32>,
    return
  }
  func.func @transform_0(%arg0: i32, %arg1: i32) -> (i32, i32, i32) {
    %c0_i32 = arith.constant 0 : i32
    %c0_i32_0 = arith.constant 0 : i32
    return %arg0, %c0_i32, %arg1 : i32, i32, i32
  }
  func.func @transform_1(%arg0: i32, %arg1: i32) -> (i32, i32, i32) {
    %c0_i32 = arith.constant 0 : i32
    %c0_i32_0 = arith.constant 0 : i32
    %c0_i32_1 = arith.constant 0 : i32
    %c0_i32_2 = arith.constant 0 : i32
    return %c0_i32, %c0_i32_0, %c0_i32_1 : i32, i32, i32
  }
  func.func @transform_2(%arg0: i32, %arg1: i32) -> (i32, i32, i32) {
    %c0_i32 = arith.constant 0 : i32
    %c0_i32_0 = arith.constant 0 : i32
    %c0_i32_1 = arith.constant 0 : i32
    %c0_i32_2 = arith.constant 0 : i32
    return %c0_i32, %c0_i32_0, %c0_i32_1 : i32, i32, i32
  }
  func.func @transform_3(%arg0: i32, %arg1: i32) -> (i32, i32, i32) {
    %c0_i32 = arith.constant 0 : i32
    %c0_i32_0 = arith.constant 0 : i32
    return %arg0, %c0_i32, %arg1 : i32, i32, i32
  }
}

</mosaic_0001>

<llo_original>
// kernel: spectral_self_attention.3
$region0: #{spectral_self_attention.3}
  #allocation0 [shape = 'u32[]', space=smem, size = 0x4, offset = 0x4, fixed_abs, tag = 'smem constant byte address 0x4 - core index']
  #allocation1 [shape = 'u32[144,128]{1,0:T(1,128)}', space=vmem, size = 0x12000, scoped, tag = 'internal scratch']
  %s0 = inlined_call_operand.hbm [shape: bf16[2,64,256], index: 0, kind: input, shape index: {}]
  %s1 = inlined_call_operand.hbm [shape: f32[1,64,1], index: 1, kind: input, shape index: {}]
  %s2 = inlined_call_operand.hbm [shape: f32[1,64,1], index: 2, kind: input, shape index: {}]
  %s3 = inlined_call_operand.hbm [shape: f32[2,64,256], index: 3, kind: output, shape index: {}]
  %s4 = sld [smem:[#allocation0]]
  $region57: #{spectral_self_attention.3} parent=0
    _
  %s6 = ssub.s32 1, %s4
  %s7 = scalar_select 0, %s6, %s4
  $region1: #{spectral_self_attention.3} parent=0
    #allocation2 [shape = 'u8[32768]{0}', space=vmem, size = 0x8000, scoped, tag = 'input window, operand 0']
    #allocation3 [shape = 's32[2]{0}', space=sflag, size = 0x8, scoped, tag = 'scoped memory for spectral_self_attention.3']
    #allocation4 [shape = 's32[2]{0}', space=sflag, size = 0x8, scoped, tag = 'scoped memory for spectral_self_attention.3']
    #allocation5 [shape = 'u8[32768]{0}', space=vmem, size = 0x8000, scoped, tag = 'input window, operand 1, single buffered']
    #allocation6 [shape = 's32[1]{0}', space=sflag, size = 0x4, scoped, tag = 'scoped memory for spectral_self_attention.3']
    #allocation7 [shape = 'u8[32768]{0}', space=vmem, size = 0x8000, scoped, tag = 'input window, operand 2, single buffered']
    #allocation8 [shape = 'u8[65536]{0}', space=vmem, size = 0x10000, scoped, tag = 'output window, operand 0']
    %8 = vsyncpa [#allocation3], 0
    %s9 = scalar_lea.sflag [#allocation3], 1
    %10 = vsyncpa %s9, 0
    %11 = vsyncpa [#allocation6], 0
    %12 = vsyncpa [#allocation4], 0
    %s13 = scalar_lea.sflag [#allocation4], 1
    %14 = vsyncpa %s13, 0
    loop: start=0, step=1, limit=6
    $region2: #{spectral_self_attention.3} parent=1 // loop_pre_header
      _
    $region3: #{spectral_self_attention.3} parent=1 // loop_header
      %s16 = sphi 0, %s20
      %p17 = scmp.ge.s32.totalorder %s16, 6
      %s23 = sphi 0, %s35
      %s24 = sphi 0, %s31
      %s25 = sphi 0, %s23
      %s26 = sphi 0, %s24
      %s27 = sphi 0, %s25
      %s28 = sphi 0, %s26
      %s40 = sphi 0, %s42
      %s43 = sphi 0, %s40
      %s44 = sphi 0, %s43
      %s60 = sphi 0, %s44
      %s64 = sphi 0, %s64
      %s66 = sphi 0, %s64
      %s67 = sphi 0, %s66
      %s81 = sphi 0, %s67
      %s85 = sphi 0, %s85
      %s87 = sphi 0, %s85
      %s88 = sphi 0, %s87
      %s102 = sphi 0, %s88
      %s110 = sphi 0, %s112
      %s113 = sphi 0, %s110
      %s114 = sphi 0, %s113
      %s130 = sphi 0, %s114
    $region4: #{spectral_self_attention.3} parent=1 // loop_header_branch
      %19 = sbr.rel (%p17) target = $region8
    $region5: #{spectral_self_attention.3} parent=1 // loop_body
      %s21 = ssub.s32 %s16, 1
      %s22 = ssub.s32 %s16, 2
      %s29 = sadd.s32 1, %s24
      %p30 = scmp.ge.s32.totalorder %s29, 2
      %s31 = scalar_select %p30, 0, %s29
      %s32 = sadd.s32 1, %s23
      %s33 = scalar_select %p30, %s32, %s23
      %p34 = scmp.ge.s32.totalorder %s33, 2
      %s35 = scalar_select %p34, 0, %s33
      %s36 = ssub.s32 %s23, %s35
      %s37 = ssub.s32 %s24, %s31
      %s38 = sor.u32 %s36, %s37
      %p39 = scmp.eq.s32.totalorder %s38, 0
      %s41 = sadd.s32 %s40, 1
      %s42 = scalar_select %p39, %s40, %s41
      %p45 = pneg %p39
      %p46 = scmp.eq.s32.totalorder %s16, 3
      %p47 = por %p45, %p46
      %p48 = scmp.ne.s32.totalorder %s40, %s43
      %p49 = scmp.eq.s32.totalorder %s16, 0
      %p50 = por %p48, %p49
      %p51 = scmp.ne.s32.totalorder %s40, %s43
      %p52 = scmp.eq.s32.totalorder %s21, 3
      %p53 = por %p51, %p52
      %p54 = scmp.ne.s32.totalorder %s43, %s44
      %p55 = scmp.eq.s32.totalorder %s21, 0
      %p56 = por %p54, %p55
      %p57 = scmp.ne.s32.totalorder %s43, %s44
      %p58 = scmp.eq.s32.totalorder %s22, 3
      %p59 = por %p57, %p58
      %p61 = scmp.ne.s32.totalorder %s44, %s60
      %p62 = scmp.eq.s32.totalorder %s22, 0
      %p63 = por %p61, %p62
      %s65 = sadd.s32 %s64, 1
      %p68 = scmp.eq.s32.totalorder %s16, 3
      %p69 = scmp.ne.s32.totalorder %s64, %s66
      %p70 = scmp.eq.s32.totalorder %s16, 0
      %p71 = por %p69, %p70
      %p72 = scmp.ne.s32.totalorder %s64, %s66
      %p73 = scmp.eq.s32.totalorder %s21, 3
      %p74 = por %p72, %p73
      %p75 = scmp.ne.s32.totalorder %s66, %s67
      %p76 = scmp.eq.s32.totalorder %s21, 0
      %p77 = por %p75, %p76
      %p78 = scmp.ne.s32.totalorder %s66, %s67
      %p79 = scmp.eq.s32.totalorder %s22, 3
      %p80 = por %p78, %p79
      %p82 = scmp.ne.s32.totalorder %s67, %s81
      %p83 = scmp.eq.s32.totalorder %s22, 0
      %p84 = por %p82, %p83
      %s86 = sadd.s32 %s85, 1
      %p89 = scmp.eq.s32.totalorder %s16, 3
      %p90 = scmp.ne.s32.totalorder %s85, %s87
      %p91 = scmp.eq.s32.totalorder %s16, 0
      %p92 = por %p90, %p91
      %p93 = scmp.ne.s32.totalorder %s85, %s87
      %p94 = scmp.eq.s32.totalorder %s21, 3
      %p95 = por %p93, %p94
      %p96 = scmp.ne.s32.totalorder %s87, %s88
      %p97 = scmp.eq.s32.totalorder %s21, 0
      %p98 = por %p96, %p97
      %p99 = scmp.ne.s32.totalorder %s87, %s88
      %p100 = scmp.eq.s32.totalorder %s22, 3
      %p101 = por %p99, %p100
      %p103 = scmp.ne.s32.totalorder %s88, %s102
      %p104 = scmp.eq.s32.totalorder %s22, 0
      %p105 = por %p103, %p104
      %s106 = ssub.s32 %s23, %s35
      %s107 = ssub.s32 %s24, %s31
      %s108 = sor.u32 %s106, %s107
      %p109 = scmp.eq.s32.totalorder %s108, 0
      %s111 = sadd.s32 %s110, 1
      %s112 = scalar_select %p109, %s110, %s111
      %p115 = pneg %p109
      %p116 = scmp.eq.s32.totalorder %s16, 3
      %p117 = por %p115, %p116
      %p118 = scmp.ne.s32.totalorder %s110, %s113
      %p119 = scmp.eq.s32.totalorder %s16, 0
      %p120 = por %p118, %p119
      %p121 = scmp.ne.s32.totalorder %s110, %s113
      %p122 = scmp.eq.s32.totalorder %s21, 3
      %p123 = por %p121, %p122
      %p124 = scmp.ne.s32.totalorder %s113, %s114
      %p125 = scmp.eq.s32.totalorder %s21, 0
      %p126 = por %p124, %p125
      %p127 = scmp.ne.s32.totalorder %s113, %s114
      %p128 = scmp.eq.s32.totalorder %s22, 3
      %p129 = por %p127, %p128
      %p131 = scmp.ne.s32.totalorder %s114, %s130
      %p132 = scmp.eq.s32.totalorder %s22, 0
      %p133 = por %p131, %p132
      %p134 = scmp.le.s32.totalorder 1, %s16
      %p135 = scmp.lt.s32.totalorder %s16, 5
      %p136 = pnand %p134, %p135
      %p137 = pneg %p136
      // Predicated region
      $region9: #{spectral_self_attention.3} parent=5 // pred_check
        _
      $region10: #{spectral_self_attention.3} parent=5 // pred_check_branch
        %139 = sbr.rel (%p136) target = $region12
      $region11: #{spectral_self_attention.3} parent=5 // pred_region
        %s140 = ssub.s32 %s16, 1
        // Predicated region
        $region13: #{spectral_self_attention.3} parent=11 // pred_check
          %p141 = pneg %p77
        $region14: #{spectral_self_attention.3} parent=11 // pred_check_branch
          %143 = sbr.rel (%p141) target = $region16
        $region15: #{spectral_self_attention.3} parent=11 // pred_region
          %s145 = ssub.s32 1024, 1024
          %146 = vsyncadd [#allocation6], %s145
          %s147 = sshll.u32 [#allocation5], 4
          %s148 = int_to_ptr.vmem [resolvable:$true] %s147
          %153 = dma.hbm_to_vmem [thread:$0]  %s1, 1024, %s148, [#allocation6], 128, 128, 8
        $region16: #{spectral_self_attention.3} parent=11 // pred_fallthru
          _
        // Predicated region
        $region17: #{spectral_self_attention.3} parent=11 // pred_check
          %p154 = pneg %p98
        $region18: #{spectral_self_attention.3} parent=11 // pred_check_branch
          %156 = sbr.rel (%p154) target = $region20
        $region19: #{spectral_self_attention.3} parent=11 // pred_region
          %s158 = ssub.s32 1024, 1024
          %159 = vsyncadd [#allocation6], %s158
          %s160 = sshll.u32 [#allocation7], 4
          %s161 = int_to_ptr.vmem [resolvable:$true] %s160
          %166 = dma.hbm_to_vmem [thread:$0]  %s2, 1024, %s161, [#allocation6], 128, 128, 8
        $region20: #{spectral_self_attention.3} parent=11 // pred_fallthru
          _
      $region12: #{spectral_self_attention.3} parent=5 // pred_fallthru
        _
      %p167 = scmp.lt.s32.totalorder %s16, 4
      // Predicated region
      $region21: #{spectral_self_attention.3} parent=5 // pred_check
        %p168 = pneg %p167
      $region22: #{spectral_self_attention.3} parent=5 // pred_check_branch
        %170 = sbr.rel (%p168) target = $region24
      $region23: #{spectral_self_attention.3} parent=5 // pred_region
        // Predicated region
        $region25: #{spectral_self_attention.3} parent=23 // pred_check
          %p171 = pneg %p50
        $region26: #{spectral_self_attention.3} parent=23 // pred_check_branch
          %173 = sbr.rel (%p171) target = $region28
        $region27: #{spectral_self_attention.3} parent=23 // pred_region
          %s174 = sand.u32 %s40, 1
          %s175 = scalar_lea.sflag [#allocation3], %s174
          %s176 = sand.u32 %s40, 1
          %s177 = smul.addr %s176, 32
          %s178 = scalar_lea.vmem [#allocation2], %s177
          %s180 = ssub.s32 512, 512
          %181 = vsyncadd %s175, %s180
          %s182 = smul.addr %s23, 16
          %s183 = sadd.s32 %s24, %s182
          %s184 = smul.addr %s183, 64
          %s185 = scalar_lea.hbm %s0, %s184
          %s186 = sshll.u32 %s178, 4
          %s187 = int_to_ptr.vmem [resolvable:$true] %s186
          %192 = dma.hbm_to_vmem [thread:$0]  %s185, 512, %s187, %s175, 128, 64, 4
        $region28: #{spectral_self_attention.3} parent=23 // pred_fallthru
          _
      $region24: #{spectral_self_attention.3} parent=5 // pred_fallthru
        _
      %p193 = scmp.le.s32.totalorder 1, %s16
      %p194 = scmp.lt.s32.totalorder %s16, 5
      %p195 = pnand %p193, %p194
      %p196 = pneg %p195
      // Predicated region
      $region29: #{spectral_self_attention.3} parent=5 // pred_check
        _
      $region30: #{spectral_self_attention.3} parent=5 // pred_check_branch
        %198 = sbr.rel (%p195) target = $region32
      $region31: #{spectral_self_attention.3} parent=5 // pred_region
        %s199 = ssub.s32 %s16, 1
        %s200 = sand.u32 %s43, 1
        %s201 = scalar_lea.sflag [#allocation3], %s200
        %s202 = sand.u32 %s43, 1
        %s203 = smul.addr %s202, 32
        %s204 = scalar_lea.vmem [#allocation2], %s203
        // Predicated region
        $region33: #{spectral_self_attention.3} parent=31 // pred_check
          %p205 = pneg %p56
        $region34: #{spectral_self_attention.3} parent=31 // pred_check_branch
          %207 = sbr.rel (%p205) target = $region36
        $region35: #{spectral_self_attention.3} parent=31 // pred_region
          %208 = dma.done %s201, 512
        $region36: #{spectral_self_attention.3} parent=31 // pred_fallthru
          _
        // Predicated region
        $region37: #{spectral_self_attention.3} parent=31 // pred_check
          %p209 = pneg %p77
        $region38: #{spectral_self_attention.3} parent=31 // pred_check_branch
          %211 = sbr.rel (%p209) target = $region40
        $region39: #{spectral_self_attention.3} parent=31 // pred_region
          %212 = dma.done [#allocation6], 1024
        $region40: #{spectral_self_attention.3} parent=31 // pred_fallthru
          _
        // Predicated region
        $region41: #{spectral_self_attention.3} parent=31 // pred_check
          %p213 = pneg %p98
        $region42: #{spectral_self_attention.3} parent=31 // pred_check_branch
          %215 = sbr.rel (%p213) target = $region44
        $region43: #{spectral_self_attention.3} parent=31 // pred_region
          %216 = dma.done [#allocation6], 1024
        $region44: #{spectral_self_attention.3} parent=31 // pred_fallthru
          _
        %s217 = sand.u32 %s43, 1
        %s218 = scalar_lea.sflag [#allocation3], %s217
        %s219 = sand.u32 %s43, 1
        %s220 = smul.addr %s219, 32
        %s221 = scalar_lea.vmem [#allocation2], %s220
        %p222 = pneg %p56
        %p223 = pneg %p53
        %p224 = pneg %p77
        %p225 = pneg %p74
        %p226 = pneg %p98
        %p227 = pneg %p95
        %p228 = pneg %p126
        %p229 = pneg %p123
        %s230 = sand.u32 %s113, 1
        %s231 = scalar_lea.sflag [#allocation4], %s230
        %s232 = sand.u32 %s113, 1
        %s233 = smul.addr %s232, 64
        %s234 = scalar_lea.vmem [#allocation8], %s233
        %v235 = vld [vmem:[%s204] sm:$0xf]
        %v236 = vld [vmem:[%s204 + $0x4] sm:$0xf]
        %v237 = vld [vmem:[%s204 + $0x8] sm:$0xf]
        %v238 = vld [vmem:[%s204 + $0xc] sm:$0xf]
        %v239 = vld [vmem:[%s204 + $0x10] sm:$0xf]
        %v240 = vld [vmem:[%s204 + $0x14] sm:$0xf]
        %v241 = vld [vmem:[%s204 + $0x18] sm:$0xf]
        %v242 = vld [vmem:[%s204 + $0x1c] sm:$0xf]
        %v243 = vunpack.c.l.bf16 %v235
        %v244 = vunpack.c.l.bf16 %v236
        %v245 = vunpack.c.l.bf16 %v237
        %v246 = vunpack.c.l.bf16 %v238
        %v247 = vunpack.c.l.bf16 %v239
        %v248 = vunpack.c.l.bf16 %v240
        %v249 = vunpack.c.l.bf16 %v241
        %v250 = vunpack.c.l.bf16 %v242
        %v251 = vld [vmem:[#allocation5] sm:$0xff]
        %v252 = vld [vmem:[#allocation5 + $0x8] sm:$0xff]
        %v253 = vld [vmem:[#allocation5 + $0x10] sm:$0xff]
        %v254 = vld [vmem:[#allocation5 + $0x18] sm:$0xff]
        %v255 = vld [vmem:[#allocation5 + $0x20] sm:$0xff]
        %v256 = vld [vmem:[#allocation5 + $0x28] sm:$0xff]
        %v257 = vld [vmem:[#allocation5 + $0x30] sm:$0xff]
        %v258 = vld [vmem:[#allocation5 + $0x38] sm:$0xff]
        %260 = vset.pattern.permute.xlu0 0
        %261 = vperm.xlu0 %260, %v251
        %v262 = vpop.permute.xlu0 %261
        %265 = vset.pattern.permute.xlu0 0
        %266 = vperm.xlu0 %265, %v252
        %v267 = vpop.permute.xlu0 %266
        %270 = vset.pattern.permute.xlu0 0
        %271 = vperm.xlu0 %270, %v253
        %v272 = vpop.permute.xlu0 %271
        %275 = vset.pattern.permute.xlu0 0
        %276 = vperm.xlu0 %275, %v254
        %v277 = vpop.permute.xlu0 %276
        %280 = vset.pattern.permute.xlu0 0
        %281 = vperm.xlu0 %280, %v255
        %v282 = vpop.permute.xlu0 %281
        %285 = vset.pattern.permute.xlu0 0
        %286 = vperm.xlu0 %285, %v256
        %v287 = vpop.permute.xlu0 %286
        %290 = vset.pattern.permute.xlu0 0
        %291 = vperm.xlu0 %290, %v257
        %v292 = vpop.permute.xlu0 %291
        %295 = vset.pattern.permute.xlu0 0
        %296 = vperm.xlu0 %295, %v258
        %v297 = vpop.permute.xlu0 %296
        %v299 = vmul.f32 %v243, %v262
        %v300 = vmul.f32 %v244, %v267
        %v301 = vmul.f32 %v245, %v272
        %v302 = vmul.f32 %v246, %v277
        %v303 = vmul.f32 %v247, %v282
        %v304 = vmul.f32 %v248, %v287
        %v305 = vmul.f32 %v249, %v292
        %v306 = vmul.f32 %v250, %v297
        %v307 = vld [vmem:[#allocation7] sm:$0xff]
        %v308 = vld [vmem:[#allocation7 + $0x8] sm:$0xff]
        %v309 = vld [vmem:[#allocation7 + $0x10] sm:$0xff]
        %v310 = vld [vmem:[#allocation7 + $0x18] sm:$0xff]
        %v311 = vld [vmem:[#allocation7 + $0x20] sm:$0xff]
        %v312 = vld [vmem:[#allocation7 + $0x28] sm:$0xff]
        %v313 = vld [vmem:[#allocation7 + $0x30] sm:$0xff]
        %v314 = vld [vmem:[#allocation7 + $0x38] sm:$0xff]
        %316 = vset.pattern.permute.xlu0 0
        %317 = vperm.xlu0 %316, %v307
        %v318 = vpop.permute.xlu0 %317
        %321 = vset.pattern.permute.xlu0 0
        %322 = vperm.xlu0 %321, %v308
        %v323 = vpop.permute.xlu0 %322
        %326 = vset.pattern.permute.xlu0 0
        %327 = vperm.xlu0 %326, %v309
        %v328 = vpop.permute.xlu0 %327
        %331 = vset.pattern.permute.xlu0 0
        %332 = vperm.xlu0 %331, %v310
        %v333 = vpop.permute.xlu0 %332
        %336 = vset.pattern.permute.xlu0 0
        %337 = vperm.xlu0 %336, %v311
        %v338 = vpop.permute.xlu0 %337
        %341 = vset.pattern.permute.xlu0 0
        %342 = vperm.xlu0 %341, %v312
        %v343 = vpop.permute.xlu0 %342
        %346 = vset.pattern.permute.xlu0 0
        %347 = vperm.xlu0 %346, %v313
        %v348 = vpop.permute.xlu0 %347
        %351 = vset.pattern.permute.xlu0 0
        %352 = vperm.xlu0 %351, %v314
        %v353 = vpop.permute.xlu0 %352
        %v355 = vadd.f32 %v299, %v318
        %v356 = vadd.f32 %v300, %v323
        %v357 = vadd.f32 %v301, %v328
        %v358 = vadd.f32 %v302, %v333
        %v359 = vadd.f32 %v303, %v338
        %v360 = vadd.f32 %v304, %v343
        %v361 = vadd.f32 %v305, %v348
        %v362 = vadd.f32 %v306, %v353
        %v363 = vmax.f32 %v355, 0.0
        %v364 = vmax.f32 %v356, 0.0
        %v365 = vmax.f32 %v357, 0.0
        %v366 = vmax.f32 %v358, 0.0
        %v367 = vmax.f32 %v359, 0.0
        %v368 = vmax.f32 %v360, 0.0
        %v369 = vmax.f32 %v361, 0.0
        %v370 = vmax.f32 %v362, 0.0
        %371 = vst [vmem:[%s234] sm:$0xff] %v363
        %372 = vst [vmem:[%s234 + $0x8] sm:$0xff] %v364
        %373 = vst [vmem:[%s234 + $0x10] sm:$0xff] %v365
        %374 = vst [vmem:[%s234 + $0x18] sm:$0xff] %v366
        %375 = vst [vmem:[%s234 + $0x20] sm:$0xff] %v367
        %376 = vst [vmem:[%s234 + $0x28] sm:$0xff] %v368
        %377 = vst [vmem:[%s234 + $0x30] sm:$0xff] %v369
        %378 = vst [vmem:[%s234 + $0x38] sm:$0xff] %v370
        %s379 = sand.u32 %s113, 1
        %s380 = scalar_lea.sflag [#allocation4], %s379
        %s381 = sand.u32 %s113, 1
        %s382 = smul.addr %s381, 64
        %s383 = scalar_lea.vmem [#allocation8], %s382
        // Predicated region
        $region45: #{spectral_self_attention.3} parent=31 // pred_check
          %p384 = pneg %p123
        $region46: #{spectral_self_attention.3} parent=31 // pred_check_branch
          %386 = sbr.rel (%p384) target = $region48
        $region47: #{spectral_self_attention.3} parent=31 // pred_region
          %s388 = ssub.s32 1024, 1024
          %389 = vsyncadd %s380, %s388
          %s390 = smul.addr %s25, 16
          %s391 = sadd.s32 %s26, %s390
          %s392 = smul.addr %s391, 128
          %s393 = scalar_lea.hbm %s3, %s392
          %s394 = sshll.u32 %s383, 4
          %s395 = int_to_ptr.vmem [resolvable:$true] %s394
          %400 = dma.vmem_to_hbm [thread:$0]  %s395, 1024, %s393, %s380, 128, 256, 8
        $region48: #{spectral_self_attention.3} parent=31 // pred_fallthru
          _
      $region32: #{spectral_self_attention.3} parent=5 // pred_fallthru
        _
      %p401 = scmp.le.s32.totalorder 2, %s16
      // Predicated region
      $region49: #{spectral_self_attention.3} parent=5 // pred_check
        %p402 = pneg %p401
      $region50: #{spectral_self_attention.3} parent=5 // pred_check_branch
        %404 = sbr.rel (%p402) target = $region52
      $region51: #{spectral_self_attention.3} parent=5 // pred_region
        %s405 = ssub.s32 %s16, 2
        // Predicated region
        $region53: #{spectral_self_attention.3} parent=51 // pred_check
          %p406 = pneg %p129
        $region54: #{spectral_self_attention.3} parent=51 // pred_check_branch
          %408 = sbr.rel (%p406) target = $region56
        $region55: #{spectral_self_attention.3} parent=51 // pred_region
          %s409 = sand.u32 %s114, 1
          %s410 = scalar_lea.sflag [#allocation4], %s409
          %s411 = sand.u32 %s114, 1
          %s412 = smul.addr %s411, 64
          %s413 = scalar_lea.vmem [#allocation8], %s412
          %414 = dma.done %s410, 1024
        $region56: #{spectral_self_attention.3} parent=51 // pred_fallthru
          _
      $region52: #{spectral_self_attention.3} parent=5 // pred_fallthru
        _
    $region6: #{spectral_self_attention.3} parent=1 // loop_footer
      %s20 = sadd.s32 1, %s16
    $region7: #{spectral_self_attention.3} parent=1 // loop_footer_branch
      %15 = sbr.rel target = $region3
    $region8: #{spectral_self_attention.3} parent=1 // loop_exit
      _
    %415 = vsyncpa [#allocation3], 1
    %s416 = scalar_lea.sflag [#allocation3], 1
    %417 = vsyncpa %s416, 1
    %418 = vsyncpa [#allocation6], 1
    %419 = vsyncpa [#allocation4], 1
    %s420 = scalar_lea.sflag [#allocation4], 1
    %421 = vsyncpa %s420, 1

// kernel: spectral_self_attention.2
$region0: #{spectral_self_attention.2}
  #allocation0 [shape = 'u32[]', space=smem, size = 0x4, offset = 0x4, fixed_abs, tag = 'smem constant byte address 0x4 - core index']
  #allocation1 [shape = 'u32[144,128]{1,0:T(1,128)}', space=vmem, size = 0x12000, scoped, tag = 'internal scratch']
  %s0 = inlined_call_operand.hbm [shape: f32[2,16,256], index: 0, kind: input, shape index: {}]
  %s1 = inlined_call_operand.hbm [shape: f32[16,1], index: 1, kind: input, shape index: {}]
  %s2 = inlined_call_operand.hbm [shape: f32[16,1], index: 2, kind: input, shape index: {}]
  %s3 = inlined_call_operand.hbm [shape: bf16[48,16], index: 3, kind: input, shape index: {}]
  %s4 = inlined_call_operand.hbm [shape: f32[48,1], index: 4, kind: input, shape index: {}]
  %s5 = inlined_call_operand.hbm [shape: bf16[16,16], index: 5, kind: input, shape index: {}]
  %s6 = inlined_call_operand.hbm [shape: f32[16,1], index: 6, kind: input, shape index: {}]
  %s7 = inlined_call_operand.hbm [shape: bf16[64,16], index: 7, kind: input, shape index: {}]
  %s8 = inlined_call_operand.hbm [shape: f32[64,1], index: 8, kind: input, shape index: {}]
  %s9 = inlined_call_operand.hbm [shape: bf16[16,64], index: 9, kind: input, shape index: {}]
  %s10 = inlined_call_operand.hbm [shape: f32[16,1], index: 10, kind: input, shape index: {}]
  %s11 = inlined_call_operand.hbm [shape: f32[16,1], index: 11, kind: input, shape index: {}]
  %s12 = inlined_call_operand.hbm [shape: f32[16,1], index: 12, kind: input, shape index: {}]
  %s13 = inlined_call_operand.hbm [shape: bf16[64,16], index: 13, kind: input, shape index: {}]
  %s14 = inlined_call_operand.hbm [shape: bf16[2,64,256], index: 14, kind: output, shape index: {0}]
  %s15 = inlined_call_operand.hbm [shape: f32[2,64,2], index: 15, kind: output, shape index: {1}]
  %16 = xla_tuple %s14, %s15
  %s17 = sld [smem:[#allocation0]]
  $region153: #{spectral_self_attention.2} parent=0
    _
  %s19 = ssub.s32 1, %s17
  %s20 = scalar_select 0, %s19, %s17
  $region1: #{spectral_self_attention.2} parent=0
    #allocation2 [shape = 'u8[32768]{0}', space=vmem, size = 0x8000, scoped, tag = 'input window, operand 0']
    #allocation3 [shape = 's32[2]{0}', space=sflag, size = 0x8, scoped, tag = 'scoped memory for spectral_self_attention.2']
    #allocation4 [shape = 's32[2]{0}', space=sflag, size = 0x8, scoped, tag = 'scoped memory for spectral_self_attention.2']
    #allocation5 [shape = 'u8[8192]{0}', space=vmem, size = 0x2000, scoped, tag = 'input window, operand 1, single buffered']
    #allocation6 [shape = 's32[1]{0}', space=sflag, size = 0x4, scoped, tag = 'scoped memory for spectral_self_attention.2']
    #allocation7 [shape = 'u8[8192]{0}', space=vmem, size = 0x2000, scoped, tag = 'input window, operand 2, single buffered']
    #allocation8 [shape = 'u8[12288]{0}', space=vmem, size = 0x3000, scoped, tag = 'input window, operand 3, single buffered']
    #allocation9 [shape = 's32[1]{0}', space=sflag, size = 0x4, scoped, tag = 'scoped memory for spectral_self_attention.2']
    #allocation10 [shape = 'u8[24576]{0}', space=vmem, size = 0x6000, scoped, tag = 'input window, operand 4, single buffered']
    #allocation11 [shape = 'u8[4096]{0}', space=vmem, size = 0x1000, scoped, tag = 'input window, operand 5, single buffered']
    #allocation12 [shape = 's32[1]{0}', space=sflag, size = 0x4, scoped, tag = 'scoped memory for spectral_self_attention.2']
    #allocation13 [shape = 'u8[8192]{0}', space=vmem, size = 0x2000, scoped, tag = 'input window, operand 6, single buffered']
    #allocation14 [shape = 'u8[16384]{0}', space=vmem, size = 0x4000, scoped, tag = 'input window, operand 7, single buffered']
    #allocation15 [shape = 's32[1]{0}', space=sflag, size = 0x4, scoped, tag = 'scoped memory for spectral_self_attention.2']
    #allocation16 [shape = 'u8[32768]{0}', space=vmem, size = 0x8000, scoped, tag = 'input window, operand 8, single buffered']
    #allocation17 [shape = 'u8[4096]{0}', space=vmem, size = 0x1000, scoped, tag = 'input window, operand 9, single buffered']
    #allocation18 [shape = 's32[1]{0}', space=sflag, size = 0x4, scoped, tag = 'scoped memory for spectral_self_attention.2']
    #allocation19 [shape = 'u8[8192]{0}', space=vmem, size = 0x2000, scoped, tag = 'input window, operand 10, single buffered']
    #allocation20 [shape = 'u8[8192]{0}', space=vmem, size = 0x2000, scoped, tag = 'input window, operand 11, single buffered']
    #allocation21 [shape = 's32[1]{0}', space=sflag, size = 0x4, scoped, tag = 'scoped memory for spectral_self_attention.2']
    #allocation22 [shape = 'u8[8192]{0}', space=vmem, size = 0x2000, scoped, tag = 'input window, operand 12, single buffered']
    #allocation23 [shape = 'u8[16384]{0}', space=vmem, size = 0x4000, scoped, tag = 'input window, operand 13, single buffered']
    #allocation24 [shape = 's32[1]{0}', space=sflag, size = 0x4, scoped, tag = 'scoped memory for spectral_self_attention.2']
    #allocation25 [shape = 'u8[65536]{0}', space=vmem, size = 0x10000, scoped, tag = 'output window, operand 0']
    #allocation26 [shape = 'u8[65536]{0}', space=vmem, size = 0x10000, scoped, tag = 'output window, operand 1']
    #allocation27 [shape = 's32[2]{0}', space=sflag, size = 0x8, scoped, tag = 'scoped memory for spectral_self_attention.2']
    %21 = vsyncpa [#allocation3], 0
    %s22 = scalar_lea.sflag [#allocation3], 1
    %23 = vsyncpa %s22, 0
    %24 = vsyncpa [#allocation6], 0
    %25 = vsyncpa [#allocation9], 0
    %26 = vsyncpa [#allocation12], 0
    %27 = vsyncpa [#allocation15], 0
    %28 = vsyncpa [#allocation18], 0
    %29 = vsyncpa [#allocation21], 0
    %30 = vsyncpa [#allocation24], 0
    %31 = vsyncpa [#allocation4], 0
    %s32 = scalar_lea.sflag [#allocation4], 1
    %33 = vsyncpa %s32, 0
    %34 = vsyncpa [#allocation27], 0
    %s35 = scalar_lea.sflag [#allocation27], 1
    %36 = vsyncpa %s35, 0
    loop: start=0, step=1, limit=4
    $region2: #{spectral_self_attention.2} parent=1 // loop_pre_header
      _
    $region3: #{spectral_self_attention.2} parent=1 // loop_header
      %s38 = sphi 0, %s42
      %p39 = scmp.ge.s32.totalorder %s38, 4
      %s48 = sphi 0, %s50
      %s51 = sphi 0, %s48
      %s52 = sphi 0, %s51
      %s68 = sphi 0, %s52
      %s72 = sphi 0, %s72
      %s74 = sphi 0, %s72
      %s75 = sphi 0, %s74
      %s89 = sphi 0, %s75
      %s93 = sphi 0, %s93
      %s95 = sphi 0, %s93
      %s96 = sphi 0, %s95
      %s110 = sphi 0, %s96
      %s114 = sphi 0, %s114
      %s116 = sphi 0, %s114
      %s117 = sphi 0, %s116
      %s131 = sphi 0, %s117
      %s135 = sphi 0, %s135
      %s137 = sphi 0, %s135
      %s138 = sphi 0, %s137
      %s152 = sphi 0, %s138
      %s156 = sphi 0, %s156
      %s158 = sphi 0, %s156
      %s159 = sphi 0, %s158
      %s173 = sphi 0, %s159
      %s177 = sphi 0, %s177
      %s179 = sphi 0, %s177
      %s180 = sphi 0, %s179
      %s194 = sphi 0, %s180
      %s198 = sphi 0, %s198
      %s200 = sphi 0, %s198
      %s201 = sphi 0, %s200
      %s215 = sphi 0, %s201
      %s219 = sphi 0, %s219
      %s221 = sphi 0, %s219
      %s222 = sphi 0, %s221
      %s236 = sphi 0, %s222
      %s240 = sphi 0, %s240
      %s242 = sphi 0, %s240
      %s243 = sphi 0, %s242
      %s257 = sphi 0, %s243
      %s261 = sphi 0, %s261
      %s263 = sphi 0, %s261
      %s264 = sphi 0, %s263
      %s278 = sphi 0, %s264
      %s282 = sphi 0, %s282
      %s284 = sphi 0, %s282
      %s285 = sphi 0, %s284
      %s299 = sphi 0, %s285
      %s303 = sphi 0, %s303
      %s305 = sphi 0, %s303
      %s306 = sphi 0, %s305
      %s320 = sphi 0, %s306
      %s324 = sphi 0, %s324
      %s326 = sphi 0, %s324
      %s327 = sphi 0, %s326
      %s341 = sphi 0, %s327
      %s347 = sphi 0, %s349
      %s350 = sphi 0, %s347
      %s351 = sphi 0, %s350
      %s367 = sphi 0, %s351
      %s373 = sphi 0, %s375
      %s376 = sphi 0, %s373
      %s377 = sphi 0, %s376
      %s393 = sphi 0, %s377
    $region4: #{spectral_self_attention.2} parent=1 // loop_header_branch
      %41 = sbr.rel (%p39) target = $region8
    $region5: #{spectral_self_attention.2} parent=1 // loop_body
      %s43 = ssub.s32 %s38, 1
      %s44 = ssub.s32 %s38, 2
      %s45 = sadd.s32 %s38, 1
      %s46 = ssub.s32 %s38, %s45
      %p47 = scmp.eq.s32.totalorder %s46, 0
      %s49 = sadd.s32 %s48, 1
      %s50 = scalar_select %p47, %s48, %s49
      %p53 = pneg %p47
      %p54 = scmp.eq.s32.totalorder %s38, 1
      %p55 = por %p53, %p54
      %p56 = scmp.ne.s32.totalorder %s48, %s51
      %p57 = scmp.eq.s32.totalorder %s38, 0
      %p58 = por %p56, %p57
      %p59 = scmp.ne.s32.totalorder %s48, %s51
      %p60 = scmp.eq.s32.totalorder %s43, 1
      %p61 = por %p59, %p60
      %p62 = scmp.ne.s32.totalorder %s51, %s52
      %p63 = scmp.eq.s32.totalorder %s43, 0
      %p64 = por %p62, %p63
      %p65 = scmp.ne.s32.totalorder %s51, %s52
      %p66 = scmp.eq.s32.totalorder %s44, 1
      %p67 = por %p65, %p66
      %p69 = scmp.ne.s32.totalorder %s52, %s68
      %p70 = scmp.eq.s32.totalorder %s44, 0
      %p71 = por %p69, %p70
      %s73 = sadd.s32 %s72, 1
      %p76 = scmp.eq.s32.totalorder %s38, 1
      %p77 = scmp.ne.s32.totalorder %s72, %s74
      %p78 = scmp.eq.s32.totalorder %s38, 0
      %p79 = por %p77, %p78
      %p80 = scmp.ne.s32.totalorder %s72, %s74
      %p81 = scmp.eq.s32.totalorder %s43, 1
      %p82 = por %p80, %p81
      %p83 = scmp.ne.s32.totalorder %s74, %s75
      %p84 = scmp.eq.s32.totalorder %s43, 0
      %p85 = por %p83, %p84
      %p86 = scmp.ne.s32.totalorder %s74, %s75
      %p87 = scmp.eq.s32.totalorder %s44, 1
      %p88 = por %p86, %p87
      %p90 = scmp.ne.s32.totalorder %s75, %s89
      %p91 = scmp.eq.s32.totalorder %s44, 0
      %p92 = por %p90, %p91
      %s94 = sadd.s32 %s93, 1
      %p97 = scmp.eq.s32.totalorder %s38, 1
      %p98 = scmp.ne.s32.totalorder %s93, %s95
      %p99 = scmp.eq.s32.totalorder %s38, 0
      %p100 = por %p98, %p99
      %p101 = scmp.ne.s32.totalorder %s93, %s95
      %p102 = scmp.eq.s32.totalorder %s43, 1
      %p103 = por %p101, %p102
      %p104 = scmp.ne.s32.totalorder %s95, %s96
      %p105 = scmp.eq.s32.totalorder %s43, 0
      %p106 = por %p104, %p105
      %p107 = scmp.ne.s32.totalorder %s95, %s96
      %p108 = scmp.eq.s32.totalorder %s44, 1
      %p109 = por %p107, %p108
      %p111 = scmp.ne.s32.totalorder %s96, %s110
      %p112 = scmp.eq.s32.totalorder %s44, 0
      %p113 = por %p111, %p112
      %s115 = sadd.s32 %s114, 1
      %p118 = scmp.eq.s32.totalorder %s38, 1
      %p119 = scmp.ne.s32.totalorder %s114, %s116
      %p120 = scmp.eq.s32.totalorder %s38, 0
      %p121 = por %p119, %p120
      %p122 = scmp.ne.s32.totalorder %s114, %s116
      %p123 = scmp.eq.s32.totalorder %s43, 1
      %p124 = por %p122, %p123
      %p125 = scmp.ne.s32.totalorder %s116, %s117
      %p126 = scmp.eq.s32.totalorder %s43, 0
      %p127 = por %p125, %p126
      %p128 = scmp.ne.s32.totalorder %s116, %s117
      %p129 = scmp.eq.s32.totalorder %s44, 1
      %p130 = por %p128, %p129
      %p132 = scmp.ne.s32.totalorder %s117, %s131
      %p133 = scmp.eq.s32.totalorder %s44, 0
      %p134 = por %p132, %p133
      %s136 = sadd.s32 %s135, 1
      %p139 = scmp.eq.s32.totalorder %s38, 1
      %p140 = scmp.ne.s32.totalorder %s135, %s137
      %p141 = scmp.eq.s32.totalorder %s38, 0
      %p142 = por %p140, %p141
      %p143 = scmp.ne.s32.totalorder %s135, %s137
      %p144 = scmp.eq.s32.totalorder %s43, 1
      %p145 = por %p143, %p144
      %p146 = scmp.ne.s32.totalorder %s137, %s138
      %p147 = scmp.eq.s32.totalorder %s43, 0
      %p148 = por %p146, %p147
      %p149 = scmp.ne.s32.totalorder %s137, %s138
      %p150 = scmp.eq.s32.totalorder %s44, 1
      %p151 = por %p149, %p150
      %p153 = scmp.ne.s32.totalorder %s138, %s152
      %p154 = scmp.eq.s32.totalorder %s44, 0
      %p155 = por %p153, %p154
      %s157 = sadd.s32 %s156, 1
      %p160 = scmp.eq.s32.totalorder %s38, 1
      %p161 = scmp.ne.s32.totalorder %s156, %s158
      %p162 = scmp.eq.s32.totalorder %s38, 0
      %p163 = por %p161, %p162
      %p164 = scmp.ne.s32.totalorder %s156, %s158
      %p165 = scmp.eq.s32.totalorder %s43, 1
      %p166 = por %p164, %p165
      %p167 = scmp.ne.s32.totalorder %s158, %s159
      %p168 = scmp.eq.s32.totalorder %s43, 0
      %p169 = por %p167, %p168
      %p170 = scmp.ne.s32.totalorder %s158, %s159
      %p171 = scmp.eq.s32.totalorder %s44, 1
      %p172 = por %p170, %p171
      %p174 = scmp.ne.s32.totalorder %s159, %s173
      %p175 = scmp.eq.s32.totalorder %s44, 0
      %p176 = por %p174, %p175
      %s178 = sadd.s32 %s177, 1
      %p181 = scmp.eq.s32.totalorder %s38, 1
      %p182 = scmp.ne.s32.totalorder %s177, %s179
      %p183 = scmp.eq.s32.totalorder %s38, 0
      %p184 = por %p182, %p183
      %p185 = scmp.ne.s32.totalorder %s177, %s179
      %p186 = scmp.eq.s32.totalorder %s43, 1
      %p187 = por %p185, %p186
      %p188 = scmp.ne.s32.totalorder %s179, %s180
      %p189 = scmp.eq.s32.totalorder %s43, 0
      %p190 = por %p188, %p189
      %p191 = scmp.ne.s32.totalorder %s179, %s180
      %p192 = scmp.eq.s32.totalorder %s44, 1
      %p193 = por %p191, %p192
      %p195 = scmp.ne.s32.totalorder %s180, %s194
      %p196 = scmp.eq.s32.totalorder %s44, 0
      %p197 = por %p195, %p196
      %s199 = sadd.s32 %s198, 1
      %p202 = scmp.eq.s32.totalorder %s38, 1
      %p203 = scmp.ne.s32.totalorder %s198, %s200
      %p204 = scmp.eq.s32.totalorder %s38, 0
      %p205 = por %p203, %p204
      %p206 = scmp.ne.s32.totalorder %s198, %s200
      %p207 = scmp.eq.s32.totalorder %s43, 1
      %p208 = por %p206, %p207
      %p209 = scmp.ne.s32.totalorder %s200, %s201
      %p210 = scmp.eq.s32.totalorder %s43, 0
      %p211 = por %p209, %p210
      %p212 = scmp.ne.s32.totalorder %s200, %s201
      %p213 = scmp.eq.s32.totalorder %s44, 1
      %p214 = por %p212, %p213
      %p216 = scmp.ne.s32.totalorder %s201, %s215
      %p217 = scmp.eq.s32.totalorder %s44, 0
      %p218 = por %p216, %p217
      %s220 = sadd.s32 %s219, 1
      %p223 = scmp.eq.s32.totalorder %s38, 1
      %p224 = scmp.ne.s32.totalorder %s219, %s221
      %p225 = scmp.eq.s32.totalorder %s38, 0
      %p226 = por %p224, %p225
      %p227 = scmp.ne.s32.totalorder %s219, %s221
      %p228 = scmp.eq.s32.totalorder %s43, 1
      %p229 = por %p227, %p228
      %p230 = scmp.ne.s32.totalorder %s221, %s222
      %p231 = scmp.eq.s32.totalorder %s43, 0
      %p232 = por %p230, %p231
      %p233 = scmp.ne.s32.totalorder %s221, %s222
      %p234 = scmp.eq.s32.totalorder %s44, 1
      %p235 = por %p233, %p234
      %p237 = scmp.ne.s32.totalorder %s222, %s236
      %p238 = scmp.eq.s32.totalorder %s44, 0
      %p239 = por %p237, %p238
      %s241 = sadd.s32 %s240, 1
      %p244 = scmp.eq.s32.totalorder %s38, 1
      %p245 = scmp.ne.s32.totalorder %s240, %s242
      %p246 = scmp.eq.s32.totalorder %s38, 0
      %p247 = por %p245, %p246
      %p248 = scmp.ne.s32.totalorder %s240, %s242
      %p249 = scmp.eq.s32.totalorder %s43, 1
      %p250 = por %p248, %p249
      %p251 = scmp.ne.s32.totalorder %s242, %s243
      %p252 = scmp.eq.s32.totalorder %s43, 0
      %p253 = por %p251, %p252
      %p254 = scmp.ne.s32.totalorder %s242, %s243
      %p255 = scmp.eq.s32.totalorder %s44, 1
      %p256 = por %p254, %p255
      %p258 = scmp.ne.s32.totalorder %s243, %s257
      %p259 = scmp.eq.s32.totalorder %s44, 0
      %p260 = por %p258, %p259
      %s262 = sadd.s32 %s261, 1
      %p265 = scmp.eq.s32.totalorder %s38, 1
      %p266 = scmp.ne.s32.totalorder %s261, %s263
      %p267 = scmp.eq.s32.totalorder %s38, 0
      %p268 = por %p266, %p267
      %p269 = scmp.ne.s32.totalorder %s261, %s263
      %p270 = scmp.eq.s32.totalorder %s43, 1
      %p271 = por %p269, %p270
      %p272 = scmp.ne.s32.totalorder %s263, %s264
      %p273 = scmp.eq.s32.totalorder %s43, 0
      %p274 = por %p272, %p273
      %p275 = scmp.ne.s32.totalorder %s263, %s264
      %p276 = scmp.eq.s32.totalorder %s44, 1
      %p277 = por %p275, %p276
      %p279 = scmp.ne.s32.totalorder %s264, %s278
      %p280 = scmp.eq.s32.totalorder %s44, 0
      %p281 = por %p279, %p280
      %s283 = sadd.s32 %s282, 1
      %p286 = scmp.eq.s32.totalorder %s38, 1
      %p287 = scmp.ne.s32.totalorder %s282, %s284
      %p288 = scmp.eq.s32.totalorder %s38, 0
      %p289 = por %p287, %p288
      %p290 = scmp.ne.s32.totalorder %s282, %s284
      %p291 = scmp.eq.s32.totalorder %s43, 1
      %p292 = por %p290, %p291
      %p293 = scmp.ne.s32.totalorder %s284, %s285
      %p294 = scmp.eq.s32.totalorder %s43, 0
      %p295 = por %p293, %p294
      %p296 = scmp.ne.s32.totalorder %s284, %s285
      %p297 = scmp.eq.s32.totalorder %s44, 1
      %p298 = por %p296, %p297
      %p300 = scmp.ne.s32.totalorder %s285, %s299
      %p301 = scmp.eq.s32.totalorder %s44, 0
      %p302 = por %p300, %p301
      %s304 = sadd.s32 %s303, 1
      %p307 = scmp.eq.s32.totalorder %s38, 1
      %p308 = scmp.ne.s32.totalorder %s303, %s305
      %p309 = scmp.eq.s32.totalorder %s38, 0
      %p310 = por %p308, %p309
      %p311 = scmp.ne.s32.totalorder %s303, %s305
      %p312 = scmp.eq.s32.totalorder %s43, 1
      %p313 = por %p311, %p312
      %p314 = scmp.ne.s32.totalorder %s305, %s306
      %p315 = scmp.eq.s32.totalorder %s43, 0
      %p316 = por %p314, %p315
      %p317 = scmp.ne.s32.totalorder %s305, %s306
      %p318 = scmp.eq.s32.totalorder %s44, 1
      %p319 = por %p317, %p318
      %p321 = scmp.ne.s32.totalorder %s306, %s320
      %p322 = scmp.eq.s32.totalorder %s44, 0
      %p323 = por %p321, %p322
      %s325 = sadd.s32 %s324, 1
      %p328 = scmp.eq.s32.totalorder %s38, 1
      %p329 = scmp.ne.s32.totalorder %s324, %s326
      %p330 = scmp.eq.s32.totalorder %s38, 0
      %p331 = por %p329, %p330
      %p332 = scmp.ne.s32.totalorder %s324, %s326
      %p333 = scmp.eq.s32.totalorder %s43, 1
      %p334 = por %p332, %p333
      %p335 = scmp.ne.s32.totalorder %s326, %s327
      %p336 = scmp.eq.s32.totalorder %s43, 0
      %p337 = por %p335, %p336
      %p338 = scmp.ne.s32.totalorder %s326, %s327
      %p339 = scmp.eq.s32.totalorder %s44, 1
      %p340 = por %p338, %p339
      %p342 = scmp.ne.s32.totalorder %s327, %s341
      %p343 = scmp.eq.s32.totalorder %s44, 0
      %p344 = por %p342, %p343
      %s345 = ssub.s32 %s38, %s45
      %p346 = scmp.eq.s32.totalorder %s345, 0
      %s348 = sadd.s32 %s347, 1
      %s349 = scalar_select %p346, %s347, %s348
      %p352 = pneg %p346
      %p353 = scmp.eq.s32.totalorder %s38, 1
      %p354 = por %p352, %p353
      %p355 = scmp.ne.s32.totalorder %s347, %s350
      %p356 = scmp.eq.s32.totalorder %s38, 0
      %p357 = por %p355, %p356
      %p358 = scmp.ne.s32.totalorder %s347, %s350
      %p359 = scmp.eq.s32.totalorder %s43, 1
      %p360 = por %p358, %p359
      %p361 = scmp.ne.s32.totalorder %s350, %s351
      %p362 = scmp.eq.s32.totalorder %s43, 0
      %p363 = por %p361, %p362
      %p364 = scmp.ne.s32.totalorder %s350, %s351
      %p365 = scmp.eq.s32.totalorder %s44, 1
      %p366 = por %p364, %p365
      %p368 = scmp.ne.s32.totalorder %s351, %s367
      %p369 = scmp.eq.s32.totalorder %s44, 0
      %p370 = por %p368, %p369
      %s371 = ssub.s32 %s38, %s45
      %p372 = scmp.eq.s32.totalorder %s371, 0
      %s374 = sadd.s32 %s373, 1
      %s375 = scalar_select %p372, %s373, %s374
      %p378 = pneg %p372
      %p379 = scmp.eq.s32.totalorder %s38, 1
      %p380 = por %p378, %p379
      %p381 = scmp.ne.s32.totalorder %s373, %s376
      %p382 = scmp.eq.s32.totalorder %s38, 0
      %p383 = por %p381, %p382
      %p384 = scmp.ne.s32.totalorder %s373, %s376
      %p385 = scmp.eq.s32.totalorder %s43, 1
      %p386 = por %p384, %p385
      %p387 = scmp.ne.s32.totalorder %s376, %s377
      %p388 = scmp.eq.s32.totalorder %s43, 0
      %p389 = por %p387, %p388
      %p390 = scmp.ne.s32.totalorder %s376, %s377
      %p391 = scmp.eq.s32.totalorder %s44, 1
      %p392 = por %p390, %p391
      %p394 = scmp.ne.s32.totalorder %s377, %s393
      %p395 = scmp.eq.s32.totalorder %s44, 0
      %p396 = por %p394, %p395
      %p397 = scmp.le.s32.totalorder 1, %s38
      %p398 = scmp.lt.s32.totalorder %s38, 3
      %p399 = pnand %p397, %p398
      %p400 = pneg %p399
      // Predicated region
      $region9: #{spectral_self_attention.2} parent=5 // pred_check
        _
      $region10: #{spectral_self_attention.2} parent=5 // pred_check_branch
        %402 = sbr.rel (%p399) target = $region12
      $region11: #{spectral_self_attention.2} parent=5 // pred_region
        %s403 = ssub.s32 %s38, 1
        // Predicated region
        $region13: #{spectral_self_attention.2} parent=11 // pred_check
          %p404 = pneg %p85
        $region14: #{spectral_self_attention.2} parent=11 // pred_check_branch
          %406 = sbr.rel (%p404) target = $region16
        $region15: #{spectral_self_attention.2} parent=11 // pred_region
          %s408 = ssub.s32 256, 256
          %409 = vsyncadd [#allocation6], %s408
          %s410 = sshll.u32 [#allocation5], 4
          %s411 = int_to_ptr.vmem [resolvable:$true] %s410
          %416 = dma.hbm_to_vmem [thread:$0]  %s1, 256, %s411, [#allocation6], 128, 128, 8
        $region16: #{spectral_self_attention.2} parent=11 // pred_fallthru
          _
        // Predicated region
        $region17: #{spectral_self_attention.2} parent=11 // pred_check
          %p417 = pneg %p106
        $region18: #{spectral_self_attention.2} parent=11 // pred_check_branch
          %419 = sbr.rel (%p417) target = $region20
        $region19: #{spectral_self_attention.2} parent=11 // pred_region
          %s421 = ssub.s32 256, 256
          %422 = vsyncadd [#allocation6], %s421
          %s423 = sshll.u32 [#allocation7], 4
          %s424 = int_to_ptr.vmem [resolvable:$true] %s423
          %429 = dma.hbm_to_vmem [thread:$0]  %s2, 256, %s424, [#allocation6], 128, 128, 8
        $region20: #{spectral_self_attention.2} parent=11 // pred_fallthru
          _
        // Predicated region
        $region21: #{spectral_self_attention.2} parent=11 // pred_check
          %p430 = pneg %p127
        $region22: #{spectral_self_attention.2} parent=11 // pred_check_branch
          %432 = sbr.rel (%p430) target = $region24
        $region23: #{spectral_self_attention.2} parent=11 // pred_region
          %s434 = ssub.s32 384, 384
          %435 = vsyncadd [#allocation9], %s434
          %s436 = sshll.u32 [#allocation8], 4
          %s437 = int_to_ptr.vmem [resolvable:$true] %s436
          %442 = dma.hbm_to_vmem [thread:$0]  %s3, 384, %s437, [#allocation9], 64, 64, 4
        $region24: #{spectral_self_attention.2} parent=11 // pred_fallthru
          _
        // Predicated region
        $region25: #{spectral_self_attention.2} parent=11 // pred_check
          %p443 = pneg %p148
        $region26: #{spectral_self_attention.2} parent=11 // pred_check_branch
          %445 = sbr.rel (%p443) target = $region28
        $region27: #{spectral_self_attention.2} parent=11 // pred_region
          %s447 = ssub.s32 768, 768
          %448 = vsyncadd [#allocation9], %s447
          %s449 = sshll.u32 [#allocation10], 4
          %s450 = int_to_ptr.vmem [resolvable:$true] %s449
          %455 = dma.hbm_to_vmem [thread:$0]  %s4, 768, %s450, [#allocation9], 128, 128, 8
        $region28: #{spectral_self_attention.2} parent=11 // pred_fallthru
          _
        // Predicated region
        $region29: #{spectral_self_attention.2} parent=11 // pred_check
          %p456 = pneg %p169
        $region30: #{spectral_self_attention.2} parent=11 // pred_check_branch
          %458 = sbr.rel (%p456) target = $region32
        $region31: #{spectral_self_attention.2} parent=11 // pred_region
          %s460 = ssub.s32 128, 128
          %461 = vsyncadd [#allocation12], %s460
          %s462 = sshll.u32 [#allocation11], 4
          %s463 = int_to_ptr.vmem [resolvable:$true] %s462
          %468 = dma.hbm_to_vmem [thread:$0]  %s5, 128, %s463, [#allocation12], 64, 64, 4
        $region32: #{spectral_self_attention.2} parent=11 // pred_fallthru
          _
        // Predicated region
        $region33: #{spectral_self_attention.2} parent=11 // pred_check
          %p469 = pneg %p190
        $region34: #{spectral_self_attention.2} parent=11 // pred_check_branch
          %471 = sbr.rel (%p469) target = $region36
        $region35: #{spectral_self_attention.2} parent=11 // pred_region
          %s473 = ssub.s32 256, 256
          %474 = vsyncadd [#allocation12], %s473
          %s475 = sshll.u32 [#allocation13], 4
          %s476 = int_to_ptr.vmem [resolvable:$true] %s475
          %481 = dma.hbm_to_vmem [thread:$0]  %s6, 256, %s476, [#allocation12], 128, 128, 8
        $region36: #{spectral_self_attention.2} parent=11 // pred_fallthru
          _
        // Predicated region
        $region37: #{spectral_self_attention.2} parent=11 // pred_check
          %p482 = pneg %p211
        $region38: #{spectral_self_attention.2} parent=11 // pred_check_branch
          %484 = sbr.rel (%p482) target = $region40
        $region39: #{spectral_self_attention.2} parent=11 // pred_region
          %s486 = ssub.s32 512, 512
          %487 = vsyncadd [#allocation15], %s486
          %s488 = sshll.u32 [#allocation14], 4
          %s489 = int_to_ptr.vmem [resolvable:$true] %s488
          %494 = dma.hbm_to_vmem [thread:$0]  %s7, 512, %s489, [#allocation15], 64, 64, 4
        $region40: #{spectral_self_attention.2} parent=11 // pred_fallthru
          _
        // Predicated region
        $region41: #{spectral_self_attention.2} parent=11 // pred_check
          %p495 = pneg %p232
        $region42: #{spectral_self_attention.2} parent=11 // pred_check_branch
          %497 = sbr.rel (%p495) target = $region44
        $region43: #{spectral_self_attention.2} parent=11 // pred_region
          %s499 = ssub.s32 1024, 1024
          %500 = vsyncadd [#allocation15], %s499
          %s501 = sshll.u32 [#allocation16], 4
          %s502 = int_to_ptr.vmem [resolvable:$true] %s501
          %507 = dma.hbm_to_vmem [thread:$0]  %s8, 1024, %s502, [#allocation15], 128, 128, 8
        $region44: #{spectral_self_attention.2} parent=11 // pred_fallthru
          _
        // Predicated region
        $region45: #{spectral_self_attention.2} parent=11 // pred_check
          %p508 = pneg %p253
        $region46: #{spectral_self_attention.2} parent=11 // pred_check_branch
          %510 = sbr.rel (%p508) target = $region48
        $region47: #{spectral_self_attention.2} parent=11 // pred_region
          %s512 = ssub.s32 128, 128
          %513 = vsyncadd [#allocation18], %s512
          %s514 = sshll.u32 [#allocation17], 4
          %s515 = int_to_ptr.vmem [resolvable:$true] %s514
          %520 = dma.hbm_to_vmem [thread:$0]  %s9, 128, %s515, [#allocation18], 64, 64, 4
        $region48: #{spectral_self_attention.2} parent=11 // pred_fallthru
          _
        // Predicated region
        $region49: #{spectral_self_attention.2} parent=11 // pred_check
          %p521 = pneg %p274
        $region50: #{spectral_self_attention.2} parent=11 // pred_check_branch
          %523 = sbr.rel (%p521) target = $region52
        $region51: #{spectral_self_attention.2} parent=11 // pred_region
          %s525 = ssub.s32 256, 256
          %526 = vsyncadd [#allocation18], %s525
          %s527 = sshll.u32 [#allocation19], 4
          %s528 = int_to_ptr.vmem [resolvable:$true] %s527
          %533 = dma.hbm_to_vmem [thread:$0]  %s10, 256, %s528, [#allocation18], 128, 128, 8
        $region52: #{spectral_self_attention.2} parent=11 // pred_fallthru
          _
        // Predicated region
        $region53: #{spectral_self_attention.2} parent=11 // pred_check
          %p534 = pneg %p295
        $region54: #{spectral_self_attention.2} parent=11 // pred_check_branch
          %536 = sbr.rel (%p534) target = $region56
        $region55: #{spectral_self_attention.2} parent=11 // pred_region
          %s538 = ssub.s32 256, 256
          %539 = vsyncadd [#allocation21], %s538
          %s540 = sshll.u32 [#allocation20], 4
          %s541 = int_to_ptr.vmem [resolvable:$true] %s540
          %546 = dma.hbm_to_vmem [thread:$0]  %s11, 256, %s541, [#allocation21], 128, 128, 8
        $region56: #{spectral_self_attention.2} parent=11 // pred_fallthru
          _
        // Predicated region
        $region57: #{spectral_self_attention.2} parent=11 // pred_check
          %p547 = pneg %p316
        $region58: #{spectral_self_attention.2} parent=11 // pred_check_branch
          %549 = sbr.rel (%p547) target = $region60
        $region59: #{spectral_self_attention.2} parent=11 // pred_region
          %s551 = ssub.s32 256, 256
          %552 = vsyncadd [#allocation21], %s551
          %s553 = sshll.u32 [#allocation22], 4
          %s554 = int_to_ptr.vmem [resolvable:$true] %s553
          %559 = dma.hbm_to_vmem [thread:$0]  %s12, 256, %s554, [#allocation21], 128, 128, 8
        $region60: #{spectral_self_attention.2} parent=11 // pred_fallthru
          _
        // Predicated region
        $region61: #{spectral_self_attention.2} parent=11 // pred_check
          %p560 = pneg %p337
        $region62: #{spectral_self_attention.2} parent=11 // pred_check_branch
          %562 = sbr.rel (%p560) target = $region64
        $region63: #{spectral_self_attention.2} parent=11 // pred_region
          %s564 = ssub.s32 512, 512
          %565 = vsyncadd [#allocation24], %s564
          %s566 = sshll.u32 [#allocation23], 4
          %s567 = int_to_ptr.vmem [resolvable:$true] %s566
          %572 = dma.hbm_to_vmem [thread:$0]  %s13, 512, %s567, [#allocation24], 64, 64, 4
        $region64: #{spectral_self_attention.2} parent=11 // pred_fallthru
          _
      $region12: #{spectral_self_attention.2} parent=5 // pred_fallthru
        _
      %p573 = scmp.lt.s32.totalorder %s38, 2
      // Predicated region
      $region65: #{spectral_self_attention.2} parent=5 // pred_check
        %p574 = pneg %p573
      $region66: #{spectral_self_attention.2} parent=5 // pred_check_branch
        %576 = sbr.rel (%p574) target = $region68
      $region67: #{spectral_self_attention.2} parent=5 // pred_region
        // Predicated region
        $region69: #{spectral_self_attention.2} parent=67 // pred_check
          %p577 = pneg %p58
        $region70: #{spectral_self_attention.2} parent=67 // pred_check_branch
          %579 = sbr.rel (%p577) target = $region72
        $region71: #{spectral_self_attention.2} parent=67 // pred_region
          %s580 = sand.u32 %s48, 1
          %s581 = scalar_lea.sflag [#allocation3], %s580
          %s582 = sand.u32 %s48, 1
          %s583 = smul.addr %s582, 32
          %s584 = scalar_lea.vmem [#allocation2], %s583
          %s586 = ssub.s32 512, 512
          %587 = vsyncadd %s581, %s586
          %s588 = smul.addr %s38, 128
          %s589 = scalar_lea.hbm %s0, %s588
          %s590 = sshll.u32 %s584, 4
          %s591 = int_to_ptr.vmem [resolvable:$true] %s590
          %596 = dma.hbm_to_vmem [thread:$0]  %s589, 512, %s591, %s581, 256, 128, 8
        $region72: #{spectral_self_attention.2} parent=67 // pred_fallthru
          _
      $region68: #{spectral_self_attention.2} parent=5 // pred_fallthru
        _
      %p597 = scmp.le.s32.totalorder 1, %s38
      %p598 = scmp.lt.s32.totalorder %s38, 3
      %p599 = pnand %p597, %p598
      %p600 = pneg %p599
      // Predicated region
      $region73: #{spectral_self_attention.2} parent=5 // pred_check
        _
      $region74: #{spectral_self_attention.2} parent=5 // pred_check_branch
        %602 = sbr.rel (%p599) target = $region76
      $region75: #{spectral_self_attention.2} parent=5 // pred_region
        %s603 = ssub.s32 %s38, 1
        %s604 = sand.u32 %s51, 1
        %s605 = scalar_lea.sflag [#allocation3], %s604
        %s606 = sand.u32 %s51, 1
        %s607 = smul.addr %s606, 32
        %s608 = scalar_lea.vmem [#allocation2], %s607
        // Predicated region
        $region77: #{spectral_self_attention.2} parent=75 // pred_check
          %p609 = pneg %p64
        $region78: #{spectral_self_attention.2} parent=75 // pred_check_branch
          %611 = sbr.rel (%p609) target = $region80
        $region79: #{spectral_self_attention.2} parent=75 // pred_region
          %612 = dma.done %s605, 512
        $region80: #{spectral_self_attention.2} parent=75 // pred_fallthru
          _
        // Predicated region
        $region81: #{spectral_self_attention.2} parent=75 // pred_check
          %p613 = pneg %p85
        $region82: #{spectral_self_attention.2} parent=75 // pred_check_branch
          %615 = sbr.rel (%p613) target = $region84
        $region83: #{spectral_self_attention.2} parent=75 // pred_region
          %616 = dma.done [#allocation6], 256
        $region84: #{spectral_self_attention.2} parent=75 // pred_fallthru
          _
        // Predicated region
        $region85: #{spectral_self_attention.2} parent=75 // pred_check
          %p617 = pneg %p106
        $region86: #{spectral_self_attention.2} parent=75 // pred_check_branch
          %619 = sbr.rel (%p617) target = $region88
        $region87: #{spectral_self_attention.2} parent=75 // pred_region
          %620 = dma.done [#allocation6], 256
        $region88: #{spectral_self_attention.2} parent=75 // pred_fallthru
          _
        // Predicated region
        $region89: #{spectral_self_attention.2} parent=75 // pred_check
          %p621 = pneg %p127
        $region90: #{spectral_self_attention.2} parent=75 // pred_check_branch
          %623 = sbr.rel (%p621) target = $region92
        $region91: #{spectral_self_attention.2} parent=75 // pred_region
          %624 = dma.done [#allocation9], 384
        $region92: #{spectral_self_attention.2} parent=75 // pred_fallthru
          _
        // Predicated region
        $region93: #{spectral_self_attention.2} parent=75 // pred_check
          %p625 = pneg %p148
        $region94: #{spectral_self_attention.2} parent=75 // pred_check_branch
          %627 = sbr.rel (%p625) target = $region96
        $region95: #{spectral_self_attention.2} parent=75 // pred_region
          %628 = dma.done [#allocation9], 768
        $region96: #{spectral_self_attention.2} parent=75 // pred_fallthru
          _
        // Predicated region
        $region97: #{spectral_self_attention.2} parent=75 // pred_check
          %p629 = pneg %p169
        $region98: #{spectral_self_attention.2} parent=75 // pred_check_branch
          %631 = sbr.rel (%p629) target = $region100
        $region99: #{spectral_self_attention.2} parent=75 // pred_region
          %632 = dma.done [#allocation12], 128
        $region100: #{spectral_self_attention.2} parent=75 // pred_fallthru
          _
        // Predicated region
        $region101: #{spectral_self_attention.2} parent=75 // pred_check
          %p633 = pneg %p190
        $region102: #{spectral_self_attention.2} parent=75 // pred_check_branch
          %635 = sbr.rel (%p633) target = $region104
        $region103: #{spectral_self_attention.2} parent=75 // pred_region
          %636 = dma.done [#allocation12], 256
        $region104: #{spectral_self_attention.2} parent=75 // pred_fallthru
          _
        // Predicated region
        $region105: #{spectral_self_attention.2} parent=75 // pred_check
          %p637 = pneg %p211
        $region106: #{spectral_self_attention.2} parent=75 // pred_check_branch
          %639 = sbr.rel (%p637) target = $region108
        $region107: #{spectral_self_attention.2} parent=75 // pred_region
          %640 = dma.done [#allocation15], 512
        $region108: #{spectral_self_attention.2} parent=75 // pred_fallthru
          _
        // Predicated region
        $region109: #{spectral_self_attention.2} parent=75 // pred_check
          %p641 = pneg %p232
        $region110: #{spectral_self_attention.2} parent=75 // pred_check_branch
          %643 = sbr.rel (%p641) target = $region112
        $region111: #{spectral_self_attention.2} parent=75 // pred_region
          %644 = dma.done [#allocation15], 1024
        $region112: #{spectral_self_attention.2} parent=75 // pred_fallthru
          _
        // Predicated region
        $region113: #{spectral_self_attention.2} parent=75 // pred_check
          %p645 = pneg %p253
        $region114: #{spectral_self_attention.2} parent=75 // pred_check_branch
          %647 = sbr.rel (%p645) target = $region116
        $region115: #{spectral_self_attention.2} parent=75 // pred_region
          %648 = dma.done [#allocation18], 128
        $region116: #{spectral_self_attention.2} parent=75 // pred_fallthru
          _
        // Predicated region
        $region117: #{spectral_self_attention.2} parent=75 // pred_check
          %p649 = pneg %p274
        $region118: #{spectral_self_attention.2} parent=75 // pred_check_branch
          %651 = sbr.rel (%p649) target = $region120
        $region119: #{spectral_self_attention.2} parent=75 // pred_region
          %652 = dma.done [#allocation18], 256
        $region120: #{spectral_self_attention.2} parent=75 // pred_fallthru
          _
        // Predicated region
        $region121: #{spectral_self_attention.2} parent=75 // pred_check
          %p653 = pneg %p295
        $region122: #{spectral_self_attention.2} parent=75 // pred_check_branch
          %655 = sbr.rel (%p653) target = $region124
        $region123: #{spectral_self_attention.2} parent=75 // pred_region
          %656 = dma.done [#allocation21], 256
        $region124: #{spectral_self_attention.2} parent=75 // pred_fallthru
          _
        // Predicated region
        $region125: #{spectral_self_attention.2} parent=75 // pred_check
          %p657 = pneg %p316
        $region126: #{spectral_self_attention.2} parent=75 // pred_check_branch
          %659 = sbr.rel (%p657) target = $region128
        $region127: #{spectral_self_attention.2} parent=75 // pred_region
          %660 = dma.done [#allocation21], 256
        $region128: #{spectral_self_attention.2} parent=75 // pred_fallthru
          _
        // Predicated region
        $region129: #{spectral_self_attention.2} parent=75 // pred_check
          %p661 = pneg %p337
        $region130: #{spectral_self_attention.2} parent=75 // pred_check_branch
          %663 = sbr.rel (%p661) target = $region132
        $region131: #{spectral_self_attention.2} parent=75 // pred_region
          %664 = dma.done [#allocation24], 512
        $region132: #{spectral_self_attention.2} parent=75 // pred_fallthru
          _
        %s665 = sand.u32 %s51, 1
        %s666 = scalar_lea.sflag [#allocation3], %s665
        %s667 = sand.u32 %s51, 1
        %s668 = smul.addr %s667, 32
        %s669 = scalar_lea.vmem [#allocation2], %s668
        %p670 = pneg %p64
        %p671 = pneg %p61
        %p672 = pneg %p85
        %p673 = pneg %p82
        %p674 = pneg %p106
        %p675 = pneg %p103
        %p676 = pneg %p127
        %p677 = pneg %p124
        %p678 = pneg %p148
        %p679 = pneg %p145
        %p680 = pneg %p169
        %p681 = pneg %p166
        %p682 = pneg %p190
        %p683 = pneg %p187
        %p684 = pneg %p211
        %p685 = pneg %p208
        %p686 = pneg %p232
        %p687 = pneg %p229
        %p688 = pneg %p253
        %p689 = pneg %p250
        %p690 = pneg %p274
        %p691 = pneg %p271
        %p692 = pneg %p295
        %p693 = pneg %p292
        %p694 = pneg %p316
        %p695 = pneg %p313
        %p696 = pneg %p337
        %p697 = pneg %p334
        %p698 = pneg %p363
        %p699 = pneg %p360
        %s700 = sand.u32 %s350, 1
        %s701 = scalar_lea.sflag [#allocation4], %s700
        %s702 = sand.u32 %s350, 1
        %s703 = smul.addr %s702, 64
        %s704 = scalar_lea.vmem [#allocation25], %s703
        %p705 = pneg %p389
        %p706 = pneg %p386
        %s707 = sand.u32 %s376, 1
        %s708 = scalar_lea.sflag [#allocation27], %s707
        %s709 = sand.u32 %s376, 1
        %s710 = smul.addr %s709, 64
        %s711 = scalar_lea.vmem [#allocation26], %s710
        %v713 = vld [vmem:[#allocation5] sm:$0xff]
        %v714 = vld [vmem:[#allocation5 + $0x8] sm:$0xff]
        %v715 = vld [vmem:[#allocation7] sm:$0xff]
        %v716 = vld [vmem:[#allocation7 + $0x8] sm:$0xff]
        %v717 = vld [vmem:[#allocation20] sm:$0xff]
        %v718 = vld [vmem:[#allocation20 + $0x8] sm:$0xff]
        %v719 = vld [vmem:[#allocation22] sm:$0xff]
        %v720 = vld [vmem:[#allocation22 + $0x8] sm:$0xff]
        %v721 = vld [vmem:[#allocation8] sm:$0xf]
        %v722 = vld [vmem:[#allocation8 + $0x4] sm:$0xf]
        %v723 = vld [vmem:[#allocation8 + $0x8] sm:$0xf]
        %v724 = vld [vmem:[#allocation8 + $0xc] sm:$0xf]
        %v725 = vld [vmem:[#allocation8 + $0x10] sm:$0xf]
        %v726 = vld [vmem:[#allocation8 + $0x14] sm:$0xf]
        %v727 = vld [vmem:[#allocation10] sm:$0xff]
        %v728 = vld [vmem:[#allocation10 + $0x8] sm:$0xff]
        %v729 = vld [vmem:[#allocation10 + $0x10] sm:$0xff]
        %v730 = vld [vmem:[#allocation10 + $0x18] sm:$0xff]
        %v731 = vld [vmem:[#allocation10 + $0x20] sm:$0xff]
        %v732 = vld [vmem:[#allocation10 + $0x28] sm:$0xff]
        %v733 = vld [vmem:[#allocation11] sm:$0xf]
        %v734 = vld [vmem:[#allocation11 + $0x4] sm:$0xf]
        %v735 = vld [vmem:[#allocation13] sm:$0xff]
        %v736 = vld [vmem:[#allocation13 + $0x8] sm:$0xff]
        %v737 = vld [vmem:[#allocation14] sm:$0xf]
        %v738 = vld [vmem:[#allocation14 + $0x4] sm:$0xf]
        %v739 = vld [vmem:[#allocation14 + $0x8] sm:$0xf]
        %v740 = vld [vmem:[#allocation14 + $0xc] sm:$0xf]
        %v741 = vld [vmem:[#allocation14 + $0x10] sm:$0xf]
        %v742 = vld [vmem:[#allocation14 + $0x14] sm:$0xf]
        %v743 = vld [vmem:[#allocation14 + $0x18] sm:$0xf]
        %v744 = vld [vmem:[#allocation14 + $0x1c] sm:$0xf]
        %v745 = vld [vmem:[#allocation16] sm:$0xff]
        %v746 = vld [vmem:[#allocation16 + $0x8] sm:$0xff]
        %v747 = vld [vmem:[#allocation16 + $0x10] sm:$0xff]
        %v748 = vld [vmem:[#allocation16 + $0x18] sm:$0xff]
        %v749 = vld [vmem:[#allocation16 + $0x20] sm:$0xff]
        %v750 = vld [vmem:[#allocation16 + $0x28] sm:$0xff]
        %v751 = vld [vmem:[#allocation16 + $0x30] sm:$0xff]
        %v752 = vld [vmem:[#allocation16 + $0x38] sm:$0xff]
        %v753 = vld [vmem:[#allocation17] sm:$0xf]
        %v754 = vld [vmem:[#allocation17 + $0x4] sm:$0xf]
        %v755 = vld [vmem:[#allocation19] sm:$0xff]
        %v756 = vld [vmem:[#allocation19 + $0x8] sm:$0xff]
        %v757 = vld [vmem:[#allocation23] sm:$0xf]
        %v758 = vld [vmem:[#allocation23 + $0x4] sm:$0xf]
        %v759 = vld [vmem:[#allocation23 + $0x8] sm:$0xf]
        %v760 = vld [vmem:[#allocation23 + $0xc] sm:$0xf]
        %v761 = vld [vmem:[#allocation23 + $0x10] sm:$0xf]
        %v762 = vld [vmem:[#allocation23 + $0x14] sm:$0xf]
        %v763 = vld [vmem:[#allocation23 + $0x18] sm:$0xf]
        %v764 = vld [vmem:[#allocation23 + $0x1c] sm:$0xf]
        %v765 = vld [vmem:[%s608] sm:$0xff]
        %v766 = vld [vmem:[%s608 + $0x8] sm:$0xff]
        %v767 = vadd.f32 %v765, %v766
        %v768 = vrot.slane %v767, 4
        %v769 = vadd.f32 %v767, %v768
        %v770 = vrot.slane %v769, 2
        %v771 = vadd.f32 %v769, %v770
        %v772 = vrot.slane %v771, 1
        %v773 = vadd.f32 %v771, %v772
        %v774 = vrcp.pop 16.0
        %v775 = vmul.f32 %v773, %v774
        %v776 = vsub.f32 %v765, %v775
        %v777 = vsub.f32 %v766, %v775
        %v778 = vmul.f32 %v776, %v776
        %v779 = vmul.f32 %v777, %v777
        %v780 = vadd.f32 %v778, %v779
        %v781 = vrot.slane %v780, 4
        %v782 = vadd.f32 %v780, %v781
        %v783 = vrot.slane %v782, 2
        %v784 = vadd.f32 %v782, %v783
        %v785 = vrot.slane %v784, 1
        %v786 = vadd.f32 %v784, %v785
        %v787 = vmul.f32 %v786, %v774
        %v788 = vadd.f32 %v787, 1e-05
        %v789 = vrsqrt.pop %v788
        %v790 = vmul.f32 %v776, %v789
        %v791 = vmul.f32 %v777, %v789
        %793 = vset.pattern.permute.xlu0 0
        %794 = vperm.xlu0 %793, %v713
        %v795 = vpop.permute.xlu0 %794
        %798 = vset.pattern.permute.xlu0 0
        %799 = vperm.xlu0 %798, %v714
        %v800 = vpop.permute.xlu0 %799
        %v802 = vmul.f32 %v790, %v795
        %v803 = vmul.f32 %v791, %v800
        %805 = vset.pattern.permute.xlu0 0
        %806 = vperm.xlu0 %805, %v715
        %v807 = vpop.permute.xlu0 %806
        %810 = vset.pattern.permute.xlu0 0
        %811 = vperm.xlu0 %810, %v716
        %v812 = vpop.permute.xlu0 %811
        %v814 = vadd.f32 %v802, %v807
        %v815 = vadd.f32 %v803, %v812
        %v816 = vpack.c.bf16 %v815, %v814
        %818 = vset.pattern.permute.xlu0 0
        %819 = vperm.xlu0 %818, %v727
        %v820 = vpop.permute.xlu0 %819
        %823 = vset.pattern.permute.xlu0 0
        %824 = vperm.xlu0 %823, %v728
        %v825 = vpop.permute.xlu0 %824
        %828 = vset.pattern.permute.xlu0 0
        %829 = vperm.xlu0 %828, %v729
        %v830 = vpop.permute.xlu0 %829
        %833 = vset.pattern.permute.xlu0 0
        %834 = vperm.xlu0 %833, %v730
        %v835 = vpop.permute.xlu0 %834
        %838 = vset.pattern.permute.xlu0 0
        %839 = vperm.xlu0 %838, %v731
        %v840 = vpop.permute.xlu0 %839
        %843 = vset.pattern.permute.xlu0 0
        %844 = vperm.xlu0 %843, %v732
        %v845 = vpop.permute.xlu0 %844
        %v853 = vunpack.c.l.b16 %v721
        %v854 = vunpack.c.l.b16 %v722
        %v855 = vunpack.c.l.b16 %v723
        %v856 = vunpack.c.l.b16 %v724
        %v857 = vunpack.c.l.b16 %v725
        %v858 = vunpack.c.l.b16 %v726
        %v859 = vpack.c.b16 %v854, %v853
        %v860 = vpack.c.b16 %v856, %v855
        %v861 = vpack.c.b16 %v858, %v857
        %vm862 = vcmask 130048
        %v864 = vsel %vm862, %v859, 0
        %v867 = vsel %vm862, %v860, 0
        %v870 = vsel %vm862, %v861, 0
        %872 = vmatprep.subr.bf16.mxu0 0
        %873 = vmatpush1.bf16.msra.mxu0 %v816
        %874 = vmatprep.subr.bf16.mxu0 0
        %875 = vmatpush1.bf16.msra.mxu0 0
        %876 = vmatprep.subr.bf16.mxu0 0
        %877 = vmatpush1.bf16.msra.mxu0 0
        %878 = vmatprep.subr.bf16.mxu0 0
        %879 = vmatpush1.bf16.msra.mxu0 0
        %880 = vmatprep.subr.bf16.mxu0 0
        %881 = vmatpush1.bf16.msra.mxu0 0
        %882 = vmatprep.subr.bf16.mxu0 0
        %883 = vmatpush1.bf16.msra.mxu0 0
        %884 = vmatprep.subr.bf16.mxu0 0
        %885 = vmatpush1.bf16.msra.mxu0 0
        %886 = vmatprep.subr.bf16.mxu0 0
        %887 = vmatpush1.bf16.msra.mxu0 0
        %888 = vmatprep.subr.bf16.mxu0 0
        %889 = vmatpush1.bf16.msra.mxu0 0
        %890 = vmatprep.subr.bf16.mxu0 0
        %891 = vmatpush1.bf16.msra.mxu0 0
        %892 = vmatprep.subr.bf16.mxu0 0
        %893 = vmatpush1.bf16.msra.mxu0 0
        %894 = vmatprep.subr.bf16.mxu0 0
        %895 = vmatpush1.bf16.msra.mxu0 0
        %896 = vmatprep.subr.bf16.mxu0 0
        %897 = vmatpush1.bf16.msra.mxu0 0
        %898 = vmatprep.subr.bf16.mxu0 0
        %899 = vmatpush1.bf16.msra.mxu0 0
        %900 = vmatprep.subr.bf16.mxu0 0
        %901 = vmatpush1.bf16.msra.mxu0 0
        %902 = vmatprep.subr.bf16.mxu0 0
        %903 = vmatpush1.bf16.msra.mxu0 0
        %904 = vmatprep.mubr.bf16.mxu0 0
        %905 = vmatmul.mubr.bf16.gmra.mrb[0].mxu0 %v864
        %v906 = vpop.f32.mrb[0].mxu0
        %v907 = vadd.f32 %v820, %v906
        %v908 = vpop.f32.mrb[0].mxu0
        %v909 = vpop.f32.mrb[0].mxu0
        %v910 = vadd.f32 %v825, %v909
        %v911 = vpop.f32.mrb[0].mxu0
        %912 = vmatprep.mubr.bf16.mxu0 0
        %913 = vmatmul.mubr.bf16.gmra.mrb[0].mxu0 %v867
        %v914 = vpop.f32.mrb[0].mxu0
        %v915 = vadd.f32 %v830, %v914
        %v916 = vpop.f32.mrb[0].mxu0
        %v917 = vpop.f32.mrb[0].mxu0
        %v918 = vadd.f32 %v835, %v917
        %v919 = vpop.f32.mrb[0].mxu0
        %920 = vmatprep.mubr.bf16.mxu0 0
        %921 = vmatmul.mubr.bf16.gmra.mrb[0].mxu0 %v870
        %v922 = vpop.f32.mrb[0].mxu0
        %v923 = vadd.f32 %v840, %v922
        %v924 = vpop.f32.mrb[0].mxu0
        %v925 = vpop.f32.mrb[0].mxu0
        %v926 = vadd.f32 %v845, %v925
        %v927 = vpop.f32.mrb[0].mxu0
        %928 = vdwg.mxu0
        %v929 = vmul.f32 %v907, 0.5
        %v930 = vmul.f32 %v910, 0.5
        %s931 = scalar_lea.vmem %s608, 16 [#allocation2]
        %v932 = vld [vmem:[%s931] sm:$0xff]
        %v933 = vld [vmem:[%s931 + $0x8] sm:$0xff]
        %v934 = vadd.f32 %v932, %v933
        %v935 = vrot.slane %v934, 4
        %v936 = vadd.f32 %v934, %v935
        %v937 = vrot.slane %v936, 2
        %v938 = vadd.f32 %v936, %v937
        %v939 = vrot.slane %v938, 1
        %v940 = vadd.f32 %v938, %v939
        %v941 = vmul.f32 %v940, %v774
        %v942 = vsub.f32 %v932, %v941
        %v943 = vsub.f32 %v933, %v941
        %v944 = vmul.f32 %v942, %v942
        %v945 = vmul.f32 %v943, %v943
        %v946 = vadd.f32 %v944, %v945
        %v947 = vrot.slane %v946, 4
        %v948 = vadd.f32 %v946, %v947
        %v949 = vrot.slane %v948, 2
        %v950 = vadd.f32 %v948, %v949
        %v951 = vrot.slane %v950, 1
        %v952 = vadd.f32 %v950, %v951
        %v953 = vmul.f32 %v952, %v774
        %v954 = vadd.f32 %v953, 1e-05
        %v955 = vrsqrt.pop %v954
        %v956 = vmul.f32 %v942, %v955
        %v957 = vmul.f32 %v943, %v955
        %v958 = vmul.f32 %v956, %v795
        %v959 = vmul.f32 %v957, %v800
        %v960 = vadd.f32 %v958, %v807
        %v961 = vadd.f32 %v959, %v812
        %v962 = vpack.c.bf16 %v961, %v960
        %963 = vmatprep.subr.bf16.mxu0 0
        %964 = vmatpush1.bf16.msra.mxu0 %v962
        %965 = vmatprep.subr.bf16.mxu0 0
        %966 = vmatpush1.bf16.msra.mxu0 0
        %967 = vmatprep.subr.bf16.mxu0 0
        %968 = vmatpush1.bf16.msra.mxu0 0
        %969 = vmatprep.subr.bf16.mxu0 0
        %970 = vmatpush1.bf16.msra.mxu0 0
        %971 = vmatprep.subr.bf16.mxu0 0
        %972 = vmatpush1.bf16.msra.mxu0 0
        %973 = vmatprep.subr.bf16.mxu0 0
        %974 = vmatpush1.bf16.msra.mxu0 0
        %975 = vmatprep.subr.bf16.mxu0 0
        %976 = vmatpush1.bf16.msra.mxu0 0
        %977 = vmatprep.subr.bf16.mxu0 0
        %978 = vmatpush1.bf16.msra.mxu0 0
        %979 = vmatprep.subr.bf16.mxu0 0
        %980 = vmatpush1.bf16.msra.mxu0 0
        %981 = vmatprep.subr.bf16.mxu0 0
        %982 = vmatpush1.bf16.msra.mxu0 0
        %983 = vmatprep.subr.bf16.mxu0 0
        %984 = vmatpush1.bf16.msra.mxu0 0
        %985 = vmatprep.subr.bf16.mxu0 0
        %986 = vmatpush1.bf16.msra.mxu0 0
        %987 = vmatprep.subr.bf16.mxu0 0
        %988 = vmatpush1.bf16.msra.mxu0 0
        %989 = vmatprep.subr.bf16.mxu0 0
        %990 = vmatpush1.bf16.msra.mxu0 0
        %991 = vmatprep.subr.bf16.mxu0 0
        %992 = vmatpush1.bf16.msra.mxu0 0
        %993 = vmatprep.subr.bf16.mxu0 0
        %994 = vmatpush1.bf16.msra.mxu0 0
        %995 = vmatprep.mubr.bf16.mxu0 0
        %996 = vmatmul.mubr.bf16.gmra.mrb[0].mxu0 %v864
        %v997 = vpop.f32.mrb[0].mxu0
        %v998 = vadd.f32 %v820, %v997
        %v999 = vpop.f32.mrb[0].mxu0
        %v1000 = vpop.f32.mrb[0].mxu0
        %v1001 = vadd.f32 %v825, %v1000
        %v1002 = vpop.f32.mrb[0].mxu0
        %1003 = vmatprep.mubr.bf16.mxu0 0
        %1004 = vmatmul.mubr.bf16.gmra.mrb[0].mxu0 %v867
        %v1005 = vpop.f32.mrb[0].mxu0
        %v1006 = vadd.f32 %v830, %v1005
        %v1007 = vpop.f32.mrb[0].mxu0
        %v1008 = vpop.f32.mrb[0].mxu0
        %v1009 = vadd.f32 %v835, %v1008
        %v1010 = vpop.f32.mrb[0].mxu0
        %1011 = vmatprep.mubr.bf16.mxu0 0
        %1012 = vmatmul.mubr.bf16.gmra.mrb[0].mxu0 %v870
        %v1013 = vpop.f32.mrb[0].mxu0
        %v1014 = vadd.f32 %v840, %v1013
        %v1015 = vpop.f32.mrb[0].mxu0
        %v1016 = vpop.f32.mrb[0].mxu0
        %v1017 = vadd.f32 %v845, %v1016
        %v1018 = vpop.f32.mrb[0].mxu0
        %1019 = vdwg.mxu0
        %v1020 = vmul.f32 %v998, 0.5
        %v1021 = vmul.f32 %v1001, 0.5
        %v1022 = vmul.f32 %v929, %v915
        %vm1023 = vcmask 1043456
        %v1024 = vsel %vm1023, %v1022, 0.0
        %v1025 = vrot.slane %v1024, 4
        %v1026 = vadd.f32 %v1024, %v1025
        %v1027 = vrot.slane %v1026, 2
        %v1028 = vadd.f32 %v1026, %v1027
        %v1029 = vrot.slane %v1028, 1
        %v1030 = vadd.f32 %v1028, %v1029
        %v1032 = vrot.slane %v1022, 4
        %v1034 = vsel %vm1023, %v1032, 0.0
        %v1035 = vrot.slane %v1034, 4
        %v1036 = vadd.f32 %v1034, %v1035
        %v1037 = vrot.slane %v1036, 2
        %v1038 = vadd.f32 %v1036, %v1037
        %v1039 = vrot.slane %v1038, 1
        %v1040 = vadd.f32 %v1038, %v1039
        %v1041 = vmul.f32 %v930, %v918
        %v1042 = vsel %vm1023, %v1041, 0.0
        %v1043 = vrot.slane %v1042, 4
        %v1044 = vadd.f32 %v1042, %v1043
        %v1045 = vrot.slane %v1044, 2
        %v1046 = vadd.f32 %v1044, %v1045
        %v1047 = vrot.slane %v1046, 1
        %v1048 = vadd.f32 %v1046, %v1047
        %v1050 = vrot.slane %v1041, 4
        %v1052 = vsel %vm1023, %v1050, 0.0
        %v1053 = vrot.slane %v1052, 4
        %v1054 = vadd.f32 %v1052, %v1053
        %v1055 = vrot.slane %v1054, 2
        %v1056 = vadd.f32 %v1054, %v1055
        %v1057 = vrot.slane %v1056, 1
        %v1058 = vadd.f32 %v1056, %v1057
        %v1059 = vmul.f32 %v929, %v1006
        %v1060 = vsel %vm1023, %v1059, 0.0
        %v1061 = vrot.slane %v1060, 4
        %v1062 = vadd.f32 %v1060, %v1061
        %v1063 = vrot.slane %v1062, 2
        %v1064 = vadd.f32 %v1062, %v1063
        %v1065 = vrot.slane %v1064, 1
        %v1066 = vadd.f32 %v1064, %v1065
        %v1068 = vrot.slane %v1059, 4
        %v1070 = vsel %vm1023, %v1068, 0.0
        %v1071 = vrot.slane %v1070, 4
        %v1072 = vadd.f32 %v1070, %v1071
        %v1073 = vrot.slane %v1072, 2
        %v1074 = vadd.f32 %v1072, %v1073
        %v1075 = vrot.slane %v1074, 1
        %v1076 = vadd.f32 %v1074, %v1075
        %v1077 = vmul.f32 %v930, %v1009
        %v1078 = vsel %vm1023, %v1077, 0.0
        %v1079 = vrot.slane %v1078, 4
        %v1080 = vadd.f32 %v1078, %v1079
        %v1081 = vrot.slane %v1080, 2
        %v1082 = vadd.f32 %v1080, %v1081
        %v1083 = vrot.slane %v1082, 1
        %v1084 = vadd.f32 %v1082, %v1083
        %v1086 = vrot.slane %v1077, 4
        %v1088 = vsel %vm1023, %v1086, 0.0
        %v1089 = vrot.slane %v1088, 4
        %v1090 = vadd.f32 %v1088, %v1089
        %v1091 = vrot.slane %v1090, 2
        %v1092 = vadd.f32 %v1090, %v1091
        %v1093 = vrot.slane %v1092, 1
        %v1094 = vadd.f32 %v1092, %v1093
        %v1095 = vmax.f32 %v1030, %v1066
        %v1096 = vsub.f32 %v1030, %v1095
        %v1097 = vmul.f32 %v1096, 1.442695
        %v1098 = vpow.pop %v1097
        %v1099 = vsub.f32 %v1066, %v1095
        %v1100 = vmul.f32 %v1099, 1.442695
        %v1101 = vpow.pop %v1100
        %v1102 = vadd.f32 %v1098, %v1101
        %v1103 = vrcp.pop %v1102
        %v1104 = vmul.f32 1.0, %v1103
        %v1105 = vmul.f32 %v1098, %v1104
        %v1106 = vmul.f32 %v1105, %v923
        %v1107 = vmul.f32 %v1101, %v1104
        %v1108 = vmul.f32 %v1107, %v1014
        %v1109 = vadd.f32 %v1106, %v1108
        %v1110 = vmax.f32 %v1040, %v1076
        %v1111 = vsub.f32 %v1040, %v1110
        %v1112 = vmul.f32 %v1111, 1.442695
        %v1113 = vpow.pop %v1112
        %v1114 = vsub.f32 %v1076, %v1110
        %v1115 = vmul.f32 %v1114, 1.442695
        %v1116 = vpow.pop %v1115
        %v1117 = vadd.f32 %v1113, %v1116
        %v1118 = vrcp.pop %v1117
        %v1119 = vmul.f32 1.0, %v1118
        %v1120 = vmul.f32 %v1113, %v1119
        %v1121 = vmul.f32 %v1120, %v923
        %v1122 = vmul.f32 %v1116, %v1119
        %v1123 = vmul.f32 %v1122, %v1014
        %v1124 = vadd.f32 %v1121, %v1123
        %v1125 = vmax.f32 %v1048, %v1084
        %v1126 = vsub.f32 %v1048, %v1125
        %v1127 = vmul.f32 %v1126, 1.442695
        %v1128 = vpow.pop %v1127
        %v1129 = vsub.f32 %v1084, %v1125
        %v1130 = vmul.f32 %v1129, 1.442695
        %v1131 = vpow.pop %v1130
        %v1132 = vadd.f32 %v1128, %v1131
        %v1133 = vrcp.pop %v1132
        %v1134 = vmul.f32 1.0, %v1133
        %v1135 = vmul.f32 %v1128, %v1134
        %v1136 = vmul.f32 %v1135, %v926
        %v1137 = vmul.f32 %v1131, %v1134
        %v1138 = vmul.f32 %v1137, %v1017
        %v1139 = vadd.f32 %v1136, %v1138
        %v1140 = vmax.f32 %v1058, %v1094
        %v1141 = vsub.f32 %v1058, %v1140
        %v1142 = vmul.f32 %v1141, 1.442695
        %v1143 = vpow.pop %v1142
        %v1144 = vsub.f32 %v1094, %v1140
        %v1145 = vmul.f32 %v1144, 1.442695
        %v1146 = vpow.pop %v1145
        %v1147 = vadd.f32 %v1143, %v1146
        %v1148 = vrcp.pop %v1147
        %v1149 = vmul.f32 1.0, %v1148
        %v1150 = vmul.f32 %v1143, %v1149
        %v1151 = vmul.f32 %v1150, %v926
        %v1152 = vmul.f32 %v1146, %v1149
        %v1153 = vmul.f32 %v1152, %v1017
        %v1154 = vadd.f32 %v1151, %v1153
        %v1155 = vsel %vm1023, %v1109, %v1124
        %v1156 = vsel %vm1023, %v1139, %v1154
        %v1157 = vmul.f32 %v1020, %v915
        %v1158 = vsel %vm1023, %v1157, 0.0
        %v1159 = vrot.slane %v1158, 4
        %v1160 = vadd.f32 %v1158, %v1159
        %v1161 = vrot.slane %v1160, 2
        %v1162 = vadd.f32 %v1160, %v1161
        %v1163 = vrot.slane %v1162, 1
        %v1164 = vadd.f32 %v1162, %v1163
        %v1166 = vrot.slane %v1157, 4
        %v1168 = vsel %vm1023, %v1166, 0.0
        %v1169 = vrot.slane %v1168, 4
        %v1170 = vadd.f32 %v1168, %v1169
        %v1171 = vrot.slane %v1170, 2
        %v1172 = vadd.f32 %v1170, %v1171
        %v1173 = vrot.slane %v1172, 1
        %v1174 = vadd.f32 %v1172, %v1173
        %v1175 = vmul.f32 %v1021, %v918
        %v1176 = vsel %vm1023, %v1175, 0.0
        %v1177 = vrot.slane %v1176, 4
        %v1178 = vadd.f32 %v1176, %v1177
        %v1179 = vrot.slane %v1178, 2
        %v1180 = vadd.f32 %v1178, %v1179
        %v1181 = vrot.slane %v1180, 1
        %v1182 = vadd.f32 %v1180, %v1181
        %v1184 = vrot.slane %v1175, 4
        %v1186 = vsel %vm1023, %v1184, 0.0
        %v1187 = vrot.slane %v1186, 4
        %v1188 = vadd.f32 %v1186, %v1187
        %v1189 = vrot.slane %v1188, 2
        %v1190 = vadd.f32 %v1188, %v1189
        %v1191 = vrot.slane %v1190, 1
        %v1192 = vadd.f32 %v1190, %v1191
        %v1193 = vmul.f32 %v1020, %v1006
        %v1194 = vsel %vm1023, %v1193, 0.0
        %v1195 = vrot.slane %v1194, 4
        %v1196 = vadd.f32 %v1194, %v1195
        %v1197 = vrot.slane %v1196, 2
        %v1198 = vadd.f32 %v1196, %v1197
        %v1199 = vrot.slane %v1198, 1
        %v1200 = vadd.f32 %v1198, %v1199
        %v1202 = vrot.slane %v1193, 4
        %v1204 = vsel %vm1023, %v1202, 0.0
        %v1205 = vrot.slane %v1204, 4
        %v1206 = vadd.f32 %v1204, %v1205
        %v1207 = vrot.slane %v1206, 2
        %v1208 = vadd.f32 %v1206, %v1207
        %v1209 = vrot.slane %v1208, 1
        %v1210 = vadd.f32 %v1208, %v1209
        %v1211 = vmul.f32 %v1021, %v1009
        %v1212 = vsel %vm1023, %v1211, 0.0
        %v1213 = vrot.slane %v1212, 4
        %v1214 = vadd.f32 %v1212, %v1213
        %v1215 = vrot.slane %v1214, 2
        %v1216 = vadd.f32 %v1214, %v1215
        %v1217 = vrot.slane %v1216, 1
        %v1218 = vadd.f32 %v1216, %v1217
        %v1220 = vrot.slane %v1211, 4
        %v1222 = vsel %vm1023, %v1220, 0.0
        %v1223 = vrot.slane %v1222, 4
        %v1224 = vadd.f32 %v1222, %v1223
        %v1225 = vrot.slane %v1224, 2
        %v1226 = vadd.f32 %v1224, %v1225
        %v1227 = vrot.slane %v1226, 1
        %v1228 = vadd.f32 %v1226, %v1227
        %v1229 = vmax.f32 %v1164, %v1200
        %v1230 = vsub.f32 %v1164, %v1229
        %v1231 = vmul.f32 %v1230, 1.442695
        %v1232 = vpow.pop %v1231
        %v1233 = vsub.f32 %v1200, %v1229
        %v1234 = vmul.f32 %v1233, 1.442695
        %v1235 = vpow.pop %v1234
        %v1236 = vadd.f32 %v1232, %v1235
        %v1237 = vrcp.pop %v1236
        %v1238 = vmul.f32 1.0, %v1237
        %v1239 = vmul.f32 %v1232, %v1238
        %v1240 = vmul.f32 %v1239, %v923
        %v1241 = vmul.f32 %v1235, %v1238
        %v1242 = vmul.f32 %v1241, %v1014
        %v1243 = vadd.f32 %v1240, %v1242
        %v1244 = vmax.f32 %v1174, %v1210
        %v1245 = vsub.f32 %v1174, %v1244
        %v1246 = vmul.f32 %v1245, 1.442695
        %v1247 = vpow.pop %v1246
        %v1248 = vsub.f32 %v1210, %v1244
        %v1249 = vmul.f32 %v1248, 1.442695
        %v1250 = vpow.pop %v1249
        %v1251 = vadd.f32 %v1247, %v1250
        %v1252 = vrcp.pop %v1251
        %v1253 = vmul.f32 1.0, %v1252
        %v1254 = vmul.f32 %v1247, %v1253
        %v1255 = vmul.f32 %v1254, %v923
        %v1256 = vmul.f32 %v1250, %v1253
        %v1257 = vmul.f32 %v1256, %v1014
        %v1258 = vadd.f32 %v1255, %v1257
        %v1259 = vmax.f32 %v1182, %v1218
        %v1260 = vsub.f32 %v1182, %v1259
        %v1261 = vmul.f32 %v1260, 1.442695
        %v1262 = vpow.pop %v1261
        %v1263 = vsub.f32 %v1218, %v1259
        %v1264 = vmul.f32 %v1263, 1.442695
        %v1265 = vpow.pop %v1264
        %v1266 = vadd.f32 %v1262, %v1265
        %v1267 = vrcp.pop %v1266
        %v1268 = vmul.f32 1.0, %v1267
        %v1269 = vmul.f32 %v1262, %v1268
        %v1270 = vmul.f32 %v1269, %v926
        %v1271 = vmul.f32 %v1265, %v1268
        %v1272 = vmul.f32 %v1271, %v1017
        %v1273 = vadd.f32 %v1270, %v1272
        %v1274 = vmax.f32 %v1192, %v1228
        %v1275 = vsub.f32 %v1192, %v1274
        %v1276 = vmul.f32 %v1275, 1.442695
        %v1277 = vpow.pop %v1276
        %v1278 = vsub.f32 %v1228, %v1274
        %v1279 = vmul.f32 %v1278, 1.442695
        %v1280 = vpow.pop %v1279
        %v1281 = vadd.f32 %v1277, %v1280
        %v1282 = vrcp.pop %v1281
        %v1283 = vmul.f32 1.0, %v1282
        %v1284 = vmul.f32 %v1277, %v1283
        %v1285 = vmul.f32 %v1284, %v926
        %v1286 = vmul.f32 %v1280, %v1283
        %v1287 = vmul.f32 %v1286, %v1017
        %v1288 = vadd.f32 %v1285, %v1287
        %v1289 = vsel %vm1023, %v1243, %v1258
        %v1290 = vsel %vm1023, %v1273, %v1288
        %v1291 = vpack.c.bf16 %v1156, %v1155
        %1293 = vset.pattern.permute.xlu0 0
        %1294 = vperm.xlu0 %1293, %v735
        %v1295 = vpop.permute.xlu0 %1294
        %1298 = vset.pattern.permute.xlu0 0
        %1299 = vperm.xlu0 %1298, %v736
        %v1300 = vpop.permute.xlu0 %1299
        %v1304 = vunpack.c.l.b16 %v733
        %v1305 = vunpack.c.l.b16 %v734
        %v1306 = vpack.c.b16 %v1305, %v1304
        %v1308 = vsel %vm862, %v1306, 0
        %1310 = vmatprep.subr.bf16.mxu0 0
        %1311 = vmatpush1.bf16.msra.mxu0 %v1291
        %1312 = vmatprep.subr.bf16.mxu0 0
        %1313 = vmatpush1.bf16.msra.mxu0 0
        %1314 = vmatprep.subr.bf16.mxu0 0
        %1315 = vmatpush1.bf16.msra.mxu0 0
        %1316 = vmatprep.subr.bf16.mxu0 0
        %1317 = vmatpush1.bf16.msra.mxu0 0
        %1318 = vmatprep.subr.bf16.mxu0 0
        %1319 = vmatpush1.bf16.msra.mxu0 0
        %1320 = vmatprep.subr.bf16.mxu0 0
        %1321 = vmatpush1.bf16.msra.mxu0 0
        %1322 = vmatprep.subr.bf16.mxu0 0
        %1323 = vmatpush1.bf16.msra.mxu0 0
        %1324 = vmatprep.subr.bf16.mxu0 0
        %1325 = vmatpush1.bf16.msra.mxu0 0
        %1326 = vmatprep.subr.bf16.mxu0 0
        %1327 = vmatpush1.bf16.msra.mxu0 0
        %1328 = vmatprep.subr.bf16.mxu0 0
        %1329 = vmatpush1.bf16.msra.mxu0 0
        %1330 = vmatprep.subr.bf16.mxu0 0
        %1331 = vmatpush1.bf16.msra.mxu0 0
        %1332 = vmatprep.subr.bf16.mxu0 0
        %1333 = vmatpush1.bf16.msra.mxu0 0
        %1334 = vmatprep.subr.bf16.mxu0 0
        %1335 = vmatpush1.bf16.msra.mxu0 0
        %1336 = vmatprep.subr.bf16.mxu0 0
        %1337 = vmatpush1.bf16.msra.mxu0 0
        %1338 = vmatprep.subr.bf16.mxu0 0
        %1339 = vmatpush1.bf16.msra.mxu0 0
        %1340 = vmatprep.subr.bf16.mxu0 0
        %1341 = vmatpush1.bf16.msra.mxu0 0
        %1342 = vmatprep.mubr.bf16.mxu0 0
        %1343 = vmatmul.mubr.bf16.gmra.mrb[0].mxu0 %v1308
        %v1344 = vpop.f32.mrb[0].mxu0
        %v1345 = vadd.f32 %v1295, %v1344
        %v1346 = vpop.f32.mrb[0].mxu0
        %v1347 = vpop.f32.mrb[0].mxu0
        %v1348 = vadd.f32 %v1300, %v1347
        %v1349 = vpop.f32.mrb[0].mxu0
        %1350 = vdwg.mxu0
        %v1351 = vadd.f32 %v1345, %v814
        %v1352 = vadd.f32 %v1348, %v815
        %v1353 = vpack.c.bf16 %v1352, %v1351
        %1355 = vset.pattern.permute.xlu0 0
        %1356 = vperm.xlu0 %1355, %v745
        %v1357 = vpop.permute.xlu0 %1356
        %1360 = vset.pattern.permute.xlu0 0
        %1361 = vperm.xlu0 %1360, %v746
        %v1362 = vpop.permute.xlu0 %1361
        %1365 = vset.pattern.permute.xlu0 0
        %1366 = vperm.xlu0 %1365, %v747
        %v1367 = vpop.permute.xlu0 %1366
        %1370 = vset.pattern.permute.xlu0 0
        %1371 = vperm.xlu0 %1370, %v748
        %v1372 = vpop.permute.xlu0 %1371
        %1375 = vset.pattern.permute.xlu0 0
        %1376 = vperm.xlu0 %1375, %v749
        %v1377 = vpop.permute.xlu0 %1376
        %1380 = vset.pattern.permute.xlu0 0
        %1381 = vperm.xlu0 %1380, %v750
        %v1382 = vpop.permute.xlu0 %1381
        %1385 = vset.pattern.permute.xlu0 0
        %1386 = vperm.xlu0 %1385, %v751
        %v1387 = vpop.permute.xlu0 %1386
        %1390 = vset.pattern.permute.xlu0 0
        %1391 = vperm.xlu0 %1390, %v752
        %v1392 = vpop.permute.xlu0 %1391
        %v1402 = vunpack.c.l.b16 %v737
        %v1403 = vunpack.c.l.b16 %v738
        %v1404 = vunpack.c.l.b16 %v739
        %v1405 = vunpack.c.l.b16 %v740
        %v1406 = vunpack.c.l.b16 %v741
        %v1407 = vunpack.c.l.b16 %v742
        %v1408 = vunpack.c.l.b16 %v743
        %v1409 = vunpack.c.l.b16 %v744
        %v1410 = vpack.c.b16 %v1403, %v1402
        %v1411 = vpack.c.b16 %v1405, %v1404
        %v1412 = vpack.c.b16 %v1407, %v1406
        %v1413 = vpack.c.b16 %v1409, %v1408
        %v1415 = vsel %vm862, %v1410, 0
        %v1418 = vsel %vm862, %v1411, 0
        %v1421 = vsel %vm862, %v1412, 0
        %v1424 = vsel %vm862, %v1413, 0
        %1426 = vmatprep.subr.bf16.mxu0 0
        %1427 = vmatpush1.bf16.msra.mxu0 %v1353
        %1428 = vmatprep.subr.bf16.mxu0 0
        %1429 = vmatpush1.bf16.msra.mxu0 0
        %1430 = vmatprep.subr.bf16.mxu0 0
        %1431 = vmatpush1.bf16.msra.mxu0 0
        %1432 = vmatprep.subr.bf16.mxu0 0
        %1433 = vmatpush1.bf16.msra.mxu0 0
        %1434 = vmatprep.subr.bf16.mxu0 0
        %1435 = vmatpush1.bf16.msra.mxu0 0
        %1436 = vmatprep.subr.bf16.mxu0 0
        %1437 = vmatpush1.bf16.msra.mxu0 0
        %1438 = vmatprep.subr.bf16.mxu0 0
        %1439 = vmatpush1.bf16.msra.mxu0 0
        %1440 = vmatprep.subr.bf16.mxu0 0
        %1441 = vmatpush1.bf16.msra.mxu0 0
        %1442 = vmatprep.subr.bf16.mxu0 0
        %1443 = vmatpush1.bf16.msra.mxu0 0
        %1444 = vmatprep.subr.bf16.mxu0 0
        %1445 = vmatpush1.bf16.msra.mxu0 0
        %1446 = vmatprep.subr.bf16.mxu0 0
        %1447 = vmatpush1.bf16.msra.mxu0 0
        %1448 = vmatprep.subr.bf16.mxu0 0
        %1449 = vmatpush1.bf16.msra.mxu0 0
        %1450 = vmatprep.subr.bf16.mxu0 0
        %1451 = vmatpush1.bf16.msra.mxu0 0
        %1452 = vmatprep.subr.bf16.mxu0 0
        %1453 = vmatpush1.bf16.msra.mxu0 0
        %1454 = vmatprep.subr.bf16.mxu0 0
        %1455 = vmatpush1.bf16.msra.mxu0 0
        %1456 = vmatprep.subr.bf16.mxu0 0
        %1457 = vmatpush1.bf16.msra.mxu0 0
        %1458 = vmatprep.mubr.bf16.mxu0 0
        %1459 = vmatmul.mubr.bf16.gmra.mrb[0].mxu0 %v1415
        %v1460 = vpop.f32.mrb[0].mxu0
        %v1461 = vadd.f32 %v1357, %v1460
        %v1462 = vpop.f32.mrb[0].mxu0
        %v1463 = vpop.f32.mrb[0].mxu0
        %v1464 = vadd.f32 %v1362, %v1463
        %v1465 = vpop.f32.mrb[0].mxu0
        %1466 = vmatprep.mubr.bf16.mxu0 0
        %1467 = vmatmul.mubr.bf16.gmra.mrb[0].mxu0 %v1418
        %v1468 = vpop.f32.mrb[0].mxu0
        %v1469 = vadd.f32 %v1367, %v1468
        %v1470 = vpop.f32.mrb[0].mxu0
        %v1471 = vpop.f32.mrb[0].mxu0
        %v1472 = vadd.f32 %v1372, %v1471
        %v1473 = vpop.f32.mrb[0].mxu0
        %1474 = vmatprep.mubr.bf16.mxu0 0
        %1475 = vmatmul.mubr.bf16.gmra.mrb[0].mxu0 %v1421
        %v1476 = vpop.f32.mrb[0].mxu0
        %v1477 = vadd.f32 %v1377, %v1476
        %v1478 = vpop.f32.mrb[0].mxu0
        %v1479 = vpop.f32.mrb[0].mxu0
        %v1480 = vadd.f32 %v1382, %v1479
        %v1481 = vpop.f32.mrb[0].mxu0
        %1482 = vmatprep.mubr.bf16.mxu0 0
        %1483 = vmatmul.mubr.bf16.gmra.mrb[0].mxu0 %v1424
        %v1484 = vpop.f32.mrb[0].mxu0
        %v1485 = vadd.f32 %v1387, %v1484
        %v1486 = vpop.f32.mrb[0].mxu0
        %v1487 = vpop.f32.mrb[0].mxu0
        %v1488 = vadd.f32 %v1392, %v1487
        %v1489 = vpop.f32.mrb[0].mxu0
        %1490 = vdwg.mxu0
        %v1491 = vmax.f32 %v1461, 0.0
        %v1492 = vmax.f32 %v1464, 0.0
        %v1493 = vmax.f32 %v1469, 0.0
        %v1494 = vmax.f32 %v1472, 0.0
        %v1495 = vmax.f32 %v1477, 0.0
        %v1496 = vmax.f32 %v1480, 0.0
        %v1497 = vmax.f32 %v1485, 0.0
        %v1498 = vmax.f32 %v1488, 0.0
        %v1499 = vpack.c.bf16 %v1492, %v1491
        %v1500 = vpack.c.bf16 %v1494, %v1493
        %v1501 = vpack.c.bf16 %v1496, %v1495
        %v1502 = vpack.c.bf16 %v1498, %v1497
        %1504 = vset.pattern.permute.xlu0 0
        %1505 = vperm.xlu0 %1504, %v755
        %v1506 = vpop.permute.xlu0 %1505
        %1509 = vset.pattern.permute.xlu0 0
        %1510 = vperm.xlu0 %1509, %v756
        %v1511 = vpop.permute.xlu0 %1510
        %v1515 = vunpack.c.l.b16 %v753
        %v1516 = vunpack.c.l.b16 %v754
        %v1517 = vpack.c.b16 %v1516, %v1515
        %vm1518 = vcmask 523264
        %v1520 = vsel %vm1518, %v1517, 0
        %1522 = vmatprep.subr.bf16.mxu0 0
        %1523 = vmatpush1.bf16.msra.mxu0 %v1499
        %1524 = vmatprep.subr.bf16.mxu0 0
        %1525 = vmatpush1.bf16.msra.mxu0 %v1500
        %1526 = vmatprep.subr.bf16.mxu0 0
        %1527 = vmatpush1.bf16.msra.mxu0 %v1501
        %1528 = vmatprep.subr.bf16.mxu0 0
        %1529 = vmatpush1.bf16.msra.mxu0 %v1502
        %1530 = vmatprep.subr.bf16.mxu0 0
        %1531 = vmatpush1.bf16.msra.mxu0 0
        %1532 = vmatprep.subr.bf16.mxu0 0
        %1533 = vmatpush1.bf16.msra.mxu0 0
        %1534 = vmatprep.subr.bf16.mxu0 0
        %1535 = vmatpush1.bf16.msra.mxu0 0
        %1536 = vmatprep.subr.bf16.mxu0 0
        %1537 = vmatpush1.bf16.msra.mxu0 0
        %1538 = vmatprep.subr.bf16.mxu0 0
        %1539 = vmatpush1.bf16.msra.mxu0 0
        %1540 = vmatprep.subr.bf16.mxu0 0
        %1541 = vmatpush1.bf16.msra.mxu0 0
        %1542 = vmatprep.subr.bf16.mxu0 0
        %1543 = vmatpush1.bf16.msra.mxu0 0
        %1544 = vmatprep.subr.bf16.mxu0 0
        %1545 = vmatpush1.bf16.msra.mxu0 0
        %1546 = vmatprep.subr.bf16.mxu0 0
        %1547 = vmatpush1.bf16.msra.mxu0 0
        %1548 = vmatprep.subr.bf16.mxu0 0
        %1549 = vmatpush1.bf16.msra.mxu0 0
        %1550 = vmatprep.subr.bf16.mxu0 0
        %1551 = vmatpush1.bf16.msra.mxu0 0
        %1552 = vmatprep.subr.bf16.mxu0 0
        %1553 = vmatpush1.bf16.msra.mxu0 0
        %1554 = vmatprep.mubr.bf16.mxu0 0
        %1555 = vmatmul.mubr.bf16.gmra.mrb[0].mxu0 %v1520
        %v1556 = vpop.f32.mrb[0].mxu0
        %v1557 = vadd.f32 %v1506, %v1556
        %v1558 = vpop.f32.mrb[0].mxu0
        %v1559 = vpop.f32.mrb[0].mxu0
        %v1560 = vadd.f32 %v1511, %v1559
        %v1561 = vpop.f32.mrb[0].mxu0
        %1562 = vdwg.mxu0
        %v1563 = vadd.f32 %v1351, %v1352
        %v1564 = vrot.slane %v1563, 4
        %v1565 = vadd.f32 %v1563, %v1564
        %v1566 = vrot.slane %v1565, 2
        %v1567 = vadd.f32 %v1565, %v1566
        %v1568 = vrot.slane %v1567, 1
        %v1569 = vadd.f32 %v1567, %v1568
        %v1570 = vmul.f32 %v1569, %v774
        %v1571 = vsub.f32 %v1351, %v1570
        %v1572 = vsub.f32 %v1352, %v1570
        %v1573 = vmul.f32 %v1571, %v1571
        %v1574 = vmul.f32 %v1572, %v1572
        %v1575 = vadd.f32 %v1573, %v1574
        %v1576 = vrot.slane %v1575, 4
        %v1577 = vadd.f32 %v1575, %v1576
        %v1578 = vrot.slane %v1577, 2
        %v1579 = vadd.f32 %v1577, %v1578
        %v1580 = vrot.slane %v1579, 1
        %v1581 = vadd.f32 %v1579, %v1580
        %v1582 = vmul.f32 %v1581, %v774
        %v1583 = vadd.f32 %v1582, 1e-05
        %v1584 = vrsqrt.pop %v1583
        %v1585 = vmul.f32 %v1571, %v1584
        %v1586 = vmul.f32 %v1572, %v1584
        %1588 = vset.pattern.permute.xlu0 0
        %1589 = vperm.xlu0 %1588, %v717
        %v1590 = vpop.permute.xlu0 %1589
        %1593 = vset.pattern.permute.xlu0 0
        %1594 = vperm.xlu0 %1593, %v718
        %v1595 = vpop.permute.xlu0 %1594
        %v1597 = vmul.f32 %v1585, %v1590
        %v1598 = vmul.f32 %v1586, %v1595
        %1600 = vset.pattern.permute.xlu0 0
        %1601 = vperm.xlu0 %1600, %v719
        %v1602 = vpop.permute.xlu0 %1601
        %1605 = vset.pattern.permute.xlu0 0
        %1606 = vperm.xlu0 %1605, %v720
        %v1607 = vpop.permute.xlu0 %1606
        %v1609 = vadd.f32 %v1597, %v1602
        %v1610 = vadd.f32 %v1598, %v1607
        %v1611 = vadd.f32 %v1557, %v1609
        %v1612 = vadd.f32 %v1560, %v1610
        %v1613 = vpack.c.bf16 %v1612, %v1611
        %v1622 = vunpack.c.l.b16 %v757
        %v1623 = vunpack.c.l.b16 %v758
        %v1624 = vunpack.c.l.b16 %v759
        %v1625 = vunpack.c.l.b16 %v760
        %v1626 = vunpack.c.l.b16 %v761
        %v1627 = vunpack.c.l.b16 %v762
        %v1628 = vunpack.c.l.b16 %v763
        %v1629 = vunpack.c.l.b16 %v764
        %v1630 = vpack.c.b16 %v1623, %v1622
        %v1631 = vpack.c.b16 %v1625, %v1624
        %v1632 = vpack.c.b16 %v1627, %v1626
        %v1633 = vpack.c.b16 %v1629, %v1628
        %v1635 = vsel %vm862, %v1630, 0
        %v1638 = vsel %vm862, %v1631, 0
        %v1641 = vsel %vm862, %v1632, 0
        %v1644 = vsel %vm862, %v1633, 0
        %1646 = vmatprep.subr.bf16.mxu0 0
        %1647 = vmatpush1.bf16.msra.mxu0 %v1613
        %1648 = vmatprep.subr.bf16.mxu0 0
        %1649 = vmatpush1.bf16.msra.mxu0 0
        %1650 = vmatprep.subr.bf16.mxu0 0
        %1651 = vmatpush1.bf16.msra.mxu0 0
        %1652 = vmatprep.subr.bf16.mxu0 0
        %1653 = vmatpush1.bf16.msra.mxu0 0
        %1654 = vmatprep.subr.bf16.mxu0 0
        %1655 = vmatpush1.bf16.msra.mxu0 0
        %1656 = vmatprep.subr.bf16.mxu0 0
        %1657 = vmatpush1.bf16.msra.mxu0 0
        %1658 = vmatprep.subr.bf16.mxu0 0
        %1659 = vmatpush1.bf16.msra.mxu0 0
        %1660 = vmatprep.subr.bf16.mxu0 0
        %1661 = vmatpush1.bf16.msra.mxu0 0
        %1662 = vmatprep.subr.bf16.mxu0 0
        %1663 = vmatpush1.bf16.msra.mxu0 0
        %1664 = vmatprep.subr.bf16.mxu0 0
        %1665 = vmatpush1.bf16.msra.mxu0 0
        %1666 = vmatprep.subr.bf16.mxu0 0
        %1667 = vmatpush1.bf16.msra.mxu0 0
        %1668 = vmatprep.subr.bf16.mxu0 0
        %1669 = vmatpush1.bf16.msra.mxu0 0
        %1670 = vmatprep.subr.bf16.mxu0 0
        %1671 = vmatpush1.bf16.msra.mxu0 0
        %1672 = vmatprep.subr.bf16.mxu0 0
        %1673 = vmatpush1.bf16.msra.mxu0 0
        %1674 = vmatprep.subr.bf16.mxu0 0
        %1675 = vmatpush1.bf16.msra.mxu0 0
        %1676 = vmatprep.subr.bf16.mxu0 0
        %1677 = vmatpush1.bf16.msra.mxu0 0
        %1678 = vmatprep.mubr.bf16.mxu0 0
        %1679 = vmatmul.mubr.bf16.gmra.mrb[0].mxu0 %v1635
        %v1680 = vpop.f32.mrb[0].mxu0
        %v1681 = vadd.f32 0.0, %v1680
        %v1682 = vpop.f32.mrb[0].mxu0
        %v1683 = vpop.f32.mrb[0].mxu0
        %v1684 = vadd.f32 0.0, %v1683
        %v1685 = vpop.f32.mrb[0].mxu0
        %1686 = vmatprep.mubr.bf16.mxu0 0
        %1687 = vmatmul.mubr.bf16.gmra.mrb[0].mxu0 %v1638
        %v1688 = vpop.f32.mrb[0].mxu0
        %v1689 = vadd.f32 0.0, %v1688
        %v1690 = vpop.f32.mrb[0].mxu0
        %v1691 = vpop.f32.mrb[0].mxu0
        %v1692 = vadd.f32 0.0, %v1691
        %v1693 = vpop.f32.mrb[0].mxu0
        %1694 = vmatprep.mubr.bf16.mxu0 0
        %1695 = vmatmul.mubr.bf16.gmra.mrb[0].mxu0 %v1641
        %v1696 = vpop.f32.mrb[0].mxu0
        %v1697 = vadd.f32 0.0, %v1696
        %v1698 = vpop.f32.mrb[0].mxu0
        %v1699 = vpop.f32.mrb[0].mxu0
        %v1700 = vadd.f32 0.0, %v1699
        %v1701 = vpop.f32.mrb[0].mxu0
        %1702 = vmatprep.mubr.bf16.mxu0 0
        %1703 = vmatmul.mubr.bf16.gmra.mrb[0].mxu0 %v1644
        %v1704 = vpop.f32.mrb[0].mxu0
        %v1705 = vadd.f32 0.0, %v1704
        %v1706 = vpop.f32.mrb[0].mxu0
        %v1707 = vpop.f32.mrb[0].mxu0
        %v1708 = vadd.f32 0.0, %v1707
        %v1709 = vpop.f32.mrb[0].mxu0
        %1710 = vdwg.mxu0
        %v1711 = vpack.c.bf16 %v1684, %v1681
        %v1712 = vpack.c.bf16 %v1692, %v1689
        %v1713 = vpack.c.bf16 %v1700, %v1697
        %v1714 = vpack.c.bf16 %v1708, %v1705
        %v1719 = vunpack.c.l.b16 %v1711
        %v1720 = vunpack.c.h.b16 %v1711
        %v1721 = vunpack.c.l.b16 %v1712
        %v1722 = vunpack.c.h.b16 %v1712
        %v1723 = vunpack.c.l.b16 %v1713
        %v1724 = vunpack.c.h.b16 %v1713
        %v1725 = vunpack.c.l.b16 %v1714
        %v1726 = vunpack.c.h.b16 %v1714
        %v1727 = vpack.c.b16 %v1719, %v1719
        %v1728 = vpack.c.b16 %v1720, %v1720
        %v1729 = vpack.c.b16 %v1721, %v1721
        %v1730 = vpack.c.b16 %v1722, %v1722
        %v1731 = vpack.c.b16 %v1723, %v1723
        %v1732 = vpack.c.b16 %v1724, %v1724
        %v1733 = vpack.c.b16 %v1725, %v1725
        %v1734 = vpack.c.b16 %v1726, %v1726
        %1743 = vst [vmem:[%s704] sm:$0xf] %v1727
        %1744 = vst [vmem:[%s704 + $0x4] sm:$0xf] %v1728
        %1745 = vst [vmem:[%s704 + $0x8] sm:$0xf] %v1729
        %1746 = vst [vmem:[%s704 + $0xc] sm:$0xf] %v1730
        %1747 = vst [vmem:[%s704 + $0x10] sm:$0xf] %v1731
        %1748 = vst [vmem:[%s704 + $0x14] sm:$0xf] %v1732
        %1749 = vst [vmem:[%s704 + $0x18] sm:$0xf] %v1733
        %1750 = vst [vmem:[%s704 + $0x1c] sm:$0xf] %v1734
        %v1751 = vadd.f32 %v1681, 0.0
        %v1752 = vadd.f32 %v1684, 0.0
        %v1753 = vadd.f32 %v1689, 0.0
        %v1754 = vadd.f32 %v1692, 0.0
        %v1755 = vadd.f32 %v1697, 0.0
        %v1756 = vadd.f32 %v1700, 0.0
        %v1757 = vadd.f32 %v1705, 0.0
        %v1758 = vadd.f32 %v1708, 0.0
        %v1759 = vmul.f32 %v1681, %v1681
        %v1760 = vmul.f32 %v1684, %v1684
        %v1761 = vmul.f32 %v1689, %v1689
        %v1762 = vmul.f32 %v1692, %v1692
        %v1763 = vmul.f32 %v1697, %v1697
        %v1764 = vmul.f32 %v1700, %v1700
        %v1765 = vmul.f32 %v1705, %v1705
        %v1766 = vmul.f32 %v1708, %v1708
        %v1767 = vadd.f32 %v1759, 0.0
        %v1768 = vadd.f32 %v1760, 0.0
        %v1769 = vadd.f32 %v1761, 0.0
        %v1770 = vadd.f32 %v1762, 0.0
        %v1771 = vadd.f32 %v1763, 0.0
        %v1772 = vadd.f32 %v1764, 0.0
        %v1773 = vadd.f32 %v1765, 0.0
        %v1774 = vadd.f32 %v1766, 0.0
        %v1775 = vpack.c.bf16 %v1290, %v1289
        %1776 = vmatprep.subr.bf16.mxu0 0
        %1777 = vmatpush1.bf16.msra.mxu0 %v1775
        %1778 = vmatprep.subr.bf16.mxu0 0
        %1779 = vmatpush1.bf16.msra.mxu0 0
        %1780 = vmatprep.subr.bf16.mxu0 0
        %1781 = vmatpush1.bf16.msra.mxu0 0
        %1782 = vmatprep.subr.bf16.mxu0 0
        %1783 = vmatpush1.bf16.msra.mxu0 0
        %1784 = vmatprep.subr.bf16.mxu0 0
        %1785 = vmatpush1.bf16.msra.mxu0 0
        %1786 = vmatprep.subr.bf16.mxu0 0
        %1787 = vmatpush1.bf16.msra.mxu0 0
        %1788 = vmatprep.subr.bf16.mxu0 0
        %1789 = vmatpush1.bf16.msra.mxu0 0
        %1790 = vmatprep.subr.bf16.mxu0 0
        %1791 = vmatpush1.bf16.msra.mxu0 0
        %1792 = vmatprep.subr.bf16.mxu0 0
        %1793 = vmatpush1.bf16.msra.mxu0 0
        %1794 = vmatprep.subr.bf16.mxu0 0
        %1795 = vmatpush1.bf16.msra.mxu0 0
        %1796 = vmatprep.subr.bf16.mxu0 0
        %1797 = vmatpush1.bf16.msra.mxu0 0
        %1798 = vmatprep.subr.bf16.mxu0 0
        %1799 = vmatpush1.bf16.msra.mxu0 0
        %1800 = vmatprep.subr.bf16.mxu0 0
        %1801 = vmatpush1.bf16.msra.mxu0 0
        %1802 = vmatprep.subr.bf16.mxu0 0
        %1803 = vmatpush1.bf16.msra.mxu0 0
        %1804 = vmatprep.subr.bf16.mxu0 0
        %1805 = vmatpush1.bf16.msra.mxu0 0
        %1806 = vmatprep.subr.bf16.mxu0 0
        %1807 = vmatpush1.bf16.msra.mxu0 0
        %1808 = vmatprep.mubr.bf16.mxu0 0
        %1809 = vmatmul.mubr.bf16.gmra.mrb[0].mxu0 %v1308
        %v1810 = vpop.f32.mrb[0].mxu0
        %v1811 = vadd.f32 %v1295, %v1810
        %v1812 = vpop.f32.mrb[0].mxu0
        %v1813 = vpop.f32.mrb[0].mxu0
        %v1814 = vadd.f32 %v1300, %v1813
        %v1815 = vpop.f32.mrb[0].mxu0
        %1816 = vdwg.mxu0
        %v1817 = vadd.f32 %v1811, %v960
        %v1818 = vadd.f32 %v1814, %v961
        %v1819 = vpack.c.bf16 %v1818, %v1817
        %1820 = vmatprep.subr.bf16.mxu0 0
        %1821 = vmatpush1.bf16.msra.mxu0 %v1819
        %1822 = vmatprep.subr.bf16.mxu0 0
        %1823 = vmatpush1.bf16.msra.mxu0 0
        %1824 = vmatprep.subr.bf16.mxu0 0
        %1825 = vmatpush1.bf16.msra.mxu0 0
        %1826 = vmatprep.subr.bf16.mxu0 0
        %1827 = vmatpush1.bf16.msra.mxu0 0
        %1828 = vmatprep.subr.bf16.mxu0 0
        %1829 = vmatpush1.bf16.msra.mxu0 0
        %1830 = vmatprep.subr.bf16.mxu0 0
        %1831 = vmatpush1.bf16.msra.mxu0 0
        %1832 = vmatprep.subr.bf16.mxu0 0
        %1833 = vmatpush1.bf16.msra.mxu0 0
        %1834 = vmatprep.subr.bf16.mxu0 0
        %1835 = vmatpush1.bf16.msra.mxu0 0
        %1836 = vmatprep.subr.bf16.mxu0 0
        %1837 = vmatpush1.bf16.msra.mxu0 0
        %1838 = vmatprep.subr.bf16.mxu0 0
        %1839 = vmatpush1.bf16.msra.mxu0 0
        %1840 = vmatprep.subr.bf16.mxu0 0
        %1841 = vmatpush1.bf16.msra.mxu0 0
        %1842 = vmatprep.subr.bf16.mxu0 0
        %1843 = vmatpush1.bf16.msra.mxu0 0
        %1844 = vmatprep.subr.bf16.mxu0 0
        %1845 = vmatpush1.bf16.msra.mxu0 0
        %1846 = vmatprep.subr.bf16.mxu0 0
        %1847 = vmatpush1.bf16.msra.mxu0 0
        %1848 = vmatprep.subr.bf16.mxu0 0
        %1849 = vmatpush1.bf16.msra.mxu0 0
        %1850 = vmatprep.subr.bf16.mxu0 0
        %1851 = vmatpush1.bf16.msra.mxu0 0
        %1852 = vmatprep.mubr.bf16.mxu0 0
        %1853 = vmatmul.mubr.bf16.gmra.mrb[0].mxu0 %v1415
        %v1854 = vpop.f32.mrb[0].mxu0
        %v1855 = vadd.f32 %v1357, %v1854
        %v1856 = vpop.f32.mrb[0].mxu0
        %v1857 = vpop.f32.mrb[0].mxu0
        %v1858 = vadd.f32 %v1362, %v1857
        %v1859 = vpop.f32.mrb[0].mxu0
        %1860 = vmatprep.mubr.bf16.mxu0 0
        %1861 = vmatmul.mubr.bf16.gmra.mrb[0].mxu0 %v1418
        %v1862 = vpop.f32.mrb[0].mxu0
        %v1863 = vadd.f32 %v1367, %v1862
        %v1864 = vpop.f32.mrb[0].mxu0
        %v1865 = vpop.f32.mrb[0].mxu0
        %v1866 = vadd.f32 %v1372, %v1865
        %v1867 = vpop.f32.mrb[0].mxu0
        %1868 = vmatprep.mubr.bf16.mxu0 0
        %1869 = vmatmul.mubr.bf16.gmra.mrb[0].mxu0 %v1421
        %v1870 = vpop.f32.mrb[0].mxu0
        %v1871 = vadd.f32 %v1377, %v1870
        %v1872 = vpop.f32.mrb[0].mxu0
        %v1873 = vpop.f32.mrb[0].mxu0
        %v1874 = vadd.f32 %v1382, %v1873
        %v1875 = vpop.f32.mrb[0].mxu0
        %1876 = vmatprep.mubr.bf16.mxu0 0
        %1877 = vmatmul.mubr.bf16.gmra.mrb[0].mxu0 %v1424
        %v1878 = vpop.f32.mrb[0].mxu0
        %v1879 = vadd.f32 %v1387, %v1878
        %v1880 = vpop.f32.mrb[0].mxu0
        %v1881 = vpop.f32.mrb[0].mxu0
        %v1882 = vadd.f32 %v1392, %v1881
        %v1883 = vpop.f32.mrb[0].mxu0
        %1884 = vdwg.mxu0
        %v1885 = vmax.f32 %v1855, 0.0
        %v1886 = vmax.f32 %v1858, 0.0
        %v1887 = vmax.f32 %v1863, 0.0
        %v1888 = vmax.f32 %v1866, 0.0
        %v1889 = vmax.f32 %v1871, 0.0
        %v1890 = vmax.f32 %v1874, 0.0
        %v1891 = vmax.f32 %v1879, 0.0
        %v1892 = vmax.f32 %v1882, 0.0
        %v1893 = vpack.c.bf16 %v1886, %v1885
        %v1894 = vpack.c.bf16 %v1888, %v1887
        %v1895 = vpack.c.bf16 %v1890, %v1889
        %v1896 = vpack.c.bf16 %v1892, %v1891
        %1897 = vmatprep.subr.bf16.mxu0 0
        %1898 = vmatpush1.bf16.msra.mxu0 %v1893
        %1899 = vmatprep.subr.bf16.mxu0 0
        %1900 = vmatpush1.bf16.msra.mxu0 %v1894
        %1901 = vmatprep.subr.bf16.mxu0 0
        %1902 = vmatpush1.bf16.msra.mxu0 %v1895
        %1903 = vmatprep.subr.bf16.mxu0 0
        %1904 = vmatpush1.bf16.msra.mxu0 %v1896
        %1905 = vmatprep.subr.bf16.mxu0 0
        %1906 = vmatpush1.bf16.msra.mxu0 0
        %1907 = vmatprep.subr.bf16.mxu0 0
        %1908 = vmatpush1.bf16.msra.mxu0 0
        %1909 = vmatprep.subr.bf16.mxu0 0
        %1910 = vmatpush1.bf16.msra.mxu0 0
        %1911 = vmatprep.subr.bf16.mxu0 0
        %1912 = vmatpush1.bf16.msra.mxu0 0
        %1913 = vmatprep.subr.bf16.mxu0 0
        %1914 = vmatpush1.bf16.msra.mxu0 0
        %1915 = vmatprep.subr.bf16.mxu0 0
        %1916 = vmatpush1.bf16.msra.mxu0 0
        %1917 = vmatprep.subr.bf16.mxu0 0
        %1918 = vmatpush1.bf16.msra.mxu0 0
        %1919 = vmatprep.subr.bf16.mxu0 0
        %1920 = vmatpush1.bf16.msra.mxu0 0
        %1921 = vmatprep.subr.bf16.mxu0 0
        %1922 = vmatpush1.bf16.msra.mxu0 0
        %1923 = vmatprep.subr.bf16.mxu0 0
        %1924 = vmatpush1.bf16.msra.mxu0 0
        %1925 = vmatprep.subr.bf16.mxu0 0
        %1926 = vmatpush1.bf16.msra.mxu0 0
        %1927 = vmatprep.subr.bf16.mxu0 0
        %1928 = vmatpush1.bf16.msra.mxu0 0
        %1929 = vmatprep.mubr.bf16.mxu0 0
        %1930 = vmatmul.mubr.bf16.gmra.mrb[0].mxu0 %v1520
        %v1931 = vpop.f32.mrb[0].mxu0
        %v1932 = vadd.f32 %v1506, %v1931
        %v1933 = vpop.f32.mrb[0].mxu0
        %v1934 = vpop.f32.mrb[0].mxu0
        %v1935 = vadd.f32 %v1511, %v1934
        %v1936 = vpop.f32.mrb[0].mxu0
        %1937 = vdwg.mxu0
        %v1938 = vadd.f32 %v1817, %v1818
        %v1939 = vrot.slane %v1938, 4
        %v1940 = vadd.f32 %v1938, %v1939
        %v1941 = vrot.slane %v1940, 2
        %v1942 = vadd.f32 %v1940, %v1941
        %v1943 = vrot.slane %v1942, 1
        %v1944 = vadd.f32 %v1942, %v1943
        %v1945 = vmul.f32 %v1944, %v774
        %v1946 = vsub.f32 %v1817, %v1945
        %v1947 = vsub.f32 %v1818, %v1945
        %v1948 = vmul.f32 %v1946, %v1946
        %v1949 = vmul.f32 %v1947, %v1947
        %v1950 = vadd.f32 %v1948, %v1949
        %v1951 = vrot.slane %v1950, 4
        %v1952 = vadd.f32 %v1950, %v1951
        %v1953 = vrot.slane %v1952, 2
        %v1954 = vadd.f32 %v1952, %v1953
        %v1955 = vrot.slane %v1954, 1
        %v1956 = vadd.f32 %v1954, %v1955
        %v1957 = vmul.f32 %v1956, %v774
        %v1958 = vadd.f32 %v1957, 1e-05
        %v1959 = vrsqrt.pop %v1958
        %v1960 = vmul.f32 %v1946, %v1959
        %v1961 = vmul.f32 %v1947, %v1959
        %v1962 = vmul.f32 %v1960, %v1590
        %v1963 = vmul.f32 %v1961, %v1595
        %v1964 = vadd.f32 %v1962, %v1602
        %v1965 = vadd.f32 %v1963, %v1607
        %v1966 = vadd.f32 %v1932, %v1964
        %v1967 = vadd.f32 %v1935, %v1965
        %v1968 = vpack.c.bf16 %v1967, %v1966
        %1969 = vmatprep.subr.bf16.mxu0 0
        %1970 = vmatpush1.bf16.msra.mxu0 %v1968
        %1971 = vmatprep.subr.bf16.mxu0 0
        %1972 = vmatpush1.bf16.msra.mxu0 0
        %1973 = vmatprep.subr.bf16.mxu0 0
        %1974 = vmatpush1.bf16.msra.mxu0 0
        %1975 = vmatprep.subr.bf16.mxu0 0
        %1976 = vmatpush1.bf16.msra.mxu0 0
        %1977 = vmatprep.subr.bf16.mxu0 0
        %1978 = vmatpush1.bf16.msra.mxu0 0
        %1979 = vmatprep.subr.bf16.mxu0 0
        %1980 = vmatpush1.bf16.msra.mxu0 0
        %1981 = vmatprep.subr.bf16.mxu0 0
        %1982 = vmatpush1.bf16.msra.mxu0 0
        %1983 = vmatprep.subr.bf16.mxu0 0
        %1984 = vmatpush1.bf16.msra.mxu0 0
        %1985 = vmatprep.subr.bf16.mxu0 0
        %1986 = vmatpush1.bf16.msra.mxu0 0
        %1987 = vmatprep.subr.bf16.mxu0 0
        %1988 = vmatpush1.bf16.msra.mxu0 0
        %1989 = vmatprep.subr.bf16.mxu0 0
        %1990 = vmatpush1.bf16.msra.mxu0 0
        %1991 = vmatprep.subr.bf16.mxu0 0
        %1992 = vmatpush1.bf16.msra.mxu0 0
        %1993 = vmatprep.subr.bf16.mxu0 0
        %1994 = vmatpush1.bf16.msra.mxu0 0
        %1995 = vmatprep.subr.bf16.mxu0 0
        %1996 = vmatpush1.bf16.msra.mxu0 0
        %1997 = vmatprep.subr.bf16.mxu0 0
        %1998 = vmatpush1.bf16.msra.mxu0 0
        %1999 = vmatprep.subr.bf16.mxu0 0
        %2000 = vmatpush1.bf16.msra.mxu0 0
        %2001 = vmatprep.mubr.bf16.mxu0 0
        %2002 = vmatmul.mubr.bf16.gmra.mrb[0].mxu0 %v1635
        %v2003 = vpop.f32.mrb[0].mxu0
        %v2004 = vadd.f32 0.0, %v2003
        %v2005 = vpop.f32.mrb[0].mxu0
        %v2006 = vpop.f32.mrb[0].mxu0
        %v2007 = vadd.f32 0.0, %v2006
        %v2008 = vpop.f32.mrb[0].mxu0
        %2009 = vmatprep.mubr.bf16.mxu0 0
        %2010 = vmatmul.mubr.bf16.gmra.mrb[0].mxu0 %v1638
        %v2011 = vpop.f32.mrb[0].mxu0
        %v2012 = vadd.f32 0.0, %v2011
        %v2013 = vpop.f32.mrb[0].mxu0
        %v2014 = vpop.f32.mrb[0].mxu0
        %v2015 = vadd.f32 0.0, %v2014
        %v2016 = vpop.f32.mrb[0].mxu0
        %2017 = vmatprep.mubr.bf16.mxu0 0
        %2018 = vmatmul.mubr.bf16.gmra.mrb[0].mxu0 %v1641
        %v2019 = vpop.f32.mrb[0].mxu0
        %v2020 = vadd.f32 0.0, %v2019
        %v2021 = vpop.f32.mrb[0].mxu0
        %v2022 = vpop.f32.mrb[0].mxu0
        %v2023 = vadd.f32 0.0, %v2022
        %v2024 = vpop.f32.mrb[0].mxu0
        %2025 = vmatprep.mubr.bf16.mxu0 0
        %2026 = vmatmul.mubr.bf16.gmra.mrb[0].mxu0 %v1644
        %v2027 = vpop.f32.mrb[0].mxu0
        %v2028 = vadd.f32 0.0, %v2027
        %v2029 = vpop.f32.mrb[0].mxu0
        %v2030 = vpop.f32.mrb[0].mxu0
        %v2031 = vadd.f32 0.0, %v2030
        %v2032 = vpop.f32.mrb[0].mxu0
        %2033 = vdwg.mxu0
        %v2034 = vpack.c.bf16 %v2007, %v2004
        %v2035 = vpack.c.bf16 %v2015, %v2012
        %v2036 = vpack.c.bf16 %v2023, %v2020
        %v2037 = vpack.c.bf16 %v2031, %v2028
        %v2042 = vunpack.c.l.b16 %v2034
        %v2043 = vunpack.c.h.b16 %v2034
        %v2044 = vunpack.c.l.b16 %v2035
        %v2045 = vunpack.c.h.b16 %v2035
        %v2046 = vunpack.c.l.b16 %v2036
        %v2047 = vunpack.c.h.b16 %v2036
        %v2048 = vunpack.c.l.b16 %v2037
        %v2049 = vunpack.c.h.b16 %v2037
        %v2050 = vpack.c.b16 %v2042, %v2042
        %v2051 = vpack.c.b16 %v2043, %v2043
        %v2052 = vpack.c.b16 %v2044, %v2044
        %v2053 = vpack.c.b16 %v2045, %v2045
        %v2054 = vpack.c.b16 %v2046, %v2046
        %v2055 = vpack.c.b16 %v2047, %v2047
        %v2056 = vpack.c.b16 %v2048, %v2048
        %v2057 = vpack.c.b16 %v2049, %v2049
        %s2066 = scalar_lea.vmem %s704, 32 [#allocation25]
        %2067 = vst [vmem:[%s2066] sm:$0xf] %v2050
        %2068 = vst [vmem:[%s2066 + $0x4] sm:$0xf] %v2051
        %2069 = vst [vmem:[%s2066 + $0x8] sm:$0xf] %v2052
        %2070 = vst [vmem:[%s2066 + $0xc] sm:$0xf] %v2053
        %2071 = vst [vmem:[%s2066 + $0x10] sm:$0xf] %v2054
        %2072 = vst [vmem:[%s2066 + $0x14] sm:$0xf] %v2055
        %2073 = vst [vmem:[%s2066 + $0x18] sm:$0xf] %v2056
        %2074 = vst [vmem:[%s2066 + $0x1c] sm:$0xf] %v2057
        %v2075 = vadd.f32 %v1751, %v2004
        %v2076 = vadd.f32 %v1752, %v2007
        %v2077 = vadd.f32 %v1753, %v2012
        %v2078 = vadd.f32 %v1754, %v2015
        %v2079 = vadd.f32 %v1755, %v2020
        %v2080 = vadd.f32 %v1756, %v2023
        %v2081 = vadd.f32 %v1757, %v2028
        %v2082 = vadd.f32 %v1758, %v2031
        %v2083 = vmul.f32 %v2004, %v2004
        %v2084 = vmul.f32 %v2007, %v2007
        %v2085 = vmul.f32 %v2012, %v2012
        %v2086 = vmul.f32 %v2015, %v2015
        %v2087 = vmul.f32 %v2020, %v2020
        %v2088 = vmul.f32 %v2023, %v2023
        %v2089 = vmul.f32 %v2028, %v2028
        %v2090 = vmul.f32 %v2031, %v2031
        %v2091 = vadd.f32 %v1767, %v2083
        %v2092 = vadd.f32 %v1768, %v2084
        %v2093 = vadd.f32 %v1769, %v2085
        %v2094 = vadd.f32 %v1770, %v2086
        %v2095 = vadd.f32 %v1771, %v2087
        %v2096 = vadd.f32 %v1772, %v2088
        %v2097 = vadd.f32 %v1773, %v2089
        %v2098 = vadd.f32 %v1774, %v2090
        %2099 = vadd.xlane.f32.xlu0 %v2075
        %v2100 = vpop.xlane.xlu0 %2099
        %2101 = vadd.xlane.f32.xlu0 %v2076
        %v2102 = vpop.xlane.xlu0 %2101
        %2103 = vadd.xlane.f32.xlu0 %v2077
        %v2104 = vpop.xlane.xlu0 %2103
        %2105 = vadd.xlane.f32.xlu0 %v2078
        %v2106 = vpop.xlane.xlu0 %2105
        %2107 = vadd.xlane.f32.xlu0 %v2079
        %v2108 = vpop.xlane.xlu0 %2107
        %2109 = vadd.xlane.f32.xlu0 %v2080
        %v2110 = vpop.xlane.xlu0 %2109
        %2111 = vadd.xlane.f32.xlu0 %v2081
        %v2112 = vpop.xlane.xlu0 %2111
        %2113 = vadd.xlane.f32.xlu0 %v2082
        %v2114 = vpop.xlane.xlu0 %2113
        %2115 = vadd.xlane.f32.xlu0 %v2091
        %v2116 = vpop.xlane.xlu0 %2115
        %2117 = vadd.xlane.f32.xlu0 %v2092
        %v2118 = vpop.xlane.xlu0 %2117
        %2119 = vadd.xlane.f32.xlu0 %v2093
        %v2120 = vpop.xlane.xlu0 %2119
        %2121 = vadd.xlane.f32.xlu0 %v2094
        %v2122 = vpop.xlane.xlu0 %2121
        %2123 = vadd.xlane.f32.xlu0 %v2095
        %v2124 = vpop.xlane.xlu0 %2123
        %2125 = vadd.xlane.f32.xlu0 %v2096
        %v2126 = vpop.xlane.xlu0 %2125
        %2127 = vadd.xlane.f32.xlu0 %v2097
        %v2128 = vpop.xlane.xlu0 %2127
        %2129 = vadd.xlane.f32.xlu0 %v2098
        %v2130 = vpop.xlane.xlu0 %2129
        %vm2131 = vcmask 7168
        %v2132 = vsel %vm2131, %v2100, %v2116
        %v2133 = vsel %vm2131, %v2102, %v2118
        %v2134 = vsel %vm2131, %v2104, %v2120
        %v2135 = vsel %vm2131, %v2106, %v2122
        %v2136 = vsel %vm2131, %v2108, %v2124
        %v2137 = vsel %vm2131, %v2110, %v2126
        %v2138 = vsel %vm2131, %v2112, %v2128
        %v2139 = vsel %vm2131, %v2114, %v2130
        %vm2140 = vcmask 15360
        %2141 = vst.msk [vmem:[%s711] sm:$0xff] %vm2140, %v2132
        %2142 = vst.msk [vmem:[%s711 + $0x8] sm:$0xff] %vm2140, %v2133
        %2143 = vst.msk [vmem:[%s711 + $0x10] sm:$0xff] %vm2140, %v2134
        %2144 = vst.msk [vmem:[%s711 + $0x18] sm:$0xff] %vm2140, %v2135
        %2145 = vst.msk [vmem:[%s711 + $0x20] sm:$0xff] %vm2140, %v2136
        %2146 = vst.msk [vmem:[%s711 + $0x28] sm:$0xff] %vm2140, %v2137
        %2147 = vst.msk [vmem:[%s711 + $0x30] sm:$0xff] %vm2140, %v2138
        %2148 = vst.msk [vmem:[%s711 + $0x38] sm:$0xff] %vm2140, %v2139
        %s2149 = sand.u32 %s350, 1
        %s2150 = scalar_lea.sflag [#allocation4], %s2149
        %s2151 = sand.u32 %s350, 1
        %s2152 = smul.addr %s2151, 64
        %s2153 = scalar_lea.vmem [#allocation25], %s2152
        %s2154 = sand.u32 %s376, 1
        %s2155 = scalar_lea.sflag [#allocation27], %s2154
        %s2156 = sand.u32 %s376, 1
        %s2157 = smul.addr %s2156, 64
        %s2158 = scalar_lea.vmem [#allocation26], %s2157
        // Predicated region
        $region133: #{spectral_self_attention.2} parent=75 // pred_check
          %p2159 = pneg %p360
        $region134: #{spectral_self_attention.2} parent=75 // pred_check_branch
          %2161 = sbr.rel (%p2159) target = $region136
        $region135: #{spectral_self_attention.2} parent=75 // pred_region
          %s2163 = ssub.s32 1024, 1024
          %2164 = vsyncadd %s2150, %s2163
          %s2165 = smul.addr %s43, 64
          %s2166 = scalar_lea.hbm %s14, %s2165
          %s2167 = sshll.u32 %s2153, 4
          %s2168 = int_to_ptr.vmem [resolvable:$true] %s2167
          %2173 = dma.vmem_to_hbm [thread:$0]  %s2168, 1024, %s2166, %s2150, 64, 128, 4
        $region136: #{spectral_self_attention.2} parent=75 // pred_fallthru
          _
        // Predicated region
        $region137: #{spectral_self_attention.2} parent=75 // pred_check
          %p2174 = pneg %p386
        $region138: #{spectral_self_attention.2} parent=75 // pred_check_branch
          %2176 = sbr.rel (%p2174) target = $region140
        $region139: #{spectral_self_attention.2} parent=75 // pred_region
          %s2178 = ssub.s32 1024, 1024
          %2179 = vsyncadd %s2155, %s2178
          %s2180 = smul.addr %s43, 8
          %s2181 = smul.addr %s2180, 128
          %s2182 = scalar_lea.hbm %s15, %s2181
          %s2183 = sshll.u32 %s2158, 4
          %s2184 = int_to_ptr.vmem [resolvable:$true] %s2183
          %2189 = dma.vmem_to_hbm [thread:$0]  %s2184, 1024, %s2182, %s2155, 128, 128, 8
        $region140: #{spectral_self_attention.2} parent=75 // pred_fallthru
          _
      $region76: #{spectral_self_attention.2} parent=5 // pred_fallthru
        _
      %p2190 = scmp.le.s32.totalorder 2, %s38
      // Predicated region
      $region141: #{spectral_self_attention.2} parent=5 // pred_check
        %p2191 = pneg %p2190
      $region142: #{spectral_self_attention.2} parent=5 // pred_check_branch
        %2193 = sbr.rel (%p2191) target = $region144
      $region143: #{spectral_self_attention.2} parent=5 // pred_region
        %s2194 = ssub.s32 %s38, 2
        // Predicated region
        $region145: #{spectral_self_attention.2} parent=143 // pred_check
          %p2195 = pneg %p366
        $region146: #{spectral_self_attention.2} parent=143 // pred_check_branch
          %2197 = sbr.rel (%p2195) target = $region148
        $region147: #{spectral_self_attention.2} parent=143 // pred_region
          %s2198 = sand.u32 %s351, 1
          %s2199 = scalar_lea.sflag [#allocation4], %s2198
          %s2200 = sand.u32 %s351, 1
          %s2201 = smul.addr %s2200, 64
          %s2202 = scalar_lea.vmem [#allocation25], %s2201
          %2203 = dma.done %s2199, 1024
        $region148: #{spectral_self_attention.2} parent=143 // pred_fallthru
          _
        // Predicated region
        $region149: #{spectral_self_attention.2} parent=143 // pred_check
          %p2204 = pneg %p392
        $region150: #{spectral_self_attention.2} parent=143 // pred_check_branch
          %2206 = sbr.rel (%p2204) target = $region152
        $region151: #{spectral_self_attention.2} parent=143 // pred_region
          %s2207 = sand.u32 %s377, 1
          %s2208 = scalar_lea.sflag [#allocation27], %s2207
          %s2209 = sand.u32 %s377, 1
          %s2210 = smul.addr %s2209, 64
          %s2211 = scalar_lea.vmem [#allocation26], %s2210
          %2212 = dma.done %s2208, 1024
        $region152: #{spectral_self_attention.2} parent=143 // pred_fallthru
          _
      $region144: #{spectral_self_attention.2} parent=5 // pred_fallthru
        _
    $region6: #{spectral_self_attention.2} parent=1 // loop_footer
      %s42 = sadd.s32 1, %s38
    $region7: #{spectral_self_attention.2} parent=1 // loop_footer_branch
      %37 = sbr.rel target = $region3
    $region8: #{spectral_self_attention.2} parent=1 // loop_exit
      _
    %2213 = vsyncpa [#allocation3], 1
    %s2214 = scalar_lea.sflag [#allocation3], 1
    %2215 = vsyncpa %s2214, 1
    %2216 = vsyncpa [#allocation6], 1
    %2217 = vsyncpa [#allocation9], 1
    %2218 = vsyncpa [#allocation12], 1
    %2219 = vsyncpa [#allocation15], 1
    %2220 = vsyncpa [#allocation18], 1
    %2221 = vsyncpa [#allocation21], 1
    %2222 = vsyncpa [#allocation24], 1
    %2223 = vsyncpa [#allocation4], 1
    %s2224 = scalar_lea.sflag [#allocation4], 1
    %2225 = vsyncpa %s2224, 1
    %2226 = vsyncpa [#allocation27], 1
    %s2227 = scalar_lea.sflag [#allocation27], 1
    %2228 = vsyncpa %s2227, 1

</llo_original>
